<compile_context>
chip_gen: v7x
topology: tpu7x:2x2x1
jax: 0.10.0
libtpu: 0.0.40
codegen_flags: <defaults>
</compile_context>

<pallas_src>
import math
import functools

import jax
import jax.numpy as jnp
from jax import lax
from jax.experimental import pallas as pl
from jax.experimental.pallas import tpu as pltpu


def _choose_divisor(n, candidates):
    for c in candidates:
        if c <= n and n % c == 0:
            return c
    return 1


def _conv_stats_kernel(x_ref, w_ref, y_ref, sum_ref, sq_ref, patch_ref, *, H, W, Td):
    """Pass 1: 3x3x3 conv (pad=1) for Td output-depth slices of one batch element,
    plus per-channel BatchNorm batch-stat accumulation.

    x_ref:     (1, D+2, Cin, S)      S = (H+2)*W + 2 (flattened height-padded plane
                                     with one guard zero column at each end); resident
                                     across the depth-tile grid axis.
    w_ref:     (Cout, 27*Cin)        flat im2col weight, K ordered (kd, kh, kw, cin)
    y_ref:     (1, Cout, Td*H*W)     conv output tile, lane-dense spatial columns
    sum_ref:   (1, Cout, 1)          per-channel sum   (accumulated over depth tiles)
    sq_ref:    (1, Cout, 1)          per-channel sumsq (accumulated over depth tiles)
    patch_ref: (27*Cin, Td*H*W)      VMEM im2col scratch
    """
    dt = pl.program_id(1)
    Cin = x_ref.shape[2]
    Cout = w_ref.shape[0]
    HW = H * W
    d0 = dt * Td                      # first output depth of this tile

    # Width-padding masks (depth/height padding is materialized by the wrapper's pad).
    col = lax.broadcasted_iota(jnp.int32, (Cin, HW), 1)
    wpos = col % W
    left_edge = wpos == 0
    right_edge = wpos == (W - 1)

    def window(p, start):
        # Contiguous lane-dense (Cin, HW) window of padded depth plane p.
        v = x_ref[:, pl.ds(p, 1), :, start:start + HW]
        return v.reshape(Cin, HW)

    # Pack the (27*Cin, Td*HW) im2col tile.  Every patch store is a full-lane
    # (Cin, HW = multiple of 128) slab; the +-1 width taps are the same window shifted
    # by one element plus one select against the edge mask (no tile-crossing reshapes).
    for td in range(Td):
        col0 = td * HW
        for kd in range(3):
            p = d0 + td + kd                       # padded input depth plane
            for kh in range(3):
                base = 1 + kh * W                  # +1 skips the leading guard column
                center = window(p, base)
                left = jnp.where(left_edge, 0.0, window(p, base - 1))
                right = jnp.where(right_edge, 0.0, window(p, base + 1))
                for kw, tap in ((0, left), (1, center), (2, right)):
                    k = (kd * 3 + kh) * 3 + kw
                    patch_ref[k * Cin:(k + 1) * Cin, col0:col0 + HW] = (
                        tap.astype(patch_ref.dtype))

    # Single MXU matmul: (Cout, 27*Cin) x (27*Cin, Td*HW) -> (Cout, Td*HW).
    # The lane-dense Td*HW axis is the MXU N dim; f32 accumulation; no transpose.
    yt = jnp.dot(w_ref[...], patch_ref[...], preferred_element_type=jnp.float32)

    # BatchNorm training-mode statistics, accumulated in the resident stats blocks
    # across the "arbitrary" depth-tile axis.
    # NOTE: E[y^2]-E[y]^2 in f32 is fine for kaiming-init/zero-mean activations;
    # consider a shifted/Welford accumulation for very large, high-mean activations.
    @pl.when(dt == 0)
    def _():
        sum_ref[...] = jnp.zeros_like(sum_ref)
        sq_ref[...] = jnp.zeros_like(sq_ref)

    sum_ref[...] += jnp.sum(yt, axis=-1, keepdims=True)[None]
    sq_ref[...] += jnp.sum(yt * yt, axis=-1, keepdims=True)[None]

    y_ref[...] = yt.reshape(1, Cout, Td * HW)


def _bn_lrelu_kernel(y_ref, scale_ref, shift_ref, o_ref):
    """Pass 2: per-channel y * scale + shift followed by LeakyReLU(0.2)."""
    yn = y_ref[...] * scale_ref[...] + shift_ref[...]
    o_ref[...] = jnp.where(yn >= 0, yn, 0.2 * yn)


@functools.partial(jax.jit, static_argnames=("stride", "matmul_dtype"))
def conv_block_forward(x_ncdhw, weight, bias=None, gamma=None, beta=None,
                       *, stride=1, eps=1e-5, matmul_dtype=jnp.float32):
    """Forward of conv_block.

    x_ncdhw: (N, Cin, D, H, W)    weight: (Cout, Cin, 3, 3, 3)    bias: (Cout,)
    gamma/beta: optional BN affine params (default 1/0, as at PyTorch init).
    matmul_dtype: jnp.float32 (all chips) or jnp.bfloat16 (v6e/v7x MXU fast path;
        not exercised in the self-test because some backends reject bf16 dots).
    """
    if stride != 1:
        # TODO(synk): stride > 1 (strided 3x3x3 conv) not implemented in this kernel.
        raise NotImplementedError("only stride=1 implemented")

    N, Cin, D, H, W = x_ncdhw.shape
    Cout = weight.shape[0]
    HW = H * W
    if HW % 128 != 0:
        raise NotImplementedError("H*W must be a multiple of 128 (lane-dense tiles)")
    if Cout % 8 != 0:
        raise NotImplementedError("Cout must be a multiple of 8 (sublane tiles)")

    Td = _choose_divisor(D, (4, 2, 1))     # output-depth slices per pass-1 grid step
    TdHW = Td * HW
    S = (H + 2) * W + 2                    # flattened height-padded plane + guard cols
    DHW = D * HW

    # NCDHW -> (N, D, Cin, H, W), pad depth/height by 1, flatten (H+2, W) to one lane
    # axis and add one guard zero column at each end.  One XLA copy before the kernel.
    x = jnp.transpose(x_ncdhw, (0, 2, 1, 3, 4)).astype(jnp.float32)
    x = jnp.pad(x, ((0, 0), (1, 1), (0, 0), (1, 1), (0, 0)))
    x_flat = jnp.pad(x.reshape(N, D + 2, Cin, (H + 2) * W),
                     ((0, 0), (0, 0), (0, 0), (1, 1)))               # (N, D+2, Cin, S)

    # Flat im2col weight (Cout, 27*Cin), K ordered (kd, kh, kw, cin) to match the
    # patch rows packed in the kernel.
    w2 = (jnp.transpose(weight, (0, 2, 3, 4, 1))
          .reshape(Cout, 27 * Cin).astype(matmul_dtype))

    # Conv bias is exactly cancelled by the training-mode BN mean subtraction.
    # TODO(synk): apply the bias if this block is ever run with eval-mode
    # (running-stat) BatchNorm or the pre-BN conv output is consumed elsewhere.
    del bias

    bsz = jnp.dtype(matmul_dtype).itemsize
    need1 = (2 * ((D + 2) * Cin * S * 4           # resident padded input (x2 buffers)
                  + Cout * 27 * Cin * bsz         # weight
                  + Cout * TdHW * 4               # conv-output tile
                  + 2 * Cout * 4)                 # stats tiles
             + 27 * Cin * TdHW * bsz)             # im2col scratch
    vmem1 = int(min(64 * 2 ** 20, max(32 * 2 ** 20, 2 * need1)))

    # ---- pass 1: conv + BN batch-stat accumulation --------------------------------
    y2, ssum, ssq = pl.pallas_call(
        functools.partial(_conv_stats_kernel, H=H, W=W, Td=Td),
        out_shape=(
            jax.ShapeDtypeStruct((N, Cout, DHW), jnp.float32),
            jax.ShapeDtypeStruct((N, Cout, 1), jnp.float32),
            jax.ShapeDtypeStruct((N, Cout, 1), jnp.float32),
        ),
        grid=(N, D // Td),
        in_specs=[
            # Full padded volume for batch n: same block index across the depth-tile
            # axis -> resident in VMEM, DMA'd once per n (no halo re-reads).
            pl.BlockSpec((1, D + 2, Cin, S), lambda n, dt: (n, 0, 0, 0)),
            pl.BlockSpec((Cout, 27 * Cin), lambda n, dt: (0, 0)),
        ],
        out_specs=(
            pl.BlockSpec((1, Cout, TdHW), lambda n, dt: (n, 0, dt)),
            pl.BlockSpec((1, Cout, 1), lambda n, dt: (n, 0, 0)),
            pl.BlockSpec((1, Cout, 1), lambda n, dt: (n, 0, 0)),
        ),
        scratch_shapes=[pltpu.VMEM((27 * Cin, TdHW), matmul_dtype)],
        compiler_params=pltpu.CompilerParams(
            dimension_semantics=("parallel", "arbitrary"),
            vmem_limit_bytes=vmem1,
        ),
    )(x_flat, w2)

    # ---- finalize BN batch statistics (tiny (N, Cout) reduction, done in XLA) -----
    cnt = jnp.float32(N * D * H * W)
    mean = jnp.sum(ssum[:, :, 0], axis=0) / cnt
    var = jnp.sum(ssq[:, :, 0], axis=0) / cnt - mean * mean         # biased var (train)
    if gamma is None:
        gamma = jnp.ones((Cout,), jnp.float32)
    if beta is None:
        beta = jnp.zeros((Cout,), jnp.float32)
    scale = gamma.astype(jnp.float32) * lax.rsqrt(var + eps)
    shift = beta.astype(jnp.float32) - mean * scale
    scale3 = scale.reshape(1, Cout, 1)
    shift3 = shift.reshape(1, Cout, 1)

    # ---- pass 2: apply BN + LeakyReLU on large lane-dense tiles --------------------
    max_t2 = max(1, 65536 // HW)
    T2 = _choose_divisor(D, tuple(c for c in (64, 32, 16, 8, 4, 2, 1) if c <= max_t2))
    TILE2 = T2 * HW
    need2 = 4 * Cout * TILE2 * 4 + 8 * Cout * 4
    vmem2 = int(min(64 * 2 ** 20, max(32 * 2 ** 20, 2 * need2)))

    o2 = pl.pallas_call(
        _bn_lrelu_kernel,
        out_shape=jax.ShapeDtypeStruct((N, Cout, DHW), jnp.float32),
        grid=(N, DHW // TILE2),
        in_specs=[
            pl.BlockSpec((1, Cout, TILE2), lambda n, t: (n, 0, t)),
            pl.BlockSpec((1, Cout, 1), lambda n, t: (0, 0, 0)),
            pl.BlockSpec((1, Cout, 1), lambda n, t: (0, 0, 0)),
        ],
        out_specs=pl.BlockSpec((1, Cout, TILE2), lambda n, t: (n, 0, t)),
        compiler_params=pltpu.CompilerParams(
            dimension_semantics=("parallel", "parallel"),
            vmem_limit_bytes=vmem2,
        ),
    )(y2, scale3, shift3)

    # (N, Cout, D*H*W) -> (N, Cout, D, H, W): free reshape, no transpose.
    return o2.reshape(N, Cout, D, H, W)


def _reference_forward(x_ncdhw, weight, bias):
    """Pure-JAX reference (lax conv + BN train stats + LeakyReLU) for validation."""
    y = lax.conv_general_dilated(
        x_ncdhw.astype(jnp.float32), weight.astype(jnp.float32),
        window_strides=(1, 1, 1), padding=((1, 1), (1, 1), (1, 1)),
        dimension_numbers=("NCDHW", "OIDHW", "NCDHW"))
    y = y + bias.reshape(1, -1, 1, 1, 1)
    mean = jnp.mean(y, axis=(0, 2, 3, 4), keepdims=True)
    var = jnp.mean((y - mean) ** 2, axis=(0, 2, 3, 4), keepdims=True)
    yn = (y - mean) * lax.rsqrt(var + 1e-5)
    return jnp.where(yn >= 0, yn, 0.2 * yn)


if __name__ == "__main__":
    N, Cin, Cout = 2, 4, 8
    D = H = W = 16

    key = jax.random.PRNGKey(0)
    kx, kw = jax.random.split(key)
    x = jax.random.normal(kx, (N, Cin, D, H, W), dtype=jnp.float32)

    # kaiming_normal_(a=0.2), fan_in mode, leaky_relu nonlinearity; bias zeroed.
    fan_in = Cin * 3 * 3 * 3
    gain = math.sqrt(2.0 / (1.0 + 0.2 ** 2))
    std = gain / math.sqrt(fan_in)
    weight = std * jax.random.normal(kw, (Cout, Cin, 3, 3, 3), dtype=jnp.float32)
    bias = jnp.zeros((Cout,), dtype=jnp.float32)

    ref = _reference_forward(x, weight, bias)

    # f32 MXU-operand path (works on all chips and in interpret mode).  The bf16
    # operand path (matmul_dtype=jnp.bfloat16, for v6e/v7x) is intentionally not
    # exercised here: some execution backends reject BF16xBF16->F32 dots.
    out = jax.block_until_ready(conv_block_forward(x, weight, bias))
    assert out.shape == (N, Cout, D, H, W)
    err = jnp.max(jnp.abs(out - ref))
    assert err < 5e-4, f"f32 path max error {err}"

    print("KERNEL_OK")
</pallas_src>

<mosaic_0001>
module attributes {stable_mosaic.version = 11 : i64} {
  func.func @_conv_stats_kernel(%arg0: i32, %arg1: i32, %arg2: memref<1x18x4x290xf32, #tpu.memory_space<vmem>>, %arg3: memref<8x108xf32, #tpu.memory_space<vmem>>, %arg4: memref<1x8x1024xf32, #tpu.memory_space<vmem>>, %arg5: memref<1x8x1xf32, #tpu.memory_space<vmem>>, %arg6: memref<1x8x1xf32, #tpu.memory_space<vmem>>, %arg7: memref<108x1024xf32, #tpu.memory_space<vmem>>) attributes {dimension_semantics = [#tpu.dimension_semantics<parallel>, #tpu.dimension_semantics<arbitrary>], iteration_bounds = array<i64: 2, 4>, scalar_prefetch = 0 : i64, scratch_operands = 1 : i64, tpu.core_type = #tpu.core_type<tc>, window_params = [{transform_indices = @transform_0, window_bounds = array<i64: 1, 18, 4, 290>}, {pipeline_mode = #tpu.pipeline_mode<synchronous>, transform_indices = @transform_1, window_bounds = array<i64: 8, 108>}, {transform_indices = @transform_2, window_bounds = array<i64: 1, 8, 1024>}, {transform_indices = @transform_3, window_bounds = array<i64: 1, 8, 1>}, {transform_indices = @transform_4, window_bounds = array<i64: 1, 8, 1>}]} {
    %c4_i32 = arith.constant 4 : i32
    %0 = arith.muli %arg1, %c4_i32 : i32
    %1 = tpu.iota {dimensions = array<i32: 1>} : vector<4x256xi32>
    %c16_i32 = arith.constant 16 : i32
    %c0_i32 = arith.constant 0 : i32
    %2 = arith.cmpi eq, %c16_i32, %c0_i32 : i32
    %c1_i32 = arith.constant 1 : i32
    %3 = arith.select %2, %c1_i32, %c16_i32 : i32
    %4 = vector.broadcast %3 : i32 to vector<4x256xi32>
    %5 = arith.remsi %1, %4 : vector<4x256xi32>
    %c0_i32_0 = arith.constant 0 : i32
    %6 = vector.broadcast %c0_i32_0 : i32 to vector<4x256xi32>
    %7 = arith.cmpi ne, %5, %6 : vector<4x256xi32>
    %c0_i32_1 = arith.constant 0 : i32
    %8 = vector.broadcast %c0_i32_1 : i32 to vector<4x256xi32>
    %9 = arith.cmpi slt, %5, %8 : vector<4x256xi32>
    %c0_i32_2 = arith.constant 0 : i32
    %10 = arith.cmpi slt, %3, %c0_i32_2 : i32
    %11 = vector.broadcast %10 : i1 to vector<4x256xi1>
    %12 = vector.broadcast %11 : vector<4x256xi1> to vector<4x256xi1>
    %13 = arith.xori %9, %12 : vector<4x256xi1>
    %14 = arith.andi %13, %7 : vector<4x256xi1>
    %15 = vector.broadcast %3 : i32 to vector<4x256xi32>
    %16 = arith.addi %5, %15 : vector<4x256xi32>
    %17 = arith.select %14, %16, %5 : vector<4x256xi1>, vector<4x256xi32>
    %c0_i32_3 = arith.constant 0 : i32
    %18 = vector.broadcast %c0_i32_3 : i32 to vector<4x256xi32>
    %19 = arith.cmpi eq, %17, %18 : vector<4x256xi32>
    %c15_i32 = arith.constant 15 : i32
    %20 = vector.broadcast %c15_i32 : i32 to vector<4x256xi32>
    %21 = arith.cmpi eq, %17, %20 : vector<4x256xi32>
    %c0_i32_4 = arith.constant 0 : i32
    %22 = arith.addi %0, %c0_i32_4 : i32
    %c0_i32_5 = arith.constant 0 : i32
    %23 = arith.addi %22, %c0_i32_5 : i32
    %c0 = arith.constant 0 : index
    %24 = arith.index_cast %23 : i32 to index
    %c0_6 = arith.constant 0 : index
    %c1 = arith.constant 1 : index
    %25 = vector.load %arg2[%c0, %24, %c0_6, %c1] : memref<1x18x4x290xf32, #tpu.memory_space<vmem>>, vector<1x1x4x256xf32>
    %26 = vector.shape_cast %25 : vector<1x1x4x256xf32> to vector<4x256xf32>
    %c0_7 = arith.constant 0 : index
    %27 = arith.index_cast %23 : i32 to index
    %c0_8 = arith.constant 0 : index
    %c0_9 = arith.constant 0 : index
    %28 = vector.load %arg2[%c0_7, %27, %c0_8, %c0_9] : memref<1x18x4x290xf32, #tpu.memory_space<vmem>>, vector<1x1x4x256xf32>
    %29 = vector.shape_cast %28 : vector<1x1x4x256xf32> to vector<4x256xf32>
    %cst = arith.constant 0.000000e+00 : f32
    %30 = vector.broadcast %cst : f32 to vector<4x256xf32>
    %31 = arith.select %19, %30, %29 : vector<4x256xi1>, vector<4x256xf32>
    %c0_10 = arith.constant 0 : index
    %32 = arith.index_cast %23 : i32 to index
    %c0_11 = arith.constant 0 : index
    %c2 = arith.constant 2 : index
    %33 = vector.load %arg2[%c0_10, %32, %c0_11, %c2] : memref<1x18x4x290xf32, #tpu.memory_space<vmem>>, vector<1x1x4x256xf32>
    %34 = vector.shape_cast %33 : vector<1x1x4x256xf32> to vector<4x256xf32>
    %cst_12 = arith.constant 0.000000e+00 : f32
    %35 = vector.broadcast %cst_12 : f32 to vector<4x256xf32>
    %36 = arith.select %21, %35, %34 : vector<4x256xi1>, vector<4x256xf32>
    %c0_13 = arith.constant 0 : index
    %c0_14 = arith.constant 0 : index
    %37 = vector.load %arg7[%c0_13, %c0_14] : memref<108x1024xf32, #tpu.memory_space<vmem>>, vector<4x256xf32>
    tpu.vector_store %arg7[%c0_13, %c0_14], %31 {strides = array<i32>} : memref<108x1024xf32, #tpu.memory_space<vmem>>, vector<4x256xf32>,
    %c4 = arith.constant 4 : index
    %c0_15 = arith.constant 0 : index
    %38 = vector.load %arg7[%c4, %c0_15] : memref<108x1024xf32, #tpu.memory_space<vmem>>, vector<4x256xf32>
    tpu.vector_store %arg7[%c4, %c0_15], %26 {strides = array<i32>} : memref<108x1024xf32, #tpu.memory_space<vmem>>, vector<4x256xf32>,
    %c8 = arith.constant 8 : index
    %c0_16 = arith.constant 0 : index
    %39 = vector.load %arg7[%c8, %c0_16] : memref<108x1024xf32, #tpu.memory_space<vmem>>, vector<4x256xf32>
    tpu.vector_store %arg7[%c8, %c0_16], %36 {strides = array<i32>} : memref<108x1024xf32, #tpu.memory_space<vmem>>, vector<4x256xf32>,
    %c0_17 = arith.constant 0 : index
    %40 = arith.index_cast %23 : i32 to index
    %c0_18 = arith.constant 0 : index
    %c17 = arith.constant 17 : index
    %41 = vector.load %arg2[%c0_17, %40, %c0_18, %c17] : memref<1x18x4x290xf32, #tpu.memory_space<vmem>>, vector<1x1x4x256xf32>
    %42 = vector.shape_cast %41 : vector<1x1x4x256xf32> to vector<4x256xf32>
    %c0_19 = arith.constant 0 : index
    %43 = arith.index_cast %23 : i32 to index
    %c0_20 = arith.constant 0 : index
    %c16 = arith.constant 16 : index
    %44 = vector.load %arg2[%c0_19, %43, %c0_20, %c16] : memref<1x18x4x290xf32, #tpu.memory_space<vmem>>, vector<1x1x4x256xf32>
    %45 = vector.shape_cast %44 : vector<1x1x4x256xf32> to vector<4x256xf32>
    %cst_21 = arith.constant 0.000000e+00 : f32
    %46 = vector.broadcast %cst_21 : f32 to vector<4x256xf32>
    %47 = arith.select %19, %46, %45 : vector<4x256xi1>, vector<4x256xf32>
    %c0_22 = arith.constant 0 : index
    %48 = arith.index_cast %23 : i32 to index
    %c0_23 = arith.constant 0 : index
    %c18 = arith.constant 18 : index
    %49 = vector.load %arg2[%c0_22, %48, %c0_23, %c18] : memref<1x18x4x290xf32, #tpu.memory_space<vmem>>, vector<1x1x4x256xf32>
    %50 = vector.shape_cast %49 : vector<1x1x4x256xf32> to vector<4x256xf32>
    %cst_24 = arith.constant 0.000000e+00 : f32
    %51 = vector.broadcast %cst_24 : f32 to vector<4x256xf32>
    %52 = arith.select %21, %51, %50 : vector<4x256xi1>, vector<4x256xf32>
    %c12 = arith.constant 12 : index
    %c0_25 = arith.constant 0 : index
    %53 = vector.load %arg7[%c12, %c0_25] : memref<108x1024xf32, #tpu.memory_space<vmem>>, vector<4x256xf32>
    tpu.vector_store %arg7[%c12, %c0_25], %47 {strides = array<i32>} : memref<108x1024xf32, #tpu.memory_space<vmem>>, vector<4x256xf32>,
    %c16_26 = arith.constant 16 : index
    %c0_27 = arith.constant 0 : index
    %54 = vector.load %arg7[%c16_26, %c0_27] : memref<108x1024xf32, #tpu.memory_space<vmem>>, vector<4x256xf32>
    tpu.vector_store %arg7[%c16_26, %c0_27], %42 {strides = array<i32>} : memref<108x1024xf32, #tpu.memory_space<vmem>>, vector<4x256xf32>,
    %c20 = arith.constant 20 : index
    %c0_28 = arith.constant 0 : index
    %55 = vector.load %arg7[%c20, %c0_28] : memref<108x1024xf32, #tpu.memory_space<vmem>>, vector<4x256xf32>
    tpu.vector_store %arg7[%c20, %c0_28], %52 {strides = array<i32>} : memref<108x1024xf32, #tpu.memory_space<vmem>>, vector<4x256xf32>,
    %c0_29 = arith.constant 0 : index
    %56 = arith.index_cast %23 : i32 to index
    %c0_30 = arith.constant 0 : index
    %c33 = arith.constant 33 : index
    %57 = vector.load %arg2[%c0_29, %56, %c0_30, %c33] : memref<1x18x4x290xf32, #tpu.memory_space<vmem>>, vector<1x1x4x256xf32>
    %58 = vector.shape_cast %57 : vector<1x1x4x256xf32> to vector<4x256xf32>
    %c0_31 = arith.constant 0 : index
    %59 = arith.index_cast %23 : i32 to index
    %c0_32 = arith.constant 0 : index
    %c32 = arith.constant 32 : index
    %60 = vector.load %arg2[%c0_31, %59, %c0_32, %c32] : memref<1x18x4x290xf32, #tpu.memory_space<vmem>>, vector<1x1x4x256xf32>
    %61 = vector.shape_cast %60 : vector<1x1x4x256xf32> to vector<4x256xf32>
    %cst_33 = arith.constant 0.000000e+00 : f32
    %62 = vector.broadcast %cst_33 : f32 to vector<4x256xf32>
    %63 = arith.select %19, %62, %61 : vector<4x256xi1>, vector<4x256xf32>
    %c0_34 = arith.constant 0 : index
    %64 = arith.index_cast %23 : i32 to index
    %c0_35 = arith.constant 0 : index
    %c34 = arith.constant 34 : index
    %65 = vector.load %arg2[%c0_34, %64, %c0_35, %c34] : memref<1x18x4x290xf32, #tpu.memory_space<vmem>>, vector<1x1x4x256xf32>
    %66 = vector.shape_cast %65 : vector<1x1x4x256xf32> to vector<4x256xf32>
    %cst_36 = arith.constant 0.000000e+00 : f32
    %67 = vector.broadcast %cst_36 : f32 to vector<4x256xf32>
    %68 = arith.select %21, %67, %66 : vector<4x256xi1>, vector<4x256xf32>
    %c24 = arith.constant 24 : index
    %c0_37 = arith.constant 0 : index
    %69 = vector.load %arg7[%c24, %c0_37] : memref<108x1024xf32, #tpu.memory_space<vmem>>, vector<4x256xf32>
    tpu.vector_store %arg7[%c24, %c0_37], %63 {strides = array<i32>} : memref<108x1024xf32, #tpu.memory_space<vmem>>, vector<4x256xf32>,
    %c28 = arith.constant 28 : index
    %c0_38 = arith.constant 0 : index
    %70 = vector.load %arg7[%c28, %c0_38] : memref<108x1024xf32, #tpu.memory_space<vmem>>, vector<4x256xf32>
    tpu.vector_store %arg7[%c28, %c0_38], %58 {strides = array<i32>} : memref<108x1024xf32, #tpu.memory_space<vmem>>, vector<4x256xf32>,
    %c32_39 = arith.constant 32 : index
    %c0_40 = arith.constant 0 : index
    %71 = vector.load %arg7[%c32_39, %c0_40] : memref<108x1024xf32, #tpu.memory_space<vmem>>, vector<4x256xf32>
    tpu.vector_store %arg7[%c32_39, %c0_40], %68 {strides = array<i32>} : memref<108x1024xf32, #tpu.memory_space<vmem>>, vector<4x256xf32>,
    %c0_i32_41 = arith.constant 0 : i32
    %72 = arith.addi %0, %c0_i32_41 : i32
    %c1_i32_42 = arith.constant 1 : i32
    %73 = arith.addi %72, %c1_i32_42 : i32
    %c0_43 = arith.constant 0 : index
    %74 = arith.index_cast %73 : i32 to index
    %c0_44 = arith.constant 0 : index
    %c1_45 = arith.constant 1 : index
    %75 = vector.load %arg2[%c0_43, %74, %c0_44, %c1_45] : memref<1x18x4x290xf32, #tpu.memory_space<vmem>>, vector<1x1x4x256xf32>
    %76 = vector.shape_cast %75 : vector<1x1x4x256xf32> to vector<4x256xf32>
    %c0_46 = arith.constant 0 : index
    %77 = arith.index_cast %73 : i32 to index
    %c0_47 = arith.constant 0 : index
    %c0_48 = arith.constant 0 : index
    %78 = vector.load %arg2[%c0_46, %77, %c0_47, %c0_48] : memref<1x18x4x290xf32, #tpu.memory_space<vmem>>, vector<1x1x4x256xf32>
    %79 = vector.shape_cast %78 : vector<1x1x4x256xf32> to vector<4x256xf32>
    %cst_49 = arith.constant 0.000000e+00 : f32
    %80 = vector.broadcast %cst_49 : f32 to vector<4x256xf32>
    %81 = arith.select %19, %80, %79 : vector<4x256xi1>, vector<4x256xf32>
    %c0_50 = arith.constant 0 : index
    %82 = arith.index_cast %73 : i32 to index
    %c0_51 = arith.constant 0 : index
    %c2_52 = arith.constant 2 : index
    %83 = vector.load %arg2[%c0_50, %82, %c0_51, %c2_52] : memref<1x18x4x290xf32, #tpu.memory_space<vmem>>, vector<1x1x4x256xf32>
    %84 = vector.shape_cast %83 : vector<1x1x4x256xf32> to vector<4x256xf32>
    %cst_53 = arith.constant 0.000000e+00 : f32
    %85 = vector.broadcast %cst_53 : f32 to vector<4x256xf32>
    %86 = arith.select %21, %85, %84 : vector<4x256xi1>, vector<4x256xf32>
    %c36 = arith.constant 36 : index
    %c0_54 = arith.constant 0 : index
    %87 = vector.load %arg7[%c36, %c0_54] : memref<108x1024xf32, #tpu.memory_space<vmem>>, vector<4x256xf32>
    tpu.vector_store %arg7[%c36, %c0_54], %81 {strides = array<i32>} : memref<108x1024xf32, #tpu.memory_space<vmem>>, vector<4x256xf32>,
    %c40 = arith.constant 40 : index
    %c0_55 = arith.constant 0 : index
    %88 = vector.load %arg7[%c40, %c0_55] : memref<108x1024xf32, #tpu.memory_space<vmem>>, vector<4x256xf32>
    tpu.vector_store %arg7[%c40, %c0_55], %76 {strides = array<i32>} : memref<108x1024xf32, #tpu.memory_space<vmem>>, vector<4x256xf32>,
    %c44 = arith.constant 44 : index
    %c0_56 = arith.constant 0 : index
    %89 = vector.load %arg7[%c44, %c0_56] : memref<108x1024xf32, #tpu.memory_space<vmem>>, vector<4x256xf32>
    tpu.vector_store %arg7[%c44, %c0_56], %86 {strides = array<i32>} : memref<108x1024xf32, #tpu.memory_space<vmem>>, vector<4x256xf32>,
    %c0_57 = arith.constant 0 : index
    %90 = arith.index_cast %73 : i32 to index
    %c0_58 = arith.constant 0 : index
    %c17_59 = arith.constant 17 : index
    %91 = vector.load %arg2[%c0_57, %90, %c0_58, %c17_59] : memref<1x18x4x290xf32, #tpu.memory_space<vmem>>, vector<1x1x4x256xf32>
    %92 = vector.shape_cast %91 : vector<1x1x4x256xf32> to vector<4x256xf32>
    %c0_60 = arith.constant 0 : index
    %93 = arith.index_cast %73 : i32 to index
    %c0_61 = arith.constant 0 : index
    %c16_62 = arith.constant 16 : index
    %94 = vector.load %arg2[%c0_60, %93, %c0_61, %c16_62] : memref<1x18x4x290xf32, #tpu.memory_space<vmem>>, vector<1x1x4x256xf32>
    %95 = vector.shape_cast %94 : vector<1x1x4x256xf32> to vector<4x256xf32>
    %cst_63 = arith.constant 0.000000e+00 : f32
    %96 = vector.broadcast %cst_63 : f32 to vector<4x256xf32>
    %97 = arith.select %19, %96, %95 : vector<4x256xi1>, vector<4x256xf32>
    %c0_64 = arith.constant 0 : index
    %98 = arith.index_cast %73 : i32 to index
    %c0_65 = arith.constant 0 : index
    %c18_66 = arith.constant 18 : index
    %99 = vector.load %arg2[%c0_64, %98, %c0_65, %c18_66] : memref<1x18x4x290xf32, #tpu.memory_space<vmem>>, vector<1x1x4x256xf32>
    %100 = vector.shape_cast %99 : vector<1x1x4x256xf32> to vector<4x256xf32>
    %cst_67 = arith.constant 0.000000e+00 : f32
    %101 = vector.broadcast %cst_67 : f32 to vector<4x256xf32>
    %102 = arith.select %21, %101, %100 : vector<4x256xi1>, vector<4x256xf32>
    %c48 = arith.constant 48 : index
    %c0_68 = arith.constant 0 : index
    %103 = vector.load %arg7[%c48, %c0_68] : memref<108x1024xf32, #tpu.memory_space<vmem>>, vector<4x256xf32>
    tpu.vector_store %arg7[%c48, %c0_68], %97 {strides = array<i32>} : memref<108x1024xf32, #tpu.memory_space<vmem>>, vector<4x256xf32>,
    %c52 = arith.constant 52 : index
    %c0_69 = arith.constant 0 : index
    %104 = vector.load %arg7[%c52, %c0_69] : memref<108x1024xf32, #tpu.memory_space<vmem>>, vector<4x256xf32>
    tpu.vector_store %arg7[%c52, %c0_69], %92 {strides = array<i32>} : memref<108x1024xf32, #tpu.memory_space<vmem>>, vector<4x256xf32>,
    %c56 = arith.constant 56 : index
    %c0_70 = arith.constant 0 : index
    %105 = vector.load %arg7[%c56, %c0_70] : memref<108x1024xf32, #tpu.memory_space<vmem>>, vector<4x256xf32>
    tpu.vector_store %arg7[%c56, %c0_70], %102 {strides = array<i32>} : memref<108x1024xf32, #tpu.memory_space<vmem>>, vector<4x256xf32>,
    %c0_71 = arith.constant 0 : index
    %106 = arith.index_cast %73 : i32 to index
    %c0_72 = arith.constant 0 : index
    %c33_73 = arith.constant 33 : index
    %107 = vector.load %arg2[%c0_71, %106, %c0_72, %c33_73] : memref<1x18x4x290xf32, #tpu.memory_space<vmem>>, vector<1x1x4x256xf32>
    %108 = vector.shape_cast %107 : vector<1x1x4x256xf32> to vector<4x256xf32>
    %c0_74 = arith.constant 0 : index
    %109 = arith.index_cast %73 : i32 to index
    %c0_75 = arith.constant 0 : index
    %c32_76 = arith.constant 32 : index
    %110 = vector.load %arg2[%c0_74, %109, %c0_75, %c32_76] : memref<1x18x4x290xf32, #tpu.memory_space<vmem>>, vector<1x1x4x256xf32>
    %111 = vector.shape_cast %110 : vector<1x1x4x256xf32> to vector<4x256xf32>
    %cst_77 = arith.constant 0.000000e+00 : f32
    %112 = vector.broadcast %cst_77 : f32 to vector<4x256xf32>
    %113 = arith.select %19, %112, %111 : vector<4x256xi1>, vector<4x256xf32>
    %c0_78 = arith.constant 0 : index
    %114 = arith.index_cast %73 : i32 to index
    %c0_79 = arith.constant 0 : index
    %c34_80 = arith.constant 34 : index
    %115 = vector.load %arg2[%c0_78, %114, %c0_79, %c34_80] : memref<1x18x4x290xf32, #tpu.memory_space<vmem>>, vector<1x1x4x256xf32>
    %116 = vector.shape_cast %115 : vector<1x1x4x256xf32> to vector<4x256xf32>
    %cst_81 = arith.constant 0.000000e+00 : f32
    %117 = vector.broadcast %cst_81 : f32 to vector<4x256xf32>
    %118 = arith.select %21, %117, %116 : vector<4x256xi1>, vector<4x256xf32>
    %c60 = arith.constant 60 : index
    %c0_82 = arith.constant 0 : index
    %119 = vector.load %arg7[%c60, %c0_82] : memref<108x1024xf32, #tpu.memory_space<vmem>>, vector<4x256xf32>
    tpu.vector_store %arg7[%c60, %c0_82], %113 {strides = array<i32>} : memref<108x1024xf32, #tpu.memory_space<vmem>>, vector<4x256xf32>,
    %c64 = arith.constant 64 : index
    %c0_83 = arith.constant 0 : index
    %120 = vector.load %arg7[%c64, %c0_83] : memref<108x1024xf32, #tpu.memory_space<vmem>>, vector<4x256xf32>
    tpu.vector_store %arg7[%c64, %c0_83], %108 {strides = array<i32>} : memref<108x1024xf32, #tpu.memory_space<vmem>>, vector<4x256xf32>,
    %c68 = arith.constant 68 : index
    %c0_84 = arith.constant 0 : index
    %121 = vector.load %arg7[%c68, %c0_84] : memref<108x1024xf32, #tpu.memory_space<vmem>>, vector<4x256xf32>
    tpu.vector_store %arg7[%c68, %c0_84], %118 {strides = array<i32>} : memref<108x1024xf32, #tpu.memory_space<vmem>>, vector<4x256xf32>,
    %c0_i32_85 = arith.constant 0 : i32
    %122 = arith.addi %0, %c0_i32_85 : i32
    %c2_i32 = arith.constant 2 : i32
    %123 = arith.addi %122, %c2_i32 : i32
    %c0_86 = arith.constant 0 : index
    %124 = arith.index_cast %123 : i32 to index
    %c0_87 = arith.constant 0 : index
    %c1_88 = arith.constant 1 : index
    %125 = vector.load %arg2[%c0_86, %124, %c0_87, %c1_88] : memref<1x18x4x290xf32, #tpu.memory_space<vmem>>, vector<1x1x4x256xf32>
    %126 = vector.shape_cast %125 : vector<1x1x4x256xf32> to vector<4x256xf32>
    %c0_89 = arith.constant 0 : index
    %127 = arith.index_cast %123 : i32 to index
    %c0_90 = arith.constant 0 : index
    %c0_91 = arith.constant 0 : index
    %128 = vector.load %arg2[%c0_89, %127, %c0_90, %c0_91] : memref<1x18x4x290xf32, #tpu.memory_space<vmem>>, vector<1x1x4x256xf32>
    %129 = vector.shape_cast %128 : vector<1x1x4x256xf32> to vector<4x256xf32>
    %cst_92 = arith.constant 0.000000e+00 : f32
    %130 = vector.broadcast %cst_92 : f32 to vector<4x256xf32>
    %131 = arith.select %19, %130, %129 : vector<4x256xi1>, vector<4x256xf32>
    %c0_93 = arith.constant 0 : index
    %132 = arith.index_cast %123 : i32 to index
    %c0_94 = arith.constant 0 : index
    %c2_95 = arith.constant 2 : index
    %133 = vector.load %arg2[%c0_93, %132, %c0_94, %c2_95] : memref<1x18x4x290xf32, #tpu.memory_space<vmem>>, vector<1x1x4x256xf32>
    %134 = vector.shape_cast %133 : vector<1x1x4x256xf32> to vector<4x256xf32>
    %cst_96 = arith.constant 0.000000e+00 : f32
    %135 = vector.broadcast %cst_96 : f32 to vector<4x256xf32>
    %136 = arith.select %21, %135, %134 : vector<4x256xi1>, vector<4x256xf32>
    %c72 = arith.constant 72 : index
    %c0_97 = arith.constant 0 : index
    %137 = vector.load %arg7[%c72, %c0_97] : memref<108x1024xf32, #tpu.memory_space<vmem>>, vector<4x256xf32>
    tpu.vector_store %arg7[%c72, %c0_97], %131 {strides = array<i32>} : memref<108x1024xf32, #tpu.memory_space<vmem>>, vector<4x256xf32>,
    %c76 = arith.constant 76 : index
    %c0_98 = arith.constant 0 : index
    %138 = vector.load %arg7[%c76, %c0_98] : memref<108x1024xf32, #tpu.memory_space<vmem>>, vector<4x256xf32>
    tpu.vector_store %arg7[%c76, %c0_98], %126 {strides = array<i32>} : memref<108x1024xf32, #tpu.memory_space<vmem>>, vector<4x256xf32>,
    %c80 = arith.constant 80 : index
    %c0_99 = arith.constant 0 : index
    %139 = vector.load %arg7[%c80, %c0_99] : memref<108x1024xf32, #tpu.memory_space<vmem>>, vector<4x256xf32>
    tpu.vector_store %arg7[%c80, %c0_99], %136 {strides = array<i32>} : memref<108x1024xf32, #tpu.memory_space<vmem>>, vector<4x256xf32>,
    %c0_100 = arith.constant 0 : index
    %140 = arith.index_cast %123 : i32 to index
    %c0_101 = arith.constant 0 : index
    %c17_102 = arith.constant 17 : index
    %141 = vector.load %arg2[%c0_100, %140, %c0_101, %c17_102] : memref<1x18x4x290xf32, #tpu.memory_space<vmem>>, vector<1x1x4x256xf32>
    %142 = vector.shape_cast %141 : vector<1x1x4x256xf32> to vector<4x256xf32>
    %c0_103 = arith.constant 0 : index
    %143 = arith.index_cast %123 : i32 to index
    %c0_104 = arith.constant 0 : index
    %c16_105 = arith.constant 16 : index
    %144 = vector.load %arg2[%c0_103, %143, %c0_104, %c16_105] : memref<1x18x4x290xf32, #tpu.memory_space<vmem>>, vector<1x1x4x256xf32>
    %145 = vector.shape_cast %144 : vector<1x1x4x256xf32> to vector<4x256xf32>
    %cst_106 = arith.constant 0.000000e+00 : f32
    %146 = vector.broadcast %cst_106 : f32 to vector<4x256xf32>
    %147 = arith.select %19, %146, %145 : vector<4x256xi1>, vector<4x256xf32>
    %c0_107 = arith.constant 0 : index
    %148 = arith.index_cast %123 : i32 to index
    %c0_108 = arith.constant 0 : index
    %c18_109 = arith.constant 18 : index
    %149 = vector.load %arg2[%c0_107, %148, %c0_108, %c18_109] : memref<1x18x4x290xf32, #tpu.memory_space<vmem>>, vector<1x1x4x256xf32>
    %150 = vector.shape_cast %149 : vector<1x1x4x256xf32> to vector<4x256xf32>
    %cst_110 = arith.constant 0.000000e+00 : f32
    %151 = vector.broadcast %cst_110 : f32 to vector<4x256xf32>
    %152 = arith.select %21, %151, %150 : vector<4x256xi1>, vector<4x256xf32>
    %c84 = arith.constant 84 : index
    %c0_111 = arith.constant 0 : index
    %153 = vector.load %arg7[%c84, %c0_111] : memref<108x1024xf32, #tpu.memory_space<vmem>>, vector<4x256xf32>
    tpu.vector_store %arg7[%c84, %c0_111], %147 {strides = array<i32>} : memref<108x1024xf32, #tpu.memory_space<vmem>>, vector<4x256xf32>,
    %c88 = arith.constant 88 : index
    %c0_112 = arith.constant 0 : index
    %154 = vector.load %arg7[%c88, %c0_112] : memref<108x1024xf32, #tpu.memory_space<vmem>>, vector<4x256xf32>
    tpu.vector_store %arg7[%c88, %c0_112], %142 {strides = array<i32>} : memref<108x1024xf32, #tpu.memory_space<vmem>>, vector<4x256xf32>,
    %c92 = arith.constant 92 : index
    %c0_113 = arith.constant 0 : index
    %155 = vector.load %arg7[%c92, %c0_113] : memref<108x1024xf32, #tpu.memory_space<vmem>>, vector<4x256xf32>
    tpu.vector_store %arg7[%c92, %c0_113], %152 {strides = array<i32>} : memref<108x1024xf32, #tpu.memory_space<vmem>>, vector<4x256xf32>,
    %c0_114 = arith.constant 0 : index
    %156 = arith.index_cast %123 : i32 to index
    %c0_115 = arith.constant 0 : index
    %c33_116 = arith.constant 33 : index
    %157 = vector.load %arg2[%c0_114, %156, %c0_115, %c33_116] : memref<1x18x4x290xf32, #tpu.memory_space<vmem>>, vector<1x1x4x256xf32>
    %158 = vector.shape_cast %157 : vector<1x1x4x256xf32> to vector<4x256xf32>
    %c0_117 = arith.constant 0 : index
    %159 = arith.index_cast %123 : i32 to index
    %c0_118 = arith.constant 0 : index
    %c32_119 = arith.constant 32 : index
    %160 = vector.load %arg2[%c0_117, %159, %c0_118, %c32_119] : memref<1x18x4x290xf32, #tpu.memory_space<vmem>>, vector<1x1x4x256xf32>
    %161 = vector.shape_cast %160 : vector<1x1x4x256xf32> to vector<4x256xf32>
    %cst_120 = arith.constant 0.000000e+00 : f32
    %162 = vector.broadcast %cst_120 : f32 to vector<4x256xf32>
    %163 = arith.select %19, %162, %161 : vector<4x256xi1>, vector<4x256xf32>
    %c0_121 = arith.constant 0 : index
    %164 = arith.index_cast %123 : i32 to index
    %c0_122 = arith.constant 0 : index
    %c34_123 = arith.constant 34 : index
    %165 = vector.load %arg2[%c0_121, %164, %c0_122, %c34_123] : memref<1x18x4x290xf32, #tpu.memory_space<vmem>>, vector<1x1x4x256xf32>
    %166 = vector.shape_cast %165 : vector<1x1x4x256xf32> to vector<4x256xf32>
    %cst_124 = arith.constant 0.000000e+00 : f32
    %167 = vector.broadcast %cst_124 : f32 to vector<4x256xf32>
    %168 = arith.select %21, %167, %166 : vector<4x256xi1>, vector<4x256xf32>
    %c96 = arith.constant 96 : index
    %c0_125 = arith.constant 0 : index
    %169 = vector.load %arg7[%c96, %c0_125] : memref<108x1024xf32, #tpu.memory_space<vmem>>, vector<4x256xf32>
    tpu.vector_store %arg7[%c96, %c0_125], %163 {strides = array<i32>} : memref<108x1024xf32, #tpu.memory_space<vmem>>, vector<4x256xf32>,
    %c100 = arith.constant 100 : index
    %c0_126 = arith.constant 0 : index
    %170 = vector.load %arg7[%c100, %c0_126] : memref<108x1024xf32, #tpu.memory_space<vmem>>, vector<4x256xf32>
    tpu.vector_store %arg7[%c100, %c0_126], %158 {strides = array<i32>} : memref<108x1024xf32, #tpu.memory_space<vmem>>, vector<4x256xf32>,
    %c104 = arith.constant 104 : index
    %c0_127 = arith.constant 0 : index
    %171 = vector.load %arg7[%c104, %c0_127] : memref<108x1024xf32, #tpu.memory_space<vmem>>, vector<4x256xf32>
    tpu.vector_store %arg7[%c104, %c0_127], %168 {strides = array<i32>} : memref<108x1024xf32, #tpu.memory_space<vmem>>, vector<4x256xf32>,
    %c1_i32_128 = arith.constant 1 : i32
    %172 = arith.addi %0, %c1_i32_128 : i32
    %c0_i32_129 = arith.constant 0 : i32
    %173 = arith.addi %172, %c0_i32_129 : i32
    %c0_130 = arith.constant 0 : index
    %174 = arith.index_cast %173 : i32 to index
    %c0_131 = arith.constant 0 : index
    %c1_132 = arith.constant 1 : index
    %175 = vector.load %arg2[%c0_130, %174, %c0_131, %c1_132] : memref<1x18x4x290xf32, #tpu.memory_space<vmem>>, vector<1x1x4x256xf32>
    %176 = vector.shape_cast %175 : vector<1x1x4x256xf32> to vector<4x256xf32>
    %c0_133 = arith.constant 0 : index
    %177 = arith.index_cast %173 : i32 to index
    %c0_134 = arith.constant 0 : index
    %c0_135 = arith.constant 0 : index
    %178 = vector.load %arg2[%c0_133, %177, %c0_134, %c0_135] : memref<1x18x4x290xf32, #tpu.memory_space<vmem>>, vector<1x1x4x256xf32>
    %179 = vector.shape_cast %178 : vector<1x1x4x256xf32> to vector<4x256xf32>
    %cst_136 = arith.constant 0.000000e+00 : f32
    %180 = vector.broadcast %cst_136 : f32 to vector<4x256xf32>
    %181 = arith.select %19, %180, %179 : vector<4x256xi1>, vector<4x256xf32>
    %c0_137 = arith.constant 0 : index
    %182 = arith.index_cast %173 : i32 to index
    %c0_138 = arith.constant 0 : index
    %c2_139 = arith.constant 2 : index
    %183 = vector.load %arg2[%c0_137, %182, %c0_138, %c2_139] : memref<1x18x4x290xf32, #tpu.memory_space<vmem>>, vector<1x1x4x256xf32>
    %184 = vector.shape_cast %183 : vector<1x1x4x256xf32> to vector<4x256xf32>
    %cst_140 = arith.constant 0.000000e+00 : f32
    %185 = vector.broadcast %cst_140 : f32 to vector<4x256xf32>
    %186 = arith.select %21, %185, %184 : vector<4x256xi1>, vector<4x256xf32>
    %c0_141 = arith.constant 0 : index
    %c256 = arith.constant 256 : index
    %187 = vector.load %arg7[%c0_141, %c256] : memref<108x1024xf32, #tpu.memory_space<vmem>>, vector<4x256xf32>
    tpu.vector_store %arg7[%c0_141, %c256], %181 {strides = array<i32>} : memref<108x1024xf32, #tpu.memory_space<vmem>>, vector<4x256xf32>,
    %c4_142 = arith.constant 4 : index
    %c256_143 = arith.constant 256 : index
    %188 = vector.load %arg7[%c4_142, %c256_143] : memref<108x1024xf32, #tpu.memory_space<vmem>>, vector<4x256xf32>
    tpu.vector_store %arg7[%c4_142, %c256_143], %176 {strides = array<i32>} : memref<108x1024xf32, #tpu.memory_space<vmem>>, vector<4x256xf32>,
    %c8_144 = arith.constant 8 : index
    %c256_145 = arith.constant 256 : index
    %189 = vector.load %arg7[%c8_144, %c256_145] : memref<108x1024xf32, #tpu.memory_space<vmem>>, vector<4x256xf32>
    tpu.vector_store %arg7[%c8_144, %c256_145], %186 {strides = array<i32>} : memref<108x1024xf32, #tpu.memory_space<vmem>>, vector<4x256xf32>,
    %c0_146 = arith.constant 0 : index
    %190 = arith.index_cast %173 : i32 to index
    %c0_147 = arith.constant 0 : index
    %c17_148 = arith.constant 17 : index
    %191 = vector.load %arg2[%c0_146, %190, %c0_147, %c17_148] : memref<1x18x4x290xf32, #tpu.memory_space<vmem>>, vector<1x1x4x256xf32>
    %192 = vector.shape_cast %191 : vector<1x1x4x256xf32> to vector<4x256xf32>
    %c0_149 = arith.constant 0 : index
    %193 = arith.index_cast %173 : i32 to index
    %c0_150 = arith.constant 0 : index
    %c16_151 = arith.constant 16 : index
    %194 = vector.load %arg2[%c0_149, %193, %c0_150, %c16_151] : memref<1x18x4x290xf32, #tpu.memory_space<vmem>>, vector<1x1x4x256xf32>
    %195 = vector.shape_cast %194 : vector<1x1x4x256xf32> to vector<4x256xf32>
    %cst_152 = arith.constant 0.000000e+00 : f32
    %196 = vector.broadcast %cst_152 : f32 to vector<4x256xf32>
    %197 = arith.select %19, %196, %195 : vector<4x256xi1>, vector<4x256xf32>
    %c0_153 = arith.constant 0 : index
    %198 = arith.index_cast %173 : i32 to index
    %c0_154 = arith.constant 0 : index
    %c18_155 = arith.constant 18 : index
    %199 = vector.load %arg2[%c0_153, %198, %c0_154, %c18_155] : memref<1x18x4x290xf32, #tpu.memory_space<vmem>>, vector<1x1x4x256xf32>
    %200 = vector.shape_cast %199 : vector<1x1x4x256xf32> to vector<4x256xf32>
    %cst_156 = arith.constant 0.000000e+00 : f32
    %201 = vector.broadcast %cst_156 : f32 to vector<4x256xf32>
    %202 = arith.select %21, %201, %200 : vector<4x256xi1>, vector<4x256xf32>
    %c12_157 = arith.constant 12 : index
    %c256_158 = arith.constant 256 : index
    %203 = vector.load %arg7[%c12_157, %c256_158] : memref<108x1024xf32, #tpu.memory_space<vmem>>, vector<4x256xf32>
    tpu.vector_store %arg7[%c12_157, %c256_158], %197 {strides = array<i32>} : memref<108x1024xf32, #tpu.memory_space<vmem>>, vector<4x256xf32>,
    %c16_159 = arith.constant 16 : index
    %c256_160 = arith.constant 256 : index
    %204 = vector.load %arg7[%c16_159, %c256_160] : memref<108x1024xf32, #tpu.memory_space<vmem>>, vector<4x256xf32>
    tpu.vector_store %arg7[%c16_159, %c256_160], %192 {strides = array<i32>} : memref<108x1024xf32, #tpu.memory_space<vmem>>, vector<4x256xf32>,
    %c20_161 = arith.constant 20 : index
    %c256_162 = arith.constant 256 : index
    %205 = vector.load %arg7[%c20_161, %c256_162] : memref<108x1024xf32, #tpu.memory_space<vmem>>, vector<4x256xf32>
    tpu.vector_store %arg7[%c20_161, %c256_162], %202 {strides = array<i32>} : memref<108x1024xf32, #tpu.memory_space<vmem>>, vector<4x256xf32>,
    %c0_163 = arith.constant 0 : index
    %206 = arith.index_cast %173 : i32 to index
    %c0_164 = arith.constant 0 : index
    %c33_165 = arith.constant 33 : index
    %207 = vector.load %arg2[%c0_163, %206, %c0_164, %c33_165] : memref<1x18x4x290xf32, #tpu.memory_space<vmem>>, vector<1x1x4x256xf32>
    %208 = vector.shape_cast %207 : vector<1x1x4x256xf32> to vector<4x256xf32>
    %c0_166 = arith.constant 0 : index
    %209 = arith.index_cast %173 : i32 to index
    %c0_167 = arith.constant 0 : index
    %c32_168 = arith.constant 32 : index
    %210 = vector.load %arg2[%c0_166, %209, %c0_167, %c32_168] : memref<1x18x4x290xf32, #tpu.memory_space<vmem>>, vector<1x1x4x256xf32>
    %211 = vector.shape_cast %210 : vector<1x1x4x256xf32> to vector<4x256xf32>
    %cst_169 = arith.constant 0.000000e+00 : f32
    %212 = vector.broadcast %cst_169 : f32 to vector<4x256xf32>
    %213 = arith.select %19, %212, %211 : vector<4x256xi1>, vector<4x256xf32>
    %c0_170 = arith.constant 0 : index
    %214 = arith.index_cast %173 : i32 to index
    %c0_171 = arith.constant 0 : index
    %c34_172 = arith.constant 34 : index
    %215 = vector.load %arg2[%c0_170, %214, %c0_171, %c34_172] : memref<1x18x4x290xf32, #tpu.memory_space<vmem>>, vector<1x1x4x256xf32>
    %216 = vector.shape_cast %215 : vector<1x1x4x256xf32> to vector<4x256xf32>
    %cst_173 = arith.constant 0.000000e+00 : f32
    %217 = vector.broadcast %cst_173 : f32 to vector<4x256xf32>
    %218 = arith.select %21, %217, %216 : vector<4x256xi1>, vector<4x256xf32>
    %c24_174 = arith.constant 24 : index
    %c256_175 = arith.constant 256 : index
    %219 = vector.load %arg7[%c24_174, %c256_175] : memref<108x1024xf32, #tpu.memory_space<vmem>>, vector<4x256xf32>
    tpu.vector_store %arg7[%c24_174, %c256_175], %213 {strides = array<i32>} : memref<108x1024xf32, #tpu.memory_space<vmem>>, vector<4x256xf32>,
    %c28_176 = arith.constant 28 : index
    %c256_177 = arith.constant 256 : index
    %220 = vector.load %arg7[%c28_176, %c256_177] : memref<108x1024xf32, #tpu.memory_space<vmem>>, vector<4x256xf32>
    tpu.vector_store %arg7[%c28_176, %c256_177], %208 {strides = array<i32>} : memref<108x1024xf32, #tpu.memory_space<vmem>>, vector<4x256xf32>,
    %c32_178 = arith.constant 32 : index
    %c256_179 = arith.constant 256 : index
    %221 = vector.load %arg7[%c32_178, %c256_179] : memref<108x1024xf32, #tpu.memory_space<vmem>>, vector<4x256xf32>
    tpu.vector_store %arg7[%c32_178, %c256_179], %218 {strides = array<i32>} : memref<108x1024xf32, #tpu.memory_space<vmem>>, vector<4x256xf32>,
    %c1_i32_180 = arith.constant 1 : i32
    %222 = arith.addi %0, %c1_i32_180 : i32
    %c1_i32_181 = arith.constant 1 : i32
    %223 = arith.addi %222, %c1_i32_181 : i32
    %c0_182 = arith.constant 0 : index
    %224 = arith.index_cast %223 : i32 to index
    %c0_183 = arith.constant 0 : index
    %c1_184 = arith.constant 1 : index
    %225 = vector.load %arg2[%c0_182, %224, %c0_183, %c1_184] : memref<1x18x4x290xf32, #tpu.memory_space<vmem>>, vector<1x1x4x256xf32>
    %226 = vector.shape_cast %225 : vector<1x1x4x256xf32> to vector<4x256xf32>
    %c0_185 = arith.constant 0 : index
    %227 = arith.index_cast %223 : i32 to index
    %c0_186 = arith.constant 0 : index
    %c0_187 = arith.constant 0 : index
    %228 = vector.load %arg2[%c0_185, %227, %c0_186, %c0_187] : memref<1x18x4x290xf32, #tpu.memory_space<vmem>>, vector<1x1x4x256xf32>
    %229 = vector.shape_cast %228 : vector<1x1x4x256xf32> to vector<4x256xf32>
    %cst_188 = arith.constant 0.000000e+00 : f32
    %230 = vector.broadcast %cst_188 : f32 to vector<4x256xf32>
    %231 = arith.select %19, %230, %229 : vector<4x256xi1>, vector<4x256xf32>
    %c0_189 = arith.constant 0 : index
    %232 = arith.index_cast %223 : i32 to index
    %c0_190 = arith.constant 0 : index
    %c2_191 = arith.constant 2 : index
    %233 = vector.load %arg2[%c0_189, %232, %c0_190, %c2_191] : memref<1x18x4x290xf32, #tpu.memory_space<vmem>>, vector<1x1x4x256xf32>
    %234 = vector.shape_cast %233 : vector<1x1x4x256xf32> to vector<4x256xf32>
    %cst_192 = arith.constant 0.000000e+00 : f32
    %235 = vector.broadcast %cst_192 : f32 to vector<4x256xf32>
    %236 = arith.select %21, %235, %234 : vector<4x256xi1>, vector<4x256xf32>
    %c36_193 = arith.constant 36 : index
    %c256_194 = arith.constant 256 : index
    %237 = vector.load %arg7[%c36_193, %c256_194] : memref<108x1024xf32, #tpu.memory_space<vmem>>, vector<4x256xf32>
    tpu.vector_store %arg7[%c36_193, %c256_194], %231 {strides = array<i32>} : memref<108x1024xf32, #tpu.memory_space<vmem>>, vector<4x256xf32>,
    %c40_195 = arith.constant 40 : index
    %c256_196 = arith.constant 256 : index
    %238 = vector.load %arg7[%c40_195, %c256_196] : memref<108x1024xf32, #tpu.memory_space<vmem>>, vector<4x256xf32>
    tpu.vector_store %arg7[%c40_195, %c256_196], %226 {strides = array<i32>} : memref<108x1024xf32, #tpu.memory_space<vmem>>, vector<4x256xf32>,
    %c44_197 = arith.constant 44 : index
    %c256_198 = arith.constant 256 : index
    %239 = vector.load %arg7[%c44_197, %c256_198] : memref<108x1024xf32, #tpu.memory_space<vmem>>, vector<4x256xf32>
    tpu.vector_store %arg7[%c44_197, %c256_198], %236 {strides = array<i32>} : memref<108x1024xf32, #tpu.memory_space<vmem>>, vector<4x256xf32>,
    %c0_199 = arith.constant 0 : index
    %240 = arith.index_cast %223 : i32 to index
    %c0_200 = arith.constant 0 : index
    %c17_201 = arith.constant 17 : index
    %241 = vector.load %arg2[%c0_199, %240, %c0_200, %c17_201] : memref<1x18x4x290xf32, #tpu.memory_space<vmem>>, vector<1x1x4x256xf32>
    %242 = vector.shape_cast %241 : vector<1x1x4x256xf32> to vector<4x256xf32>
    %c0_202 = arith.constant 0 : index
    %243 = arith.index_cast %223 : i32 to index
    %c0_203 = arith.constant 0 : index
    %c16_204 = arith.constant 16 : index
    %244 = vector.load %arg2[%c0_202, %243, %c0_203, %c16_204] : memref<1x18x4x290xf32, #tpu.memory_space<vmem>>, vector<1x1x4x256xf32>
    %245 = vector.shape_cast %244 : vector<1x1x4x256xf32> to vector<4x256xf32>
    %cst_205 = arith.constant 0.000000e+00 : f32
    %246 = vector.broadcast %cst_205 : f32 to vector<4x256xf32>
    %247 = arith.select %19, %246, %245 : vector<4x256xi1>, vector<4x256xf32>
    %c0_206 = arith.constant 0 : index
    %248 = arith.index_cast %223 : i32 to index
    %c0_207 = arith.constant 0 : index
    %c18_208 = arith.constant 18 : index
    %249 = vector.load %arg2[%c0_206, %248, %c0_207, %c18_208] : memref<1x18x4x290xf32, #tpu.memory_space<vmem>>, vector<1x1x4x256xf32>
    %250 = vector.shape_cast %249 : vector<1x1x4x256xf32> to vector<4x256xf32>
    %cst_209 = arith.constant 0.000000e+00 : f32
    %251 = vector.broadcast %cst_209 : f32 to vector<4x256xf32>
    %252 = arith.select %21, %251, %250 : vector<4x256xi1>, vector<4x256xf32>
    %c48_210 = arith.constant 48 : index
    %c256_211 = arith.constant 256 : index
    %253 = vector.load %arg7[%c48_210, %c256_211] : memref<108x1024xf32, #tpu.memory_space<vmem>>, vector<4x256xf32>
    tpu.vector_store %arg7[%c48_210, %c256_211], %247 {strides = array<i32>} : memref<108x1024xf32, #tpu.memory_space<vmem>>, vector<4x256xf32>,
    %c52_212 = arith.constant 52 : index
    %c256_213 = arith.constant 256 : index
    %254 = vector.load %arg7[%c52_212, %c256_213] : memref<108x1024xf32, #tpu.memory_space<vmem>>, vector<4x256xf32>
    tpu.vector_store %arg7[%c52_212, %c256_213], %242 {strides = array<i32>} : memref<108x1024xf32, #tpu.memory_space<vmem>>, vector<4x256xf32>,
    %c56_214 = arith.constant 56 : index
    %c256_215 = arith.constant 256 : index
    %255 = vector.load %arg7[%c56_214, %c256_215] : memref<108x1024xf32, #tpu.memory_space<vmem>>, vector<4x256xf32>
    tpu.vector_store %arg7[%c56_214, %c256_215], %252 {strides = array<i32>} : memref<108x1024xf32, #tpu.memory_space<vmem>>, vector<4x256xf32>,
    %c0_216 = arith.constant 0 : index
    %256 = arith.index_cast %223 : i32 to index
    %c0_217 = arith.constant 0 : index
    %c33_218 = arith.constant 33 : index
    %257 = vector.load %arg2[%c0_216, %256, %c0_217, %c33_218] : memref<1x18x4x290xf32, #tpu.memory_space<vmem>>, vector<1x1x4x256xf32>
    %258 = vector.shape_cast %257 : vector<1x1x4x256xf32> to vector<4x256xf32>
    %c0_219 = arith.constant 0 : index
    %259 = arith.index_cast %223 : i32 to index
    %c0_220 = arith.constant 0 : index
    %c32_221 = arith.constant 32 : index
    %260 = vector.load %arg2[%c0_219, %259, %c0_220, %c32_221] : memref<1x18x4x290xf32, #tpu.memory_space<vmem>>, vector<1x1x4x256xf32>
    %261 = vector.shape_cast %260 : vector<1x1x4x256xf32> to vector<4x256xf32>
    %cst_222 = arith.constant 0.000000e+00 : f32
    %262 = vector.broadcast %cst_222 : f32 to vector<4x256xf32>
    %263 = arith.select %19, %262, %261 : vector<4x256xi1>, vector<4x256xf32>
    %c0_223 = arith.constant 0 : index
    %264 = arith.index_cast %223 : i32 to index
    %c0_224 = arith.constant 0 : index
    %c34_225 = arith.constant 34 : index
    %265 = vector.load %arg2[%c0_223, %264, %c0_224, %c34_225] : memref<1x18x4x290xf32, #tpu.memory_space<vmem>>, vector<1x1x4x256xf32>
    %266 = vector.shape_cast %265 : vector<1x1x4x256xf32> to vector<4x256xf32>
    %cst_226 = arith.constant 0.000000e+00 : f32
    %267 = vector.broadcast %cst_226 : f32 to vector<4x256xf32>
    %268 = arith.select %21, %267, %266 : vector<4x256xi1>, vector<4x256xf32>
    %c60_227 = arith.constant 60 : index
    %c256_228 = arith.constant 256 : index
    %269 = vector.load %arg7[%c60_227, %c256_228] : memref<108x1024xf32, #tpu.memory_space<vmem>>, vector<4x256xf32>
    tpu.vector_store %arg7[%c60_227, %c256_228], %263 {strides = array<i32>} : memref<108x1024xf32, #tpu.memory_space<vmem>>, vector<4x256xf32>,
    %c64_229 = arith.constant 64 : index
    %c256_230 = arith.constant 256 : index
    %270 = vector.load %arg7[%c64_229, %c256_230] : memref<108x1024xf32, #tpu.memory_space<vmem>>, vector<4x256xf32>
    tpu.vector_store %arg7[%c64_229, %c256_230], %258 {strides = array<i32>} : memref<108x1024xf32, #tpu.memory_space<vmem>>, vector<4x256xf32>,
    %c68_231 = arith.constant 68 : index
    %c256_232 = arith.constant 256 : index
    %271 = vector.load %arg7[%c68_231, %c256_232] : memref<108x1024xf32, #tpu.memory_space<vmem>>, vector<4x256xf32>
    tpu.vector_store %arg7[%c68_231, %c256_232], %268 {strides = array<i32>} : memref<108x1024xf32, #tpu.memory_space<vmem>>, vector<4x256xf32>,
    %c1_i32_233 = arith.constant 1 : i32
    %272 = arith.addi %0, %c1_i32_233 : i32
    %c2_i32_234 = arith.constant 2 : i32
    %273 = arith.addi %272, %c2_i32_234 : i32
    %c0_235 = arith.constant 0 : index
    %274 = arith.index_cast %273 : i32 to index
    %c0_236 = arith.constant 0 : index
    %c1_237 = arith.constant 1 : index
    %275 = vector.load %arg2[%c0_235, %274, %c0_236, %c1_237] : memref<1x18x4x290xf32, #tpu.memory_space<vmem>>, vector<1x1x4x256xf32>
    %276 = vector.shape_cast %275 : vector<1x1x4x256xf32> to vector<4x256xf32>
    %c0_238 = arith.constant 0 : index
    %277 = arith.index_cast %273 : i32 to index
    %c0_239 = arith.constant 0 : index
    %c0_240 = arith.constant 0 : index
    %278 = vector.load %arg2[%c0_238, %277, %c0_239, %c0_240] : memref<1x18x4x290xf32, #tpu.memory_space<vmem>>, vector<1x1x4x256xf32>
    %279 = vector.shape_cast %278 : vector<1x1x4x256xf32> to vector<4x256xf32>
    %cst_241 = arith.constant 0.000000e+00 : f32
    %280 = vector.broadcast %cst_241 : f32 to vector<4x256xf32>
    %281 = arith.select %19, %280, %279 : vector<4x256xi1>, vector<4x256xf32>
    %c0_242 = arith.constant 0 : index
    %282 = arith.index_cast %273 : i32 to index
    %c0_243 = arith.constant 0 : index
    %c2_244 = arith.constant 2 : index
    %283 = vector.load %arg2[%c0_242, %282, %c0_243, %c2_244] : memref<1x18x4x290xf32, #tpu.memory_space<vmem>>, vector<1x1x4x256xf32>
    %284 = vector.shape_cast %283 : vector<1x1x4x256xf32> to vector<4x256xf32>
    %cst_245 = arith.constant 0.000000e+00 : f32
    %285 = vector.broadcast %cst_245 : f32 to vector<4x256xf32>
    %286 = arith.select %21, %285, %284 : vector<4x256xi1>, vector<4x256xf32>
    %c72_246 = arith.constant 72 : index
    %c256_247 = arith.constant 256 : index
    %287 = vector.load %arg7[%c72_246, %c256_247] : memref<108x1024xf32, #tpu.memory_space<vmem>>, vector<4x256xf32>
    tpu.vector_store %arg7[%c72_246, %c256_247], %281 {strides = array<i32>} : memref<108x1024xf32, #tpu.memory_space<vmem>>, vector<4x256xf32>,
    %c76_248 = arith.constant 76 : index
    %c256_249 = arith.constant 256 : index
    %288 = vector.load %arg7[%c76_248, %c256_249] : memref<108x1024xf32, #tpu.memory_space<vmem>>, vector<4x256xf32>
    tpu.vector_store %arg7[%c76_248, %c256_249], %276 {strides = array<i32>} : memref<108x1024xf32, #tpu.memory_space<vmem>>, vector<4x256xf32>,
    %c80_250 = arith.constant 80 : index
    %c256_251 = arith.constant 256 : index
    %289 = vector.load %arg7[%c80_250, %c256_251] : memref<108x1024xf32, #tpu.memory_space<vmem>>, vector<4x256xf32>
    tpu.vector_store %arg7[%c80_250, %c256_251], %286 {strides = array<i32>} : memref<108x1024xf32, #tpu.memory_space<vmem>>, vector<4x256xf32>,
    %c0_252 = arith.constant 0 : index
    %290 = arith.index_cast %273 : i32 to index
    %c0_253 = arith.constant 0 : index
    %c17_254 = arith.constant 17 : index
    %291 = vector.load %arg2[%c0_252, %290, %c0_253, %c17_254] : memref<1x18x4x290xf32, #tpu.memory_space<vmem>>, vector<1x1x4x256xf32>
    %292 = vector.shape_cast %291 : vector<1x1x4x256xf32> to vector<4x256xf32>
    %c0_255 = arith.constant 0 : index
    %293 = arith.index_cast %273 : i32 to index
    %c0_256 = arith.constant 0 : index
    %c16_257 = arith.constant 16 : index
    %294 = vector.load %arg2[%c0_255, %293, %c0_256, %c16_257] : memref<1x18x4x290xf32, #tpu.memory_space<vmem>>, vector<1x1x4x256xf32>
    %295 = vector.shape_cast %294 : vector<1x1x4x256xf32> to vector<4x256xf32>
    %cst_258 = arith.constant 0.000000e+00 : f32
    %296 = vector.broadcast %cst_258 : f32 to vector<4x256xf32>
    %297 = arith.select %19, %296, %295 : vector<4x256xi1>, vector<4x256xf32>
    %c0_259 = arith.constant 0 : index
    %298 = arith.index_cast %273 : i32 to index
    %c0_260 = arith.constant 0 : index
    %c18_261 = arith.constant 18 : index
    %299 = vector.load %arg2[%c0_259, %298, %c0_260, %c18_261] : memref<1x18x4x290xf32, #tpu.memory_space<vmem>>, vector<1x1x4x256xf32>
    %300 = vector.shape_cast %299 : vector<1x1x4x256xf32> to vector<4x256xf32>
    %cst_262 = arith.constant 0.000000e+00 : f32
    %301 = vector.broadcast %cst_262 : f32 to vector<4x256xf32>
    %302 = arith.select %21, %301, %300 : vector<4x256xi1>, vector<4x256xf32>
    %c84_263 = arith.constant 84 : index
    %c256_264 = arith.constant 256 : index
    %303 = vector.load %arg7[%c84_263, %c256_264] : memref<108x1024xf32, #tpu.memory_space<vmem>>, vector<4x256xf32>
    tpu.vector_store %arg7[%c84_263, %c256_264], %297 {strides = array<i32>} : memref<108x1024xf32, #tpu.memory_space<vmem>>, vector<4x256xf32>,
    %c88_265 = arith.constant 88 : index
    %c256_266 = arith.constant 256 : index
    %304 = vector.load %arg7[%c88_265, %c256_266] : memref<108x1024xf32, #tpu.memory_space<vmem>>, vector<4x256xf32>
    tpu.vector_store %arg7[%c88_265, %c256_266], %292 {strides = array<i32>} : memref<108x1024xf32, #tpu.memory_space<vmem>>, vector<4x256xf32>,
    %c92_267 = arith.constant 92 : index
    %c256_268 = arith.constant 256 : index
    %305 = vector.load %arg7[%c92_267, %c256_268] : memref<108x1024xf32, #tpu.memory_space<vmem>>, vector<4x256xf32>
    tpu.vector_store %arg7[%c92_267, %c256_268], %302 {strides = array<i32>} : memref<108x1024xf32, #tpu.memory_space<vmem>>, vector<4x256xf32>,
    %c0_269 = arith.constant 0 : index
    %306 = arith.index_cast %273 : i32 to index
    %c0_270 = arith.constant 0 : index
    %c33_271 = arith.constant 33 : index
    %307 = vector.load %arg2[%c0_269, %306, %c0_270, %c33_271] : memref<1x18x4x290xf32, #tpu.memory_space<vmem>>, vector<1x1x4x256xf32>
    %308 = vector.shape_cast %307 : vector<1x1x4x256xf32> to vector<4x256xf32>
    %c0_272 = arith.constant 0 : index
    %309 = arith.index_cast %273 : i32 to index
    %c0_273 = arith.constant 0 : index
    %c32_274 = arith.constant 32 : index
    %310 = vector.load %arg2[%c0_272, %309, %c0_273, %c32_274] : memref<1x18x4x290xf32, #tpu.memory_space<vmem>>, vector<1x1x4x256xf32>
    %311 = vector.shape_cast %310 : vector<1x1x4x256xf32> to vector<4x256xf32>
    %cst_275 = arith.constant 0.000000e+00 : f32
    %312 = vector.broadcast %cst_275 : f32 to vector<4x256xf32>
    %313 = arith.select %19, %312, %311 : vector<4x256xi1>, vector<4x256xf32>
    %c0_276 = arith.constant 0 : index
    %314 = arith.index_cast %273 : i32 to index
    %c0_277 = arith.constant 0 : index
    %c34_278 = arith.constant 34 : index
    %315 = vector.load %arg2[%c0_276, %314, %c0_277, %c34_278] : memref<1x18x4x290xf32, #tpu.memory_space<vmem>>, vector<1x1x4x256xf32>
    %316 = vector.shape_cast %315 : vector<1x1x4x256xf32> to vector<4x256xf32>
    %cst_279 = arith.constant 0.000000e+00 : f32
    %317 = vector.broadcast %cst_279 : f32 to vector<4x256xf32>
    %318 = arith.select %21, %317, %316 : vector<4x256xi1>, vector<4x256xf32>
    %c96_280 = arith.constant 96 : index
    %c256_281 = arith.constant 256 : index
    %319 = vector.load %arg7[%c96_280, %c256_281] : memref<108x1024xf32, #tpu.memory_space<vmem>>, vector<4x256xf32>
    tpu.vector_store %arg7[%c96_280, %c256_281], %313 {strides = array<i32>} : memref<108x1024xf32, #tpu.memory_space<vmem>>, vector<4x256xf32>,
    %c100_282 = arith.constant 100 : index
    %c256_283 = arith.constant 256 : index
    %320 = vector.load %arg7[%c100_282, %c256_283] : memref<108x1024xf32, #tpu.memory_space<vmem>>, vector<4x256xf32>
    tpu.vector_store %arg7[%c100_282, %c256_283], %308 {strides = array<i32>} : memref<108x1024xf32, #tpu.memory_space<vmem>>, vector<4x256xf32>,
    %c104_284 = arith.constant 104 : index
    %c256_285 = arith.constant 256 : index
    %321 = vector.load %arg7[%c104_284, %c256_285] : memref<108x1024xf32, #tpu.memory_space<vmem>>, vector<4x256xf32>
    tpu.vector_store %arg7[%c104_284, %c256_285], %318 {strides = array<i32>} : memref<108x1024xf32, #tpu.memory_space<vmem>>, vector<4x256xf32>,
    %c2_i32_286 = arith.constant 2 : i32
    %322 = arith.addi %0, %c2_i32_286 : i32
    %c0_i32_287 = arith.constant 0 : i32
    %323 = arith.addi %322, %c0_i32_287 : i32
    %c0_288 = arith.constant 0 : index
    %324 = arith.index_cast %323 : i32 to index
    %c0_289 = arith.constant 0 : index
    %c1_290 = arith.constant 1 : index
    %325 = vector.load %arg2[%c0_288, %324, %c0_289, %c1_290] : memref<1x18x4x290xf32, #tpu.memory_space<vmem>>, vector<1x1x4x256xf32>
    %326 = vector.shape_cast %325 : vector<1x1x4x256xf32> to vector<4x256xf32>
    %c0_291 = arith.constant 0 : index
    %327 = arith.index_cast %323 : i32 to index
    %c0_292 = arith.constant 0 : index
    %c0_293 = arith.constant 0 : index
    %328 = vector.load %arg2[%c0_291, %327, %c0_292, %c0_293] : memref<1x18x4x290xf32, #tpu.memory_space<vmem>>, vector<1x1x4x256xf32>
    %329 = vector.shape_cast %328 : vector<1x1x4x256xf32> to vector<4x256xf32>
    %cst_294 = arith.constant 0.000000e+00 : f32
    %330 = vector.broadcast %cst_294 : f32 to vector<4x256xf32>
    %331 = arith.select %19, %330, %329 : vector<4x256xi1>, vector<4x256xf32>
    %c0_295 = arith.constant 0 : index
    %332 = arith.index_cast %323 : i32 to index
    %c0_296 = arith.constant 0 : index
    %c2_297 = arith.constant 2 : index
    %333 = vector.load %arg2[%c0_295, %332, %c0_296, %c2_297] : memref<1x18x4x290xf32, #tpu.memory_space<vmem>>, vector<1x1x4x256xf32>
    %334 = vector.shape_cast %333 : vector<1x1x4x256xf32> to vector<4x256xf32>
    %cst_298 = arith.constant 0.000000e+00 : f32
    %335 = vector.broadcast %cst_298 : f32 to vector<4x256xf32>
    %336 = arith.select %21, %335, %334 : vector<4x256xi1>, vector<4x256xf32>
    %c0_299 = arith.constant 0 : index
    %c512 = arith.constant 512 : index
    %337 = vector.load %arg7[%c0_299, %c512] : memref<108x1024xf32, #tpu.memory_space<vmem>>, vector<4x256xf32>
    tpu.vector_store %arg7[%c0_299, %c512], %331 {strides = array<i32>} : memref<108x1024xf32, #tpu.memory_space<vmem>>, vector<4x256xf32>,
    %c4_300 = arith.constant 4 : index
    %c512_301 = arith.constant 512 : index
    %338 = vector.load %arg7[%c4_300, %c512_301] : memref<108x1024xf32, #tpu.memory_space<vmem>>, vector<4x256xf32>
    tpu.vector_store %arg7[%c4_300, %c512_301], %326 {strides = array<i32>} : memref<108x1024xf32, #tpu.memory_space<vmem>>, vector<4x256xf32>,
    %c8_302 = arith.constant 8 : index
    %c512_303 = arith.constant 512 : index
    %339 = vector.load %arg7[%c8_302, %c512_303] : memref<108x1024xf32, #tpu.memory_space<vmem>>, vector<4x256xf32>
    tpu.vector_store %arg7[%c8_302, %c512_303], %336 {strides = array<i32>} : memref<108x1024xf32, #tpu.memory_space<vmem>>, vector<4x256xf32>,
    %c0_304 = arith.constant 0 : index
    %340 = arith.index_cast %323 : i32 to index
    %c0_305 = arith.constant 0 : index
    %c17_306 = arith.constant 17 : index
    %341 = vector.load %arg2[%c0_304, %340, %c0_305, %c17_306] : memref<1x18x4x290xf32, #tpu.memory_space<vmem>>, vector<1x1x4x256xf32>
    %342 = vector.shape_cast %341 : vector<1x1x4x256xf32> to vector<4x256xf32>
    %c0_307 = arith.constant 0 : index
    %343 = arith.index_cast %323 : i32 to index
    %c0_308 = arith.constant 0 : index
    %c16_309 = arith.constant 16 : index
    %344 = vector.load %arg2[%c0_307, %343, %c0_308, %c16_309] : memref<1x18x4x290xf32, #tpu.memory_space<vmem>>, vector<1x1x4x256xf32>
    %345 = vector.shape_cast %344 : vector<1x1x4x256xf32> to vector<4x256xf32>
    %cst_310 = arith.constant 0.000000e+00 : f32
    %346 = vector.broadcast %cst_310 : f32 to vector<4x256xf32>
    %347 = arith.select %19, %346, %345 : vector<4x256xi1>, vector<4x256xf32>
    %c0_311 = arith.constant 0 : index
    %348 = arith.index_cast %323 : i32 to index
    %c0_312 = arith.constant 0 : index
    %c18_313 = arith.constant 18 : index
    %349 = vector.load %arg2[%c0_311, %348, %c0_312, %c18_313] : memref<1x18x4x290xf32, #tpu.memory_space<vmem>>, vector<1x1x4x256xf32>
    %350 = vector.shape_cast %349 : vector<1x1x4x256xf32> to vector<4x256xf32>
    %cst_314 = arith.constant 0.000000e+00 : f32
    %351 = vector.broadcast %cst_314 : f32 to vector<4x256xf32>
    %352 = arith.select %21, %351, %350 : vector<4x256xi1>, vector<4x256xf32>
    %c12_315 = arith.constant 12 : index
    %c512_316 = arith.constant 512 : index
    %353 = vector.load %arg7[%c12_315, %c512_316] : memref<108x1024xf32, #tpu.memory_space<vmem>>, vector<4x256xf32>
    tpu.vector_store %arg7[%c12_315, %c512_316], %347 {strides = array<i32>} : memref<108x1024xf32, #tpu.memory_space<vmem>>, vector<4x256xf32>,
    %c16_317 = arith.constant 16 : index
    %c512_318 = arith.constant 512 : index
    %354 = vector.load %arg7[%c16_317, %c512_318] : memref<108x1024xf32, #tpu.memory_space<vmem>>, vector<4x256xf32>
    tpu.vector_store %arg7[%c16_317, %c512_318], %342 {strides = array<i32>} : memref<108x1024xf32, #tpu.memory_space<vmem>>, vector<4x256xf32>,
    %c20_319 = arith.constant 20 : index
    %c512_320 = arith.constant 512 : index
    %355 = vector.load %arg7[%c20_319, %c512_320] : memref<108x1024xf32, #tpu.memory_space<vmem>>, vector<4x256xf32>
    tpu.vector_store %arg7[%c20_319, %c512_320], %352 {strides = array<i32>} : memref<108x1024xf32, #tpu.memory_space<vmem>>, vector<4x256xf32>,
    %c0_321 = arith.constant 0 : index
    %356 = arith.index_cast %323 : i32 to index
    %c0_322 = arith.constant 0 : index
    %c33_323 = arith.constant 33 : index
    %357 = vector.load %arg2[%c0_321, %356, %c0_322, %c33_323] : memref<1x18x4x290xf32, #tpu.memory_space<vmem>>, vector<1x1x4x256xf32>
    %358 = vector.shape_cast %357 : vector<1x1x4x256xf32> to vector<4x256xf32>
    %c0_324 = arith.constant 0 : index
    %359 = arith.index_cast %323 : i32 to index
    %c0_325 = arith.constant 0 : index
    %c32_326 = arith.constant 32 : index
    %360 = vector.load %arg2[%c0_324, %359, %c0_325, %c32_326] : memref<1x18x4x290xf32, #tpu.memory_space<vmem>>, vector<1x1x4x256xf32>
    %361 = vector.shape_cast %360 : vector<1x1x4x256xf32> to vector<4x256xf32>
    %cst_327 = arith.constant 0.000000e+00 : f32
    %362 = vector.broadcast %cst_327 : f32 to vector<4x256xf32>
    %363 = arith.select %19, %362, %361 : vector<4x256xi1>, vector<4x256xf32>
    %c0_328 = arith.constant 0 : index
    %364 = arith.index_cast %323 : i32 to index
    %c0_329 = arith.constant 0 : index
    %c34_330 = arith.constant 34 : index
    %365 = vector.load %arg2[%c0_328, %364, %c0_329, %c34_330] : memref<1x18x4x290xf32, #tpu.memory_space<vmem>>, vector<1x1x4x256xf32>
    %366 = vector.shape_cast %365 : vector<1x1x4x256xf32> to vector<4x256xf32>
    %cst_331 = arith.constant 0.000000e+00 : f32
    %367 = vector.broadcast %cst_331 : f32 to vector<4x256xf32>
    %368 = arith.select %21, %367, %366 : vector<4x256xi1>, vector<4x256xf32>
    %c24_332 = arith.constant 24 : index
    %c512_333 = arith.constant 512 : index
    %369 = vector.load %arg7[%c24_332, %c512_333] : memref<108x1024xf32, #tpu.memory_space<vmem>>, vector<4x256xf32>
    tpu.vector_store %arg7[%c24_332, %c512_333], %363 {strides = array<i32>} : memref<108x1024xf32, #tpu.memory_space<vmem>>, vector<4x256xf32>,
    %c28_334 = arith.constant 28 : index
    %c512_335 = arith.constant 512 : index
    %370 = vector.load %arg7[%c28_334, %c512_335] : memref<108x1024xf32, #tpu.memory_space<vmem>>, vector<4x256xf32>
    tpu.vector_store %arg7[%c28_334, %c512_335], %358 {strides = array<i32>} : memref<108x1024xf32, #tpu.memory_space<vmem>>, vector<4x256xf32>,
    %c32_336 = arith.constant 32 : index
    %c512_337 = arith.constant 512 : index
    %371 = vector.load %arg7[%c32_336, %c512_337] : memref<108x1024xf32, #tpu.memory_space<vmem>>, vector<4x256xf32>
    tpu.vector_store %arg7[%c32_336, %c512_337], %368 {strides = array<i32>} : memref<108x1024xf32, #tpu.memory_space<vmem>>, vector<4x256xf32>,
    %c2_i32_338 = arith.constant 2 : i32
    %372 = arith.addi %0, %c2_i32_338 : i32
    %c1_i32_339 = arith.constant 1 : i32
    %373 = arith.addi %372, %c1_i32_339 : i32
    %c0_340 = arith.constant 0 : index
    %374 = arith.index_cast %373 : i32 to index
    %c0_341 = arith.constant 0 : index
    %c1_342 = arith.constant 1 : index
    %375 = vector.load %arg2[%c0_340, %374, %c0_341, %c1_342] : memref<1x18x4x290xf32, #tpu.memory_space<vmem>>, vector<1x1x4x256xf32>
    %376 = vector.shape_cast %375 : vector<1x1x4x256xf32> to vector<4x256xf32>
    %c0_343 = arith.constant 0 : index
    %377 = arith.index_cast %373 : i32 to index
    %c0_344 = arith.constant 0 : index
    %c0_345 = arith.constant 0 : index
    %378 = vector.load %arg2[%c0_343, %377, %c0_344, %c0_345] : memref<1x18x4x290xf32, #tpu.memory_space<vmem>>, vector<1x1x4x256xf32>
    %379 = vector.shape_cast %378 : vector<1x1x4x256xf32> to vector<4x256xf32>
    %cst_346 = arith.constant 0.000000e+00 : f32
    %380 = vector.broadcast %cst_346 : f32 to vector<4x256xf32>
    %381 = arith.select %19, %380, %379 : vector<4x256xi1>, vector<4x256xf32>
    %c0_347 = arith.constant 0 : index
    %382 = arith.index_cast %373 : i32 to index
    %c0_348 = arith.constant 0 : index
    %c2_349 = arith.constant 2 : index
    %383 = vector.load %arg2[%c0_347, %382, %c0_348, %c2_349] : memref<1x18x4x290xf32, #tpu.memory_space<vmem>>, vector<1x1x4x256xf32>
    %384 = vector.shape_cast %383 : vector<1x1x4x256xf32> to vector<4x256xf32>
    %cst_350 = arith.constant 0.000000e+00 : f32
    %385 = vector.broadcast %cst_350 : f32 to vector<4x256xf32>
    %386 = arith.select %21, %385, %384 : vector<4x256xi1>, vector<4x256xf32>
    %c36_351 = arith.constant 36 : index
    %c512_352 = arith.constant 512 : index
    %387 = vector.load %arg7[%c36_351, %c512_352] : memref<108x1024xf32, #tpu.memory_space<vmem>>, vector<4x256xf32>
    tpu.vector_store %arg7[%c36_351, %c512_352], %381 {strides = array<i32>} : memref<108x1024xf32, #tpu.memory_space<vmem>>, vector<4x256xf32>,
    %c40_353 = arith.constant 40 : index
    %c512_354 = arith.constant 512 : index
    %388 = vector.load %arg7[%c40_353, %c512_354] : memref<108x1024xf32, #tpu.memory_space<vmem>>, vector<4x256xf32>
    tpu.vector_store %arg7[%c40_353, %c512_354], %376 {strides = array<i32>} : memref<108x1024xf32, #tpu.memory_space<vmem>>, vector<4x256xf32>,
    %c44_355 = arith.constant 44 : index
    %c512_356 = arith.constant 512 : index
    %389 = vector.load %arg7[%c44_355, %c512_356] : memref<108x1024xf32, #tpu.memory_space<vmem>>, vector<4x256xf32>
    tpu.vector_store %arg7[%c44_355, %c512_356], %386 {strides = array<i32>} : memref<108x1024xf32, #tpu.memory_space<vmem>>, vector<4x256xf32>,
    %c0_357 = arith.constant 0 : index
    %390 = arith.index_cast %373 : i32 to index
    %c0_358 = arith.constant 0 : index
    %c17_359 = arith.constant 17 : index
    %391 = vector.load %arg2[%c0_357, %390, %c0_358, %c17_359] : memref<1x18x4x290xf32, #tpu.memory_space<vmem>>, vector<1x1x4x256xf32>
    %392 = vector.shape_cast %391 : vector<1x1x4x256xf32> to vector<4x256xf32>
    %c0_360 = arith.constant 0 : index
    %393 = arith.index_cast %373 : i32 to index
    %c0_361 = arith.constant 0 : index
    %c16_362 = arith.constant 16 : index
    %394 = vector.load %arg2[%c0_360, %393, %c0_361, %c16_362] : memref<1x18x4x290xf32, #tpu.memory_space<vmem>>, vector<1x1x4x256xf32>
    %395 = vector.shape_cast %394 : vector<1x1x4x256xf32> to vector<4x256xf32>
    %cst_363 = arith.constant 0.000000e+00 : f32
    %396 = vector.broadcast %cst_363 : f32 to vector<4x256xf32>
    %397 = arith.select %19, %396, %395 : vector<4x256xi1>, vector<4x256xf32>
    %c0_364 = arith.constant 0 : index
    %398 = arith.index_cast %373 : i32 to index
    %c0_365 = arith.constant 0 : index
    %c18_366 = arith.constant 18 : index
    %399 = vector.load %arg2[%c0_364, %398, %c0_365, %c18_366] : memref<1x18x4x290xf32, #tpu.memory_space<vmem>>, vector<1x1x4x256xf32>
    %400 = vector.shape_cast %399 : vector<1x1x4x256xf32> to vector<4x256xf32>
    %cst_367 = arith.constant 0.000000e+00 : f32
    %401 = vector.broadcast %cst_367 : f32 to vector<4x256xf32>
    %402 = arith.select %21, %401, %400 : vector<4x256xi1>, vector<4x256xf32>
    %c48_368 = arith.constant 48 : index
    %c512_369 = arith.constant 512 : index
    %403 = vector.load %arg7[%c48_368, %c512_369] : memref<108x1024xf32, #tpu.memory_space<vmem>>, vector<4x256xf32>
    tpu.vector_store %arg7[%c48_368, %c512_369], %397 {strides = array<i32>} : memref<108x1024xf32, #tpu.memory_space<vmem>>, vector<4x256xf32>,
    %c52_370 = arith.constant 52 : index
    %c512_371 = arith.constant 512 : index
    %404 = vector.load %arg7[%c52_370, %c512_371] : memref<108x1024xf32, #tpu.memory_space<vmem>>, vector<4x256xf32>
    tpu.vector_store %arg7[%c52_370, %c512_371], %392 {strides = array<i32>} : memref<108x1024xf32, #tpu.memory_space<vmem>>, vector<4x256xf32>,
    %c56_372 = arith.constant 56 : index
    %c512_373 = arith.constant 512 : index
    %405 = vector.load %arg7[%c56_372, %c512_373] : memref<108x1024xf32, #tpu.memory_space<vmem>>, vector<4x256xf32>
    tpu.vector_store %arg7[%c56_372, %c512_373], %402 {strides = array<i32>} : memref<108x1024xf32, #tpu.memory_space<vmem>>, vector<4x256xf32>,
    %c0_374 = arith.constant 0 : index
    %406 = arith.index_cast %373 : i32 to index
    %c0_375 = arith.constant 0 : index
    %c33_376 = arith.constant 33 : index
    %407 = vector.load %arg2[%c0_374, %406, %c0_375, %c33_376] : memref<1x18x4x290xf32, #tpu.memory_space<vmem>>, vector<1x1x4x256xf32>
    %408 = vector.shape_cast %407 : vector<1x1x4x256xf32> to vector<4x256xf32>
    %c0_377 = arith.constant 0 : index
    %409 = arith.index_cast %373 : i32 to index
    %c0_378 = arith.constant 0 : index
    %c32_379 = arith.constant 32 : index
    %410 = vector.load %arg2[%c0_377, %409, %c0_378, %c32_379] : memref<1x18x4x290xf32, #tpu.memory_space<vmem>>, vector<1x1x4x256xf32>
    %411 = vector.shape_cast %410 : vector<1x1x4x256xf32> to vector<4x256xf32>
    %cst_380 = arith.constant 0.000000e+00 : f32
    %412 = vector.broadcast %cst_380 : f32 to vector<4x256xf32>
    %413 = arith.select %19, %412, %411 : vector<4x256xi1>, vector<4x256xf32>
    %c0_381 = arith.constant 0 : index
    %414 = arith.index_cast %373 : i32 to index
    %c0_382 = arith.constant 0 : index
    %c34_383 = arith.constant 34 : index
    %415 = vector.load %arg2[%c0_381, %414, %c0_382, %c34_383] : memref<1x18x4x290xf32, #tpu.memory_space<vmem>>, vector<1x1x4x256xf32>
    %416 = vector.shape_cast %415 : vector<1x1x4x256xf32> to vector<4x256xf32>
    %cst_384 = arith.constant 0.000000e+00 : f32
    %417 = vector.broadcast %cst_384 : f32 to vector<4x256xf32>
    %418 = arith.select %21, %417, %416 : vector<4x256xi1>, vector<4x256xf32>
    %c60_385 = arith.constant 60 : index
    %c512_386 = arith.constant 512 : index
    %419 = vector.load %arg7[%c60_385, %c512_386] : memref<108x1024xf32, #tpu.memory_space<vmem>>, vector<4x256xf32>
    tpu.vector_store %arg7[%c60_385, %c512_386], %413 {strides = array<i32>} : memref<108x1024xf32, #tpu.memory_space<vmem>>, vector<4x256xf32>,
    %c64_387 = arith.constant 64 : index
    %c512_388 = arith.constant 512 : index
    %420 = vector.load %arg7[%c64_387, %c512_388] : memref<108x1024xf32, #tpu.memory_space<vmem>>, vector<4x256xf32>
    tpu.vector_store %arg7[%c64_387, %c512_388], %408 {strides = array<i32>} : memref<108x1024xf32, #tpu.memory_space<vmem>>, vector<4x256xf32>,
    %c68_389 = arith.constant 68 : index
    %c512_390 = arith.constant 512 : index
    %421 = vector.load %arg7[%c68_389, %c512_390] : memref<108x1024xf32, #tpu.memory_space<vmem>>, vector<4x256xf32>
    tpu.vector_store %arg7[%c68_389, %c512_390], %418 {strides = array<i32>} : memref<108x1024xf32, #tpu.memory_space<vmem>>, vector<4x256xf32>,
    %c2_i32_391 = arith.constant 2 : i32
    %422 = arith.addi %0, %c2_i32_391 : i32
    %c2_i32_392 = arith.constant 2 : i32
    %423 = arith.addi %422, %c2_i32_392 : i32
    %c0_393 = arith.constant 0 : index
    %424 = arith.index_cast %423 : i32 to index
    %c0_394 = arith.constant 0 : index
    %c1_395 = arith.constant 1 : index
    %425 = vector.load %arg2[%c0_393, %424, %c0_394, %c1_395] : memref<1x18x4x290xf32, #tpu.memory_space<vmem>>, vector<1x1x4x256xf32>
    %426 = vector.shape_cast %425 : vector<1x1x4x256xf32> to vector<4x256xf32>
    %c0_396 = arith.constant 0 : index
    %427 = arith.index_cast %423 : i32 to index
    %c0_397 = arith.constant 0 : index
    %c0_398 = arith.constant 0 : index
    %428 = vector.load %arg2[%c0_396, %427, %c0_397, %c0_398] : memref<1x18x4x290xf32, #tpu.memory_space<vmem>>, vector<1x1x4x256xf32>
    %429 = vector.shape_cast %428 : vector<1x1x4x256xf32> to vector<4x256xf32>
    %cst_399 = arith.constant 0.000000e+00 : f32
    %430 = vector.broadcast %cst_399 : f32 to vector<4x256xf32>
    %431 = arith.select %19, %430, %429 : vector<4x256xi1>, vector<4x256xf32>
    %c0_400 = arith.constant 0 : index
    %432 = arith.index_cast %423 : i32 to index
    %c0_401 = arith.constant 0 : index
    %c2_402 = arith.constant 2 : index
    %433 = vector.load %arg2[%c0_400, %432, %c0_401, %c2_402] : memref<1x18x4x290xf32, #tpu.memory_space<vmem>>, vector<1x1x4x256xf32>
    %434 = vector.shape_cast %433 : vector<1x1x4x256xf32> to vector<4x256xf32>
    %cst_403 = arith.constant 0.000000e+00 : f32
    %435 = vector.broadcast %cst_403 : f32 to vector<4x256xf32>
    %436 = arith.select %21, %435, %434 : vector<4x256xi1>, vector<4x256xf32>
    %c72_404 = arith.constant 72 : index
    %c512_405 = arith.constant 512 : index
    %437 = vector.load %arg7[%c72_404, %c512_405] : memref<108x1024xf32, #tpu.memory_space<vmem>>, vector<4x256xf32>
    tpu.vector_store %arg7[%c72_404, %c512_405], %431 {strides = array<i32>} : memref<108x1024xf32, #tpu.memory_space<vmem>>, vector<4x256xf32>,
    %c76_406 = arith.constant 76 : index
    %c512_407 = arith.constant 512 : index
    %438 = vector.load %arg7[%c76_406, %c512_407] : memref<108x1024xf32, #tpu.memory_space<vmem>>, vector<4x256xf32>
    tpu.vector_store %arg7[%c76_406, %c512_407], %426 {strides = array<i32>} : memref<108x1024xf32, #tpu.memory_space<vmem>>, vector<4x256xf32>,
    %c80_408 = arith.constant 80 : index
    %c512_409 = arith.constant 512 : index
    %439 = vector.load %arg7[%c80_408, %c512_409] : memref<108x1024xf32, #tpu.memory_space<vmem>>, vector<4x256xf32>
    tpu.vector_store %arg7[%c80_408, %c512_409], %436 {strides = array<i32>} : memref<108x1024xf32, #tpu.memory_space<vmem>>, vector<4x256xf32>,
    %c0_410 = arith.constant 0 : index
    %440 = arith.index_cast %423 : i32 to index
    %c0_411 = arith.constant 0 : index
    %c17_412 = arith.constant 17 : index
    %441 = vector.load %arg2[%c0_410, %440, %c0_411, %c17_412] : memref<1x18x4x290xf32, #tpu.memory_space<vmem>>, vector<1x1x4x256xf32>
    %442 = vector.shape_cast %441 : vector<1x1x4x256xf32> to vector<4x256xf32>
    %c0_413 = arith.constant 0 : index
    %443 = arith.index_cast %423 : i32 to index
    %c0_414 = arith.constant 0 : index
    %c16_415 = arith.constant 16 : index
    %444 = vector.load %arg2[%c0_413, %443, %c0_414, %c16_415] : memref<1x18x4x290xf32, #tpu.memory_space<vmem>>, vector<1x1x4x256xf32>
    %445 = vector.shape_cast %444 : vector<1x1x4x256xf32> to vector<4x256xf32>
    %cst_416 = arith.constant 0.000000e+00 : f32
    %446 = vector.broadcast %cst_416 : f32 to vector<4x256xf32>
    %447 = arith.select %19, %446, %445 : vector<4x256xi1>, vector<4x256xf32>
    %c0_417 = arith.constant 0 : index
    %448 = arith.index_cast %423 : i32 to index
    %c0_418 = arith.constant 0 : index
    %c18_419 = arith.constant 18 : index
    %449 = vector.load %arg2[%c0_417, %448, %c0_418, %c18_419] : memref<1x18x4x290xf32, #tpu.memory_space<vmem>>, vector<1x1x4x256xf32>
    %450 = vector.shape_cast %449 : vector<1x1x4x256xf32> to vector<4x256xf32>
    %cst_420 = arith.constant 0.000000e+00 : f32
    %451 = vector.broadcast %cst_420 : f32 to vector<4x256xf32>
    %452 = arith.select %21, %451, %450 : vector<4x256xi1>, vector<4x256xf32>
    %c84_421 = arith.constant 84 : index
    %c512_422 = arith.constant 512 : index
    %453 = vector.load %arg7[%c84_421, %c512_422] : memref<108x1024xf32, #tpu.memory_space<vmem>>, vector<4x256xf32>
    tpu.vector_store %arg7[%c84_421, %c512_422], %447 {strides = array<i32>} : memref<108x1024xf32, #tpu.memory_space<vmem>>, vector<4x256xf32>,
    %c88_423 = arith.constant 88 : index
    %c512_424 = arith.constant 512 : index
    %454 = vector.load %arg7[%c88_423, %c512_424] : memref<108x1024xf32, #tpu.memory_space<vmem>>, vector<4x256xf32>
    tpu.vector_store %arg7[%c88_423, %c512_424], %442 {strides = array<i32>} : memref<108x1024xf32, #tpu.memory_space<vmem>>, vector<4x256xf32>,
    %c92_425 = arith.constant 92 : index
    %c512_426 = arith.constant 512 : index
    %455 = vector.load %arg7[%c92_425, %c512_426] : memref<108x1024xf32, #tpu.memory_space<vmem>>, vector<4x256xf32>
    tpu.vector_store %arg7[%c92_425, %c512_426], %452 {strides = array<i32>} : memref<108x1024xf32, #tpu.memory_space<vmem>>, vector<4x256xf32>,
    %c0_427 = arith.constant 0 : index
    %456 = arith.index_cast %423 : i32 to index
    %c0_428 = arith.constant 0 : index
    %c33_429 = arith.constant 33 : index
    %457 = vector.load %arg2[%c0_427, %456, %c0_428, %c33_429] : memref<1x18x4x290xf32, #tpu.memory_space<vmem>>, vector<1x1x4x256xf32>
    %458 = vector.shape_cast %457 : vector<1x1x4x256xf32> to vector<4x256xf32>
    %c0_430 = arith.constant 0 : index
    %459 = arith.index_cast %423 : i32 to index
    %c0_431 = arith.constant 0 : index
    %c32_432 = arith.constant 32 : index
    %460 = vector.load %arg2[%c0_430, %459, %c0_431, %c32_432] : memref<1x18x4x290xf32, #tpu.memory_space<vmem>>, vector<1x1x4x256xf32>
    %461 = vector.shape_cast %460 : vector<1x1x4x256xf32> to vector<4x256xf32>
    %cst_433 = arith.constant 0.000000e+00 : f32
    %462 = vector.broadcast %cst_433 : f32 to vector<4x256xf32>
    %463 = arith.select %19, %462, %461 : vector<4x256xi1>, vector<4x256xf32>
    %c0_434 = arith.constant 0 : index
    %464 = arith.index_cast %423 : i32 to index
    %c0_435 = arith.constant 0 : index
    %c34_436 = arith.constant 34 : index
    %465 = vector.load %arg2[%c0_434, %464, %c0_435, %c34_436] : memref<1x18x4x290xf32, #tpu.memory_space<vmem>>, vector<1x1x4x256xf32>
    %466 = vector.shape_cast %465 : vector<1x1x4x256xf32> to vector<4x256xf32>
    %cst_437 = arith.constant 0.000000e+00 : f32
    %467 = vector.broadcast %cst_437 : f32 to vector<4x256xf32>
    %468 = arith.select %21, %467, %466 : vector<4x256xi1>, vector<4x256xf32>
    %c96_438 = arith.constant 96 : index
    %c512_439 = arith.constant 512 : index
    %469 = vector.load %arg7[%c96_438, %c512_439] : memref<108x1024xf32, #tpu.memory_space<vmem>>, vector<4x256xf32>
    tpu.vector_store %arg7[%c96_438, %c512_439], %463 {strides = array<i32>} : memref<108x1024xf32, #tpu.memory_space<vmem>>, vector<4x256xf32>,
    %c100_440 = arith.constant 100 : index
    %c512_441 = arith.constant 512 : index
    %470 = vector.load %arg7[%c100_440, %c512_441] : memref<108x1024xf32, #tpu.memory_space<vmem>>, vector<4x256xf32>
    tpu.vector_store %arg7[%c100_440, %c512_441], %458 {strides = array<i32>} : memref<108x1024xf32, #tpu.memory_space<vmem>>, vector<4x256xf32>,
    %c104_442 = arith.constant 104 : index
    %c512_443 = arith.constant 512 : index
    %471 = vector.load %arg7[%c104_442, %c512_443] : memref<108x1024xf32, #tpu.memory_space<vmem>>, vector<4x256xf32>
    tpu.vector_store %arg7[%c104_442, %c512_443], %468 {strides = array<i32>} : memref<108x1024xf32, #tpu.memory_space<vmem>>, vector<4x256xf32>,
    %c3_i32 = arith.constant 3 : i32
    %472 = arith.addi %0, %c3_i32 : i32
    %c0_i32_444 = arith.constant 0 : i32
    %473 = arith.addi %472, %c0_i32_444 : i32
    %c0_445 = arith.constant 0 : index
    %474 = arith.index_cast %473 : i32 to index
    %c0_446 = arith.constant 0 : index
    %c1_447 = arith.constant 1 : index
    %475 = vector.load %arg2[%c0_445, %474, %c0_446, %c1_447] : memref<1x18x4x290xf32, #tpu.memory_space<vmem>>, vector<1x1x4x256xf32>
    %476 = vector.shape_cast %475 : vector<1x1x4x256xf32> to vector<4x256xf32>
    %c0_448 = arith.constant 0 : index
    %477 = arith.index_cast %473 : i32 to index
    %c0_449 = arith.constant 0 : index
    %c0_450 = arith.constant 0 : index
    %478 = vector.load %arg2[%c0_448, %477, %c0_449, %c0_450] : memref<1x18x4x290xf32, #tpu.memory_space<vmem>>, vector<1x1x4x256xf32>
    %479 = vector.shape_cast %478 : vector<1x1x4x256xf32> to vector<4x256xf32>
    %cst_451 = arith.constant 0.000000e+00 : f32
    %480 = vector.broadcast %cst_451 : f32 to vector<4x256xf32>
    %481 = arith.select %19, %480, %479 : vector<4x256xi1>, vector<4x256xf32>
    %c0_452 = arith.constant 0 : index
    %482 = arith.index_cast %473 : i32 to index
    %c0_453 = arith.constant 0 : index
    %c2_454 = arith.constant 2 : index
    %483 = vector.load %arg2[%c0_452, %482, %c0_453, %c2_454] : memref<1x18x4x290xf32, #tpu.memory_space<vmem>>, vector<1x1x4x256xf32>
    %484 = vector.shape_cast %483 : vector<1x1x4x256xf32> to vector<4x256xf32>
    %cst_455 = arith.constant 0.000000e+00 : f32
    %485 = vector.broadcast %cst_455 : f32 to vector<4x256xf32>
    %486 = arith.select %21, %485, %484 : vector<4x256xi1>, vector<4x256xf32>
    %c0_456 = arith.constant 0 : index
    %c768 = arith.constant 768 : index
    %487 = vector.load %arg7[%c0_456, %c768] : memref<108x1024xf32, #tpu.memory_space<vmem>>, vector<4x256xf32>
    tpu.vector_store %arg7[%c0_456, %c768], %481 {strides = array<i32>} : memref<108x1024xf32, #tpu.memory_space<vmem>>, vector<4x256xf32>,
    %c4_457 = arith.constant 4 : index
    %c768_458 = arith.constant 768 : index
    %488 = vector.load %arg7[%c4_457, %c768_458] : memref<108x1024xf32, #tpu.memory_space<vmem>>, vector<4x256xf32>
    tpu.vector_store %arg7[%c4_457, %c768_458], %476 {strides = array<i32>} : memref<108x1024xf32, #tpu.memory_space<vmem>>, vector<4x256xf32>,
    %c8_459 = arith.constant 8 : index
    %c768_460 = arith.constant 768 : index
    %489 = vector.load %arg7[%c8_459, %c768_460] : memref<108x1024xf32, #tpu.memory_space<vmem>>, vector<4x256xf32>
    tpu.vector_store %arg7[%c8_459, %c768_460], %486 {strides = array<i32>} : memref<108x1024xf32, #tpu.memory_space<vmem>>, vector<4x256xf32>,
    %c0_461 = arith.constant 0 : index
    %490 = arith.index_cast %473 : i32 to index
    %c0_462 = arith.constant 0 : index
    %c17_463 = arith.constant 17 : index
    %491 = vector.load %arg2[%c0_461, %490, %c0_462, %c17_463] : memref<1x18x4x290xf32, #tpu.memory_space<vmem>>, vector<1x1x4x256xf32>
    %492 = vector.shape_cast %491 : vector<1x1x4x256xf32> to vector<4x256xf32>
    %c0_464 = arith.constant 0 : index
    %493 = arith.index_cast %473 : i32 to index
    %c0_465 = arith.constant 0 : index
    %c16_466 = arith.constant 16 : index
    %494 = vector.load %arg2[%c0_464, %493, %c0_465, %c16_466] : memref<1x18x4x290xf32, #tpu.memory_space<vmem>>, vector<1x1x4x256xf32>
    %495 = vector.shape_cast %494 : vector<1x1x4x256xf32> to vector<4x256xf32>
    %cst_467 = arith.constant 0.000000e+00 : f32
    %496 = vector.broadcast %cst_467 : f32 to vector<4x256xf32>
    %497 = arith.select %19, %496, %495 : vector<4x256xi1>, vector<4x256xf32>
    %c0_468 = arith.constant 0 : index
    %498 = arith.index_cast %473 : i32 to index
    %c0_469 = arith.constant 0 : index
    %c18_470 = arith.constant 18 : index
    %499 = vector.load %arg2[%c0_468, %498, %c0_469, %c18_470] : memref<1x18x4x290xf32, #tpu.memory_space<vmem>>, vector<1x1x4x256xf32>
    %500 = vector.shape_cast %499 : vector<1x1x4x256xf32> to vector<4x256xf32>
    %cst_471 = arith.constant 0.000000e+00 : f32
    %501 = vector.broadcast %cst_471 : f32 to vector<4x256xf32>
    %502 = arith.select %21, %501, %500 : vector<4x256xi1>, vector<4x256xf32>
    %c12_472 = arith.constant 12 : index
    %c768_473 = arith.constant 768 : index
    %503 = vector.load %arg7[%c12_472, %c768_473] : memref<108x1024xf32, #tpu.memory_space<vmem>>, vector<4x256xf32>
    tpu.vector_store %arg7[%c12_472, %c768_473], %497 {strides = array<i32>} : memref<108x1024xf32, #tpu.memory_space<vmem>>, vector<4x256xf32>,
    %c16_474 = arith.constant 16 : index
    %c768_475 = arith.constant 768 : index
    %504 = vector.load %arg7[%c16_474, %c768_475] : memref<108x1024xf32, #tpu.memory_space<vmem>>, vector<4x256xf32>
    tpu.vector_store %arg7[%c16_474, %c768_475], %492 {strides = array<i32>} : memref<108x1024xf32, #tpu.memory_space<vmem>>, vector<4x256xf32>,
    %c20_476 = arith.constant 20 : index
    %c768_477 = arith.constant 768 : index
    %505 = vector.load %arg7[%c20_476, %c768_477] : memref<108x1024xf32, #tpu.memory_space<vmem>>, vector<4x256xf32>
    tpu.vector_store %arg7[%c20_476, %c768_477], %502 {strides = array<i32>} : memref<108x1024xf32, #tpu.memory_space<vmem>>, vector<4x256xf32>,
    %c0_478 = arith.constant 0 : index
    %506 = arith.index_cast %473 : i32 to index
    %c0_479 = arith.constant 0 : index
    %c33_480 = arith.constant 33 : index
    %507 = vector.load %arg2[%c0_478, %506, %c0_479, %c33_480] : memref<1x18x4x290xf32, #tpu.memory_space<vmem>>, vector<1x1x4x256xf32>
    %508 = vector.shape_cast %507 : vector<1x1x4x256xf32> to vector<4x256xf32>
    %c0_481 = arith.constant 0 : index
    %509 = arith.index_cast %473 : i32 to index
    %c0_482 = arith.constant 0 : index
    %c32_483 = arith.constant 32 : index
    %510 = vector.load %arg2[%c0_481, %509, %c0_482, %c32_483] : memref<1x18x4x290xf32, #tpu.memory_space<vmem>>, vector<1x1x4x256xf32>
    %511 = vector.shape_cast %510 : vector<1x1x4x256xf32> to vector<4x256xf32>
    %cst_484 = arith.constant 0.000000e+00 : f32
    %512 = vector.broadcast %cst_484 : f32 to vector<4x256xf32>
    %513 = arith.select %19, %512, %511 : vector<4x256xi1>, vector<4x256xf32>
    %c0_485 = arith.constant 0 : index
    %514 = arith.index_cast %473 : i32 to index
    %c0_486 = arith.constant 0 : index
    %c34_487 = arith.constant 34 : index
    %515 = vector.load %arg2[%c0_485, %514, %c0_486, %c34_487] : memref<1x18x4x290xf32, #tpu.memory_space<vmem>>, vector<1x1x4x256xf32>
    %516 = vector.shape_cast %515 : vector<1x1x4x256xf32> to vector<4x256xf32>
    %cst_488 = arith.constant 0.000000e+00 : f32
    %517 = vector.broadcast %cst_488 : f32 to vector<4x256xf32>
    %518 = arith.select %21, %517, %516 : vector<4x256xi1>, vector<4x256xf32>
    %c24_489 = arith.constant 24 : index
    %c768_490 = arith.constant 768 : index
    %519 = vector.load %arg7[%c24_489, %c768_490] : memref<108x1024xf32, #tpu.memory_space<vmem>>, vector<4x256xf32>
    tpu.vector_store %arg7[%c24_489, %c768_490], %513 {strides = array<i32>} : memref<108x1024xf32, #tpu.memory_space<vmem>>, vector<4x256xf32>,
    %c28_491 = arith.constant 28 : index
    %c768_492 = arith.constant 768 : index
    %520 = vector.load %arg7[%c28_491, %c768_492] : memref<108x1024xf32, #tpu.memory_space<vmem>>, vector<4x256xf32>
    tpu.vector_store %arg7[%c28_491, %c768_492], %508 {strides = array<i32>} : memref<108x1024xf32, #tpu.memory_space<vmem>>, vector<4x256xf32>,
    %c32_493 = arith.constant 32 : index
    %c768_494 = arith.constant 768 : index
    %521 = vector.load %arg7[%c32_493, %c768_494] : memref<108x1024xf32, #tpu.memory_space<vmem>>, vector<4x256xf32>
    tpu.vector_store %arg7[%c32_493, %c768_494], %518 {strides = array<i32>} : memref<108x1024xf32, #tpu.memory_space<vmem>>, vector<4x256xf32>,
    %c3_i32_495 = arith.constant 3 : i32
    %522 = arith.addi %0, %c3_i32_495 : i32
    %c1_i32_496 = arith.constant 1 : i32
    %523 = arith.addi %522, %c1_i32_496 : i32
    %c0_497 = arith.constant 0 : index
    %524 = arith.index_cast %523 : i32 to index
    %c0_498 = arith.constant 0 : index
    %c1_499 = arith.constant 1 : index
    %525 = vector.load %arg2[%c0_497, %524, %c0_498, %c1_499] : memref<1x18x4x290xf32, #tpu.memory_space<vmem>>, vector<1x1x4x256xf32>
    %526 = vector.shape_cast %525 : vector<1x1x4x256xf32> to vector<4x256xf32>
    %c0_500 = arith.constant 0 : index
    %527 = arith.index_cast %523 : i32 to index
    %c0_501 = arith.constant 0 : index
    %c0_502 = arith.constant 0 : index
    %528 = vector.load %arg2[%c0_500, %527, %c0_501, %c0_502] : memref<1x18x4x290xf32, #tpu.memory_space<vmem>>, vector<1x1x4x256xf32>
    %529 = vector.shape_cast %528 : vector<1x1x4x256xf32> to vector<4x256xf32>
    %cst_503 = arith.constant 0.000000e+00 : f32
    %530 = vector.broadcast %cst_503 : f32 to vector<4x256xf32>
    %531 = arith.select %19, %530, %529 : vector<4x256xi1>, vector<4x256xf32>
    %c0_504 = arith.constant 0 : index
    %532 = arith.index_cast %523 : i32 to index
    %c0_505 = arith.constant 0 : index
    %c2_506 = arith.constant 2 : index
    %533 = vector.load %arg2[%c0_504, %532, %c0_505, %c2_506] : memref<1x18x4x290xf32, #tpu.memory_space<vmem>>, vector<1x1x4x256xf32>
    %534 = vector.shape_cast %533 : vector<1x1x4x256xf32> to vector<4x256xf32>
    %cst_507 = arith.constant 0.000000e+00 : f32
    %535 = vector.broadcast %cst_507 : f32 to vector<4x256xf32>
    %536 = arith.select %21, %535, %534 : vector<4x256xi1>, vector<4x256xf32>
    %c36_508 = arith.constant 36 : index
    %c768_509 = arith.constant 768 : index
    %537 = vector.load %arg7[%c36_508, %c768_509] : memref<108x1024xf32, #tpu.memory_space<vmem>>, vector<4x256xf32>
    tpu.vector_store %arg7[%c36_508, %c768_509], %531 {strides = array<i32>} : memref<108x1024xf32, #tpu.memory_space<vmem>>, vector<4x256xf32>,
    %c40_510 = arith.constant 40 : index
    %c768_511 = arith.constant 768 : index
    %538 = vector.load %arg7[%c40_510, %c768_511] : memref<108x1024xf32, #tpu.memory_space<vmem>>, vector<4x256xf32>
    tpu.vector_store %arg7[%c40_510, %c768_511], %526 {strides = array<i32>} : memref<108x1024xf32, #tpu.memory_space<vmem>>, vector<4x256xf32>,
    %c44_512 = arith.constant 44 : index
    %c768_513 = arith.constant 768 : index
    %539 = vector.load %arg7[%c44_512, %c768_513] : memref<108x1024xf32, #tpu.memory_space<vmem>>, vector<4x256xf32>
    tpu.vector_store %arg7[%c44_512, %c768_513], %536 {strides = array<i32>} : memref<108x1024xf32, #tpu.memory_space<vmem>>, vector<4x256xf32>,
    %c0_514 = arith.constant 0 : index
    %540 = arith.index_cast %523 : i32 to index
    %c0_515 = arith.constant 0 : index
    %c17_516 = arith.constant 17 : index
    %541 = vector.load %arg2[%c0_514, %540, %c0_515, %c17_516] : memref<1x18x4x290xf32, #tpu.memory_space<vmem>>, vector<1x1x4x256xf32>
    %542 = vector.shape_cast %541 : vector<1x1x4x256xf32> to vector<4x256xf32>
    %c0_517 = arith.constant 0 : index
    %543 = arith.index_cast %523 : i32 to index
    %c0_518 = arith.constant 0 : index
    %c16_519 = arith.constant 16 : index
    %544 = vector.load %arg2[%c0_517, %543, %c0_518, %c16_519] : memref<1x18x4x290xf32, #tpu.memory_space<vmem>>, vector<1x1x4x256xf32>
    %545 = vector.shape_cast %544 : vector<1x1x4x256xf32> to vector<4x256xf32>
    %cst_520 = arith.constant 0.000000e+00 : f32
    %546 = vector.broadcast %cst_520 : f32 to vector<4x256xf32>
    %547 = arith.select %19, %546, %545 : vector<4x256xi1>, vector<4x256xf32>
    %c0_521 = arith.constant 0 : index
    %548 = arith.index_cast %523 : i32 to index
    %c0_522 = arith.constant 0 : index
    %c18_523 = arith.constant 18 : index
    %549 = vector.load %arg2[%c0_521, %548, %c0_522, %c18_523] : memref<1x18x4x290xf32, #tpu.memory_space<vmem>>, vector<1x1x4x256xf32>
    %550 = vector.shape_cast %549 : vector<1x1x4x256xf32> to vector<4x256xf32>
    %cst_524 = arith.constant 0.000000e+00 : f32
    %551 = vector.broadcast %cst_524 : f32 to vector<4x256xf32>
    %552 = arith.select %21, %551, %550 : vector<4x256xi1>, vector<4x256xf32>
    %c48_525 = arith.constant 48 : index
    %c768_526 = arith.constant 768 : index
    %553 = vector.load %arg7[%c48_525, %c768_526] : memref<108x1024xf32, #tpu.memory_space<vmem>>, vector<4x256xf32>
    tpu.vector_store %arg7[%c48_525, %c768_526], %547 {strides = array<i32>} : memref<108x1024xf32, #tpu.memory_space<vmem>>, vector<4x256xf32>,
    %c52_527 = arith.constant 52 : index
    %c768_528 = arith.constant 768 : index
    %554 = vector.load %arg7[%c52_527, %c768_528] : memref<108x1024xf32, #tpu.memory_space<vmem>>, vector<4x256xf32>
    tpu.vector_store %arg7[%c52_527, %c768_528], %542 {strides = array<i32>} : memref<108x1024xf32, #tpu.memory_space<vmem>>, vector<4x256xf32>,
    %c56_529 = arith.constant 56 : index
    %c768_530 = arith.constant 768 : index
    %555 = vector.load %arg7[%c56_529, %c768_530] : memref<108x1024xf32, #tpu.memory_space<vmem>>, vector<4x256xf32>
    tpu.vector_store %arg7[%c56_529, %c768_530], %552 {strides = array<i32>} : memref<108x1024xf32, #tpu.memory_space<vmem>>, vector<4x256xf32>,
    %c0_531 = arith.constant 0 : index
    %556 = arith.index_cast %523 : i32 to index
    %c0_532 = arith.constant 0 : index
    %c33_533 = arith.constant 33 : index
    %557 = vector.load %arg2[%c0_531, %556, %c0_532, %c33_533] : memref<1x18x4x290xf32, #tpu.memory_space<vmem>>, vector<1x1x4x256xf32>
    %558 = vector.shape_cast %557 : vector<1x1x4x256xf32> to vector<4x256xf32>
    %c0_534 = arith.constant 0 : index
    %559 = arith.index_cast %523 : i32 to index
    %c0_535 = arith.constant 0 : index
    %c32_536 = arith.constant 32 : index
    %560 = vector.load %arg2[%c0_534, %559, %c0_535, %c32_536] : memref<1x18x4x290xf32, #tpu.memory_space<vmem>>, vector<1x1x4x256xf32>
    %561 = vector.shape_cast %560 : vector<1x1x4x256xf32> to vector<4x256xf32>
    %cst_537 = arith.constant 0.000000e+00 : f32
    %562 = vector.broadcast %cst_537 : f32 to vector<4x256xf32>
    %563 = arith.select %19, %562, %561 : vector<4x256xi1>, vector<4x256xf32>
    %c0_538 = arith.constant 0 : index
    %564 = arith.index_cast %523 : i32 to index
    %c0_539 = arith.constant 0 : index
    %c34_540 = arith.constant 34 : index
    %565 = vector.load %arg2[%c0_538, %564, %c0_539, %c34_540] : memref<1x18x4x290xf32, #tpu.memory_space<vmem>>, vector<1x1x4x256xf32>
    %566 = vector.shape_cast %565 : vector<1x1x4x256xf32> to vector<4x256xf32>
    %cst_541 = arith.constant 0.000000e+00 : f32
    %567 = vector.broadcast %cst_541 : f32 to vector<4x256xf32>
    %568 = arith.select %21, %567, %566 : vector<4x256xi1>, vector<4x256xf32>
    %c60_542 = arith.constant 60 : index
    %c768_543 = arith.constant 768 : index
    %569 = vector.load %arg7[%c60_542, %c768_543] : memref<108x1024xf32, #tpu.memory_space<vmem>>, vector<4x256xf32>
    tpu.vector_store %arg7[%c60_542, %c768_543], %563 {strides = array<i32>} : memref<108x1024xf32, #tpu.memory_space<vmem>>, vector<4x256xf32>,
    %c64_544 = arith.constant 64 : index
    %c768_545 = arith.constant 768 : index
    %570 = vector.load %arg7[%c64_544, %c768_545] : memref<108x1024xf32, #tpu.memory_space<vmem>>, vector<4x256xf32>
    tpu.vector_store %arg7[%c64_544, %c768_545], %558 {strides = array<i32>} : memref<108x1024xf32, #tpu.memory_space<vmem>>, vector<4x256xf32>,
    %c68_546 = arith.constant 68 : index
    %c768_547 = arith.constant 768 : index
    %571 = vector.load %arg7[%c68_546, %c768_547] : memref<108x1024xf32, #tpu.memory_space<vmem>>, vector<4x256xf32>
    tpu.vector_store %arg7[%c68_546, %c768_547], %568 {strides = array<i32>} : memref<108x1024xf32, #tpu.memory_space<vmem>>, vector<4x256xf32>,
    %c3_i32_548 = arith.constant 3 : i32
    %572 = arith.addi %0, %c3_i32_548 : i32
    %c2_i32_549 = arith.constant 2 : i32
    %573 = arith.addi %572, %c2_i32_549 : i32
    %c0_550 = arith.constant 0 : index
    %574 = arith.index_cast %573 : i32 to index
    %c0_551 = arith.constant 0 : index
    %c1_552 = arith.constant 1 : index
    %575 = vector.load %arg2[%c0_550, %574, %c0_551, %c1_552] : memref<1x18x4x290xf32, #tpu.memory_space<vmem>>, vector<1x1x4x256xf32>
    %576 = vector.shape_cast %575 : vector<1x1x4x256xf32> to vector<4x256xf32>
    %c0_553 = arith.constant 0 : index
    %577 = arith.index_cast %573 : i32 to index
    %c0_554 = arith.constant 0 : index
    %c0_555 = arith.constant 0 : index
    %578 = vector.load %arg2[%c0_553, %577, %c0_554, %c0_555] : memref<1x18x4x290xf32, #tpu.memory_space<vmem>>, vector<1x1x4x256xf32>
    %579 = vector.shape_cast %578 : vector<1x1x4x256xf32> to vector<4x256xf32>
    %cst_556 = arith.constant 0.000000e+00 : f32
    %580 = vector.broadcast %cst_556 : f32 to vector<4x256xf32>
    %581 = arith.select %19, %580, %579 : vector<4x256xi1>, vector<4x256xf32>
    %c0_557 = arith.constant 0 : index
    %582 = arith.index_cast %573 : i32 to index
    %c0_558 = arith.constant 0 : index
    %c2_559 = arith.constant 2 : index
    %583 = vector.load %arg2[%c0_557, %582, %c0_558, %c2_559] : memref<1x18x4x290xf32, #tpu.memory_space<vmem>>, vector<1x1x4x256xf32>
    %584 = vector.shape_cast %583 : vector<1x1x4x256xf32> to vector<4x256xf32>
    %cst_560 = arith.constant 0.000000e+00 : f32
    %585 = vector.broadcast %cst_560 : f32 to vector<4x256xf32>
    %586 = arith.select %21, %585, %584 : vector<4x256xi1>, vector<4x256xf32>
    %c72_561 = arith.constant 72 : index
    %c768_562 = arith.constant 768 : index
    %587 = vector.load %arg7[%c72_561, %c768_562] : memref<108x1024xf32, #tpu.memory_space<vmem>>, vector<4x256xf32>
    tpu.vector_store %arg7[%c72_561, %c768_562], %581 {strides = array<i32>} : memref<108x1024xf32, #tpu.memory_space<vmem>>, vector<4x256xf32>,
    %c76_563 = arith.constant 76 : index
    %c768_564 = arith.constant 768 : index
    %588 = vector.load %arg7[%c76_563, %c768_564] : memref<108x1024xf32, #tpu.memory_space<vmem>>, vector<4x256xf32>
    tpu.vector_store %arg7[%c76_563, %c768_564], %576 {strides = array<i32>} : memref<108x1024xf32, #tpu.memory_space<vmem>>, vector<4x256xf32>,
    %c80_565 = arith.constant 80 : index
    %c768_566 = arith.constant 768 : index
    %589 = vector.load %arg7[%c80_565, %c768_566] : memref<108x1024xf32, #tpu.memory_space<vmem>>, vector<4x256xf32>
    tpu.vector_store %arg7[%c80_565, %c768_566], %586 {strides = array<i32>} : memref<108x1024xf32, #tpu.memory_space<vmem>>, vector<4x256xf32>,
    %c0_567 = arith.constant 0 : index
    %590 = arith.index_cast %573 : i32 to index
    %c0_568 = arith.constant 0 : index
    %c17_569 = arith.constant 17 : index
    %591 = vector.load %arg2[%c0_567, %590, %c0_568, %c17_569] : memref<1x18x4x290xf32, #tpu.memory_space<vmem>>, vector<1x1x4x256xf32>
    %592 = vector.shape_cast %591 : vector<1x1x4x256xf32> to vector<4x256xf32>
    %c0_570 = arith.constant 0 : index
    %593 = arith.index_cast %573 : i32 to index
    %c0_571 = arith.constant 0 : index
    %c16_572 = arith.constant 16 : index
    %594 = vector.load %arg2[%c0_570, %593, %c0_571, %c16_572] : memref<1x18x4x290xf32, #tpu.memory_space<vmem>>, vector<1x1x4x256xf32>
    %595 = vector.shape_cast %594 : vector<1x1x4x256xf32> to vector<4x256xf32>
    %cst_573 = arith.constant 0.000000e+00 : f32
    %596 = vector.broadcast %cst_573 : f32 to vector<4x256xf32>
    %597 = arith.select %19, %596, %595 : vector<4x256xi1>, vector<4x256xf32>
    %c0_574 = arith.constant 0 : index
    %598 = arith.index_cast %573 : i32 to index
    %c0_575 = arith.constant 0 : index
    %c18_576 = arith.constant 18 : index
    %599 = vector.load %arg2[%c0_574, %598, %c0_575, %c18_576] : memref<1x18x4x290xf32, #tpu.memory_space<vmem>>, vector<1x1x4x256xf32>
    %600 = vector.shape_cast %599 : vector<1x1x4x256xf32> to vector<4x256xf32>
    %cst_577 = arith.constant 0.000000e+00 : f32
    %601 = vector.broadcast %cst_577 : f32 to vector<4x256xf32>
    %602 = arith.select %21, %601, %600 : vector<4x256xi1>, vector<4x256xf32>
    %c84_578 = arith.constant 84 : index
    %c768_579 = arith.constant 768 : index
    %603 = vector.load %arg7[%c84_578, %c768_579] : memref<108x1024xf32, #tpu.memory_space<vmem>>, vector<4x256xf32>
    tpu.vector_store %arg7[%c84_578, %c768_579], %597 {strides = array<i32>} : memref<108x1024xf32, #tpu.memory_space<vmem>>, vector<4x256xf32>,
    %c88_580 = arith.constant 88 : index
    %c768_581 = arith.constant 768 : index
    %604 = vector.load %arg7[%c88_580, %c768_581] : memref<108x1024xf32, #tpu.memory_space<vmem>>, vector<4x256xf32>
    tpu.vector_store %arg7[%c88_580, %c768_581], %592 {strides = array<i32>} : memref<108x1024xf32, #tpu.memory_space<vmem>>, vector<4x256xf32>,
    %c92_582 = arith.constant 92 : index
    %c768_583 = arith.constant 768 : index
    %605 = vector.load %arg7[%c92_582, %c768_583] : memref<108x1024xf32, #tpu.memory_space<vmem>>, vector<4x256xf32>
    tpu.vector_store %arg7[%c92_582, %c768_583], %602 {strides = array<i32>} : memref<108x1024xf32, #tpu.memory_space<vmem>>, vector<4x256xf32>,
    %c0_584 = arith.constant 0 : index
    %606 = arith.index_cast %573 : i32 to index
    %c0_585 = arith.constant 0 : index
    %c33_586 = arith.constant 33 : index
    %607 = vector.load %arg2[%c0_584, %606, %c0_585, %c33_586] : memref<1x18x4x290xf32, #tpu.memory_space<vmem>>, vector<1x1x4x256xf32>
    %608 = vector.shape_cast %607 : vector<1x1x4x256xf32> to vector<4x256xf32>
    %c0_587 = arith.constant 0 : index
    %609 = arith.index_cast %573 : i32 to index
    %c0_588 = arith.constant 0 : index
    %c32_589 = arith.constant 32 : index
    %610 = vector.load %arg2[%c0_587, %609, %c0_588, %c32_589] : memref<1x18x4x290xf32, #tpu.memory_space<vmem>>, vector<1x1x4x256xf32>
    %611 = vector.shape_cast %610 : vector<1x1x4x256xf32> to vector<4x256xf32>
    %cst_590 = arith.constant 0.000000e+00 : f32
    %612 = vector.broadcast %cst_590 : f32 to vector<4x256xf32>
    %613 = arith.select %19, %612, %611 : vector<4x256xi1>, vector<4x256xf32>
    %c0_591 = arith.constant 0 : index
    %614 = arith.index_cast %573 : i32 to index
    %c0_592 = arith.constant 0 : index
    %c34_593 = arith.constant 34 : index
    %615 = vector.load %arg2[%c0_591, %614, %c0_592, %c34_593] : memref<1x18x4x290xf32, #tpu.memory_space<vmem>>, vector<1x1x4x256xf32>
    %616 = vector.shape_cast %615 : vector<1x1x4x256xf32> to vector<4x256xf32>
    %cst_594 = arith.constant 0.000000e+00 : f32
    %617 = vector.broadcast %cst_594 : f32 to vector<4x256xf32>
    %618 = arith.select %21, %617, %616 : vector<4x256xi1>, vector<4x256xf32>
    %c96_595 = arith.constant 96 : index
    %c768_596 = arith.constant 768 : index
    %619 = vector.load %arg7[%c96_595, %c768_596] : memref<108x1024xf32, #tpu.memory_space<vmem>>, vector<4x256xf32>
    tpu.vector_store %arg7[%c96_595, %c768_596], %613 {strides = array<i32>} : memref<108x1024xf32, #tpu.memory_space<vmem>>, vector<4x256xf32>,
    %c100_597 = arith.constant 100 : index
    %c768_598 = arith.constant 768 : index
    %620 = vector.load %arg7[%c100_597, %c768_598] : memref<108x1024xf32, #tpu.memory_space<vmem>>, vector<4x256xf32>
    tpu.vector_store %arg7[%c100_597, %c768_598], %608 {strides = array<i32>} : memref<108x1024xf32, #tpu.memory_space<vmem>>, vector<4x256xf32>,
    %c104_599 = arith.constant 104 : index
    %c768_600 = arith.constant 768 : index
    %621 = vector.load %arg7[%c104_599, %c768_600] : memref<108x1024xf32, #tpu.memory_space<vmem>>, vector<4x256xf32>
    tpu.vector_store %arg7[%c104_599, %c768_600], %618 {strides = array<i32>} : memref<108x1024xf32, #tpu.memory_space<vmem>>, vector<4x256xf32>,
    %c0_601 = arith.constant 0 : index
    %c0_602 = arith.constant 0 : index
    %622 = vector.load %arg3[%c0_601, %c0_602] : memref<8x108xf32, #tpu.memory_space<vmem>>, vector<8x108xf32>
    %c0_603 = arith.constant 0 : index
    %c0_604 = arith.constant 0 : index
    %623 = vector.load %arg7[%c0_603, %c0_604] : memref<108x1024xf32, #tpu.memory_space<vmem>>, vector<108x1024xf32>
    %cst_605 = arith.constant dense<0.000000e+00> : vector<8x1024xf32>
    %624 = tpu.matmul %622, %623, %cst_605 {dimension_numbers = #tpu.dot_dimension_numbers<[1], [0], [0], [1], [0, 0, 1, 1], [], []>} : vector<8x108xf32>, vector<108x1024xf32>, vector<8x1024xf32> -> vector<8x1024xf32>
    %c0_i32_606 = arith.constant 0 : i32
    %625 = arith.cmpi eq, %arg1, %c0_i32_606 : i32
    %626 = arith.extui %625 : i1 to i32
    %c0_i32_607 = arith.constant 0 : i32
    %627 = arith.cmpi ne, %626, %c0_i32_607 : i32
    scf.if %627 {
      %cst_625 = arith.constant 0.000000e+00 : f32
      %643 = vector.broadcast %cst_625 : f32 to vector<1x8x1xf32>
      %c0_626 = arith.constant 0 : index
      %c0_627 = arith.constant 0 : index
      %c0_628 = arith.constant 0 : index
      %644 = vector.load %arg5[%c0_626, %c0_627, %c0_628] : memref<1x8x1xf32, #tpu.memory_space<vmem>>, vector<1x8x1xf32>
      tpu.vector_store %arg5[%c0_626, %c0_627, %c0_628], %643 {strides = array<i32>} : memref<1x8x1xf32, #tpu.memory_space<vmem>>, vector<1x8x1xf32>,
      %cst_629 = arith.constant 0.000000e+00 : f32
      %645 = vector.broadcast %cst_629 : f32 to vector<1x8x1xf32>
      %c0_630 = arith.constant 0 : index
      %c0_631 = arith.constant 0 : index
      %c0_632 = arith.constant 0 : index
      %646 = vector.load %arg6[%c0_630, %c0_631, %c0_632] : memref<1x8x1xf32, #tpu.memory_space<vmem>>, vector<1x8x1xf32>
      tpu.vector_store %arg6[%c0_630, %c0_631, %c0_632], %645 {strides = array<i32>} : memref<1x8x1xf32, #tpu.memory_space<vmem>>, vector<1x8x1xf32>,
    } else {
    }
    %c0_608 = arith.constant 0 : index
    %c0_609 = arith.constant 0 : index
    %c0_610 = arith.constant 0 : index
    %628 = vector.load %arg5[%c0_608, %c0_609, %c0_610] : memref<1x8x1xf32, #tpu.memory_space<vmem>>, vector<1x8x1xf32>
    %cst_611 = arith.constant dense<0.000000e+00> : vector<8xf32>
    %629 = vector.multi_reduction <add>, %624, %cst_611 [1] : vector<8x1024xf32> to vector<8xf32>
    %630 = vector.shape_cast %629 : vector<8xf32> to vector<8x1xf32>
    %631 = vector.shape_cast %630 : vector<8x1xf32> to vector<1x8x1xf32>
    %632 = arith.addf %628, %631 : vector<1x8x1xf32>
    %c0_612 = arith.constant 0 : index
    %c0_613 = arith.constant 0 : index
    %c0_614 = arith.constant 0 : index
    %633 = vector.load %arg5[%c0_612, %c0_613, %c0_614] : memref<1x8x1xf32, #tpu.memory_space<vmem>>, vector<1x8x1xf32>
    tpu.vector_store %arg5[%c0_612, %c0_613, %c0_614], %632 {strides = array<i32>} : memref<1x8x1xf32, #tpu.memory_space<vmem>>, vector<1x8x1xf32>,
    %c0_615 = arith.constant 0 : index
    %c0_616 = arith.constant 0 : index
    %c0_617 = arith.constant 0 : index
    %634 = vector.load %arg6[%c0_615, %c0_616, %c0_617] : memref<1x8x1xf32, #tpu.memory_space<vmem>>, vector<1x8x1xf32>
    %635 = arith.mulf %624, %624 : vector<8x1024xf32>
    %cst_618 = arith.constant dense<0.000000e+00> : vector<8xf32>
    %636 = vector.multi_reduction <add>, %635, %cst_618 [1] : vector<8x1024xf32> to vector<8xf32>
    %637 = vector.shape_cast %636 : vector<8xf32> to vector<8x1xf32>
    %638 = vector.shape_cast %637 : vector<8x1xf32> to vector<1x8x1xf32>
    %639 = arith.addf %634, %638 : vector<1x8x1xf32>
    %c0_619 = arith.constant 0 : index
    %c0_620 = arith.constant 0 : index
    %c0_621 = arith.constant 0 : index
    %640 = vector.load %arg6[%c0_619, %c0_620, %c0_621] : memref<1x8x1xf32, #tpu.memory_space<vmem>>, vector<1x8x1xf32>
    tpu.vector_store %arg6[%c0_619, %c0_620, %c0_621], %639 {strides = array<i32>} : memref<1x8x1xf32, #tpu.memory_space<vmem>>, vector<1x8x1xf32>,
    %641 = vector.shape_cast %624 : vector<8x1024xf32> to vector<1x8x1024xf32>
    %c0_622 = arith.constant 0 : index
    %c0_623 = arith.constant 0 : index
    %c0_624 = arith.constant 0 : index
    %642 = vector.load %arg4[%c0_622, %c0_623, %c0_624] : memref<1x8x1024xf32, #tpu.memory_space<vmem>>, vector<1x8x1024xf32>
    tpu.vector_store %arg4[%c0_622, %c0_623, %c0_624], %641 {strides = array<i32>} : memref<1x8x1024xf32, #tpu.memory_space<vmem>>, vector<1x8x1024xf32>,
    return
  }
  func.func @transform_0(%arg0: i32, %arg1: i32) -> (i32, i32, i32, i32) {
    %c0_i32 = arith.constant 0 : i32
    %c0_i32_0 = arith.constant 0 : i32
    %c0_i32_1 = arith.constant 0 : i32
    %c0_i32_2 = arith.constant 0 : i32
    return %arg0, %c0_i32, %c0_i32_0, %c0_i32_1 : i32, i32, i32, i32
  }
  func.func @transform_1(%arg0: i32, %arg1: i32) -> (i32, i32) {
    %c0_i32 = arith.constant 0 : i32
    %c0_i32_0 = arith.constant 0 : i32
    %c0_i32_1 = arith.constant 0 : i32
    return %c0_i32, %c0_i32_0 : i32, i32
  }
  func.func @transform_2(%arg0: i32, %arg1: i32) -> (i32, i32, i32) {
    %c0_i32 = arith.constant 0 : i32
    %c0_i32_0 = arith.constant 0 : i32
    return %arg0, %c0_i32, %arg1 : i32, i32, i32
  }
  func.func @transform_3(%arg0: i32, %arg1: i32) -> (i32, i32, i32) {
    %c0_i32 = arith.constant 0 : i32
    %c0_i32_0 = arith.constant 0 : i32
    %c0_i32_1 = arith.constant 0 : i32
    return %arg0, %c0_i32, %c0_i32_0 : i32, i32, i32
  }
  func.func @transform_4(%arg0: i32, %arg1: i32) -> (i32, i32, i32) {
    %c0_i32 = arith.constant 0 : i32
    %c0_i32_0 = arith.constant 0 : i32
    %c0_i32_1 = arith.constant 0 : i32
    return %arg0, %c0_i32, %c0_i32_0 : i32, i32, i32
  }
}

module attributes {stable_mosaic.version = 11 : i64} {
  func.func @_bn_lrelu_kernel(%arg0: i32, %arg1: i32, %arg2: memref<1x8x4096xf32, #tpu.memory_space<vmem>>, %arg3: memref<1x8x1xf32, #tpu.memory_space<vmem>>, %arg4: memref<1x8x1xf32, #tpu.memory_space<vmem>>, %arg5: memref<1x8x4096xf32, #tpu.memory_space<vmem>>) attributes {dimension_semantics = [#tpu.dimension_semantics<parallel>, #tpu.dimension_semantics<parallel>], iteration_bounds = array<i64: 2, 1>, scalar_prefetch = 0 : i64, scratch_operands = 0 : i64, tpu.core_type = #tpu.core_type<tc>, window_params = [{transform_indices = @transform_0, window_bounds = array<i64: 1, 8, 4096>}, {pipeline_mode = #tpu.pipeline_mode<synchronous>, transform_indices = @transform_1, window_bounds = array<i64: 1, 8, 1>}, {pipeline_mode = #tpu.pipeline_mode<synchronous>, transform_indices = @transform_2, window_bounds = array<i64: 1, 8, 1>}, {transform_indices = @transform_3, window_bounds = array<i64: 1, 8, 4096>}]} {
    %c0 = arith.constant 0 : index
    %c0_0 = arith.constant 0 : index
    %c0_1 = arith.constant 0 : index
    %0 = vector.load %arg2[%c0, %c0_0, %c0_1] : memref<1x8x4096xf32, #tpu.memory_space<vmem>>, vector<1x8x4096xf32>
    %c0_2 = arith.constant 0 : index
    %c0_3 = arith.constant 0 : index
    %c0_4 = arith.constant 0 : index
    %1 = vector.load %arg3[%c0_2, %c0_3, %c0_4] : memref<1x8x1xf32, #tpu.memory_space<vmem>>, vector<1x8x1xf32>
    %2 = vector.broadcast %1 : vector<1x8x1xf32> to vector<1x8x4096xf32>
    %3 = arith.mulf %0, %2 : vector<1x8x4096xf32>
    %c0_5 = arith.constant 0 : index
    %c0_6 = arith.constant 0 : index
    %c0_7 = arith.constant 0 : index
    %4 = vector.load %arg4[%c0_5, %c0_6, %c0_7] : memref<1x8x1xf32, #tpu.memory_space<vmem>>, vector<1x8x1xf32>
    %5 = vector.broadcast %4 : vector<1x8x1xf32> to vector<1x8x4096xf32>
    %6 = arith.addf %3, %5 : vector<1x8x4096xf32>
    %cst = arith.constant 0.000000e+00 : f32
    %7 = vector.broadcast %cst : f32 to vector<1x8x4096xf32>
    %8 = arith.cmpf oge, %6, %7 : vector<1x8x4096xf32>
    %cst_8 = arith.constant 2.000000e-01 : f32
    %9 = vector.broadcast %cst_8 : f32 to vector<1x8x4096xf32>
    %10 = arith.mulf %9, %6 : vector<1x8x4096xf32>
    %11 = arith.select %8, %6, %10 : vector<1x8x4096xi1>, vector<1x8x4096xf32>
    %c0_9 = arith.constant 0 : index
    %c0_10 = arith.constant 0 : index
    %c0_11 = arith.constant 0 : index
    %12 = vector.load %arg5[%c0_9, %c0_10, %c0_11] : memref<1x8x4096xf32, #tpu.memory_space<vmem>>, vector<1x8x4096xf32>
    tpu.vector_store %arg5[%c0_9, %c0_10, %c0_11], %11 {strides = array<i32>} : memref<1x8x4096xf32, #tpu.memory_space<vmem>>, vector<1x8x4096xf32>,
    return
  }
  func.func @transform_0(%arg0: i32, %arg1: i32) -> (i32, i32, i32) {
    %c0_i32 = arith.constant 0 : i32
    %c0_i32_0 = arith.constant 0 : i32
    return %arg0, %c0_i32, %arg1 : i32, i32, i32
  }
  func.func @transform_1(%arg0: i32, %arg1: i32) -> (i32, i32, i32) {
    %c0_i32 = arith.constant 0 : i32
    %c0_i32_0 = arith.constant 0 : i32
    %c0_i32_1 = arith.constant 0 : i32
    %c0_i32_2 = arith.constant 0 : i32
    return %c0_i32, %c0_i32_0, %c0_i32_1 : i32, i32, i32
  }
  func.func @transform_2(%arg0: i32, %arg1: i32) -> (i32, i32, i32) {
    %c0_i32 = arith.constant 0 : i32
    %c0_i32_0 = arith.constant 0 : i32
    %c0_i32_1 = arith.constant 0 : i32
    %c0_i32_2 = arith.constant 0 : i32
    return %c0_i32, %c0_i32_0, %c0_i32_1 : i32, i32, i32
  }
  func.func @transform_3(%arg0: i32, %arg1: i32) -> (i32, i32, i32) {
    %c0_i32 = arith.constant 0 : i32
    %c0_i32_0 = arith.constant 0 : i32
    return %arg0, %c0_i32, %arg1 : i32, i32, i32
  }
}

</mosaic_0001>

<llo_original>
// kernel: conv_block_forward.3
$region0: #{conv_block_forward.3}
  #allocation0 [shape = 'u32[]', space=smem, size = 0x4, offset = 0x4, fixed_abs, tag = 'smem constant byte address 0x4 - core index']
  #allocation1 [shape = 'u32[144,128]{1,0:T(1,128)}', space=vmem, size = 0x12000, scoped, tag = 'internal scratch']
  %s0 = inlined_call_operand.vmem [shape: f32[2,8,4096], index: 0, kind: input, shape index: {}]
  %s1 = inlined_call_operand.vmem [shape: f32[1,8,1], index: 1, kind: input, shape index: {}]
  %s2 = inlined_call_operand.vmem [shape: f32[1,8,1], index: 2, kind: input, shape index: {}]
  %s3 = inlined_call_operand.vmem [shape: f32[2,8,4096], index: 3, kind: output, shape index: {}]
  %s4 = sld [smem:[#allocation0]]
  $region45: #{conv_block_forward.3} parent=0
    _
  %s6 = ssub.s32 1, %s4
  %s7 = scalar_select 0, %s6, %s4
  loop: start=0, step=1, limit=4
  $region2: #{conv_block_forward.3} parent=0 // loop_pre_header
    _
  $region3: #{conv_block_forward.3} parent=0 // loop_header
    %s9 = sphi 0, %s13
    %p10 = scmp.ge.s32.totalorder %s9, 4
    %s16 = sphi 0, %s28
    %s17 = sphi 0, %s24
    %s18 = sphi 0, %s16
    %s19 = sphi 0, %s17
    %s20 = sphi 0, %s18
    %s21 = sphi 0, %s19
    %s33 = sphi 0, %s35
    %s36 = sphi 0, %s33
    %s37 = sphi 0, %s36
    %s53 = sphi 0, %s37
    %s57 = sphi 0, %s57
    %s59 = sphi 0, %s57
    %s60 = sphi 0, %s59
    %s74 = sphi 0, %s60
    %s78 = sphi 0, %s78
    %s80 = sphi 0, %s78
    %s81 = sphi 0, %s80
    %s95 = sphi 0, %s81
    %s103 = sphi 0, %s105
    %s106 = sphi 0, %s103
    %s107 = sphi 0, %s106
    %s123 = sphi 0, %s107
  $region4: #{conv_block_forward.3} parent=0 // loop_header_branch
    %12 = sbr.rel (%p10) target = $region8
  $region5: #{conv_block_forward.3} parent=0 // loop_body
    %s14 = ssub.s32 %s9, 1
    %s15 = ssub.s32 %s9, 2
    %s22 = sadd.s32 1, %s17
    %p23 = scmp.ge.s32.totalorder %s22, 1
    %s24 = scalar_select %p23, 0, %s22
    %s25 = sadd.s32 1, %s16
    %s26 = scalar_select %p23, %s25, %s16
    %p27 = scmp.ge.s32.totalorder %s26, 2
    %s28 = scalar_select %p27, 0, %s26
    %s29 = ssub.s32 %s16, %s28
    %s30 = ssub.s32 %s17, %s24
    %s31 = sor.u32 %s29, %s30
    %p32 = scmp.eq.s32.totalorder %s31, 0
    %s34 = sadd.s32 %s33, 1
    %s35 = scalar_select %p32, %s33, %s34
    %p38 = pneg %p32
    %p39 = scmp.eq.s32.totalorder %s9, 1
    %p40 = por %p38, %p39
    %p41 = scmp.ne.s32.totalorder %s33, %s36
    %p42 = scmp.eq.s32.totalorder %s9, 0
    %p43 = por %p41, %p42
    %p44 = scmp.ne.s32.totalorder %s33, %s36
    %p45 = scmp.eq.s32.totalorder %s14, 1
    %p46 = por %p44, %p45
    %p47 = scmp.ne.s32.totalorder %s36, %s37
    %p48 = scmp.eq.s32.totalorder %s14, 0
    %p49 = por %p47, %p48
    %p50 = scmp.ne.s32.totalorder %s36, %s37
    %p51 = scmp.eq.s32.totalorder %s15, 1
    %p52 = por %p50, %p51
    %p54 = scmp.ne.s32.totalorder %s37, %s53
    %p55 = scmp.eq.s32.totalorder %s15, 0
    %p56 = por %p54, %p55
    %s58 = sadd.s32 %s57, 1
    %p61 = scmp.eq.s32.totalorder %s9, 1
    %p62 = scmp.ne.s32.totalorder %s57, %s59
    %p63 = scmp.eq.s32.totalorder %s9, 0
    %p64 = por %p62, %p63
    %p65 = scmp.ne.s32.totalorder %s57, %s59
    %p66 = scmp.eq.s32.totalorder %s14, 1
    %p67 = por %p65, %p66
    %p68 = scmp.ne.s32.totalorder %s59, %s60
    %p69 = scmp.eq.s32.totalorder %s14, 0
    %p70 = por %p68, %p69
    %p71 = scmp.ne.s32.totalorder %s59, %s60
    %p72 = scmp.eq.s32.totalorder %s15, 1
    %p73 = por %p71, %p72
    %p75 = scmp.ne.s32.totalorder %s60, %s74
    %p76 = scmp.eq.s32.totalorder %s15, 0
    %p77 = por %p75, %p76
    %s79 = sadd.s32 %s78, 1
    %p82 = scmp.eq.s32.totalorder %s9, 1
    %p83 = scmp.ne.s32.totalorder %s78, %s80
    %p84 = scmp.eq.s32.totalorder %s9, 0
    %p85 = por %p83, %p84
    %p86 = scmp.ne.s32.totalorder %s78, %s80
    %p87 = scmp.eq.s32.totalorder %s14, 1
    %p88 = por %p86, %p87
    %p89 = scmp.ne.s32.totalorder %s80, %s81
    %p90 = scmp.eq.s32.totalorder %s14, 0
    %p91 = por %p89, %p90
    %p92 = scmp.ne.s32.totalorder %s80, %s81
    %p93 = scmp.eq.s32.totalorder %s15, 1
    %p94 = por %p92, %p93
    %p96 = scmp.ne.s32.totalorder %s81, %s95
    %p97 = scmp.eq.s32.totalorder %s15, 0
    %p98 = por %p96, %p97
    %s99 = ssub.s32 %s16, %s28
    %s100 = ssub.s32 %s17, %s24
    %s101 = sor.u32 %s99, %s100
    %p102 = scmp.eq.s32.totalorder %s101, 0
    %s104 = sadd.s32 %s103, 1
    %s105 = scalar_select %p102, %s103, %s104
    %p108 = pneg %p102
    %p109 = scmp.eq.s32.totalorder %s9, 1
    %p110 = por %p108, %p109
    %p111 = scmp.ne.s32.totalorder %s103, %s106
    %p112 = scmp.eq.s32.totalorder %s9, 0
    %p113 = por %p111, %p112
    %p114 = scmp.ne.s32.totalorder %s103, %s106
    %p115 = scmp.eq.s32.totalorder %s14, 1
    %p116 = por %p114, %p115
    %p117 = scmp.ne.s32.totalorder %s106, %s107
    %p118 = scmp.eq.s32.totalorder %s14, 0
    %p119 = por %p117, %p118
    %p120 = scmp.ne.s32.totalorder %s106, %s107
    %p121 = scmp.eq.s32.totalorder %s15, 1
    %p122 = por %p120, %p121
    %p124 = scmp.ne.s32.totalorder %s107, %s123
    %p125 = scmp.eq.s32.totalorder %s15, 0
    %p126 = por %p124, %p125
    %p127 = scmp.le.s32.totalorder 1, %s9
    %p128 = scmp.lt.s32.totalorder %s9, 3
    %p129 = pnand %p127, %p128
    %p130 = pneg %p129
    // Predicated region
    $region9: #{conv_block_forward.3} parent=5 // pred_check
      _
    $region10: #{conv_block_forward.3} parent=5 // pred_check_branch
      %132 = sbr.rel (%p129) target = $region12
    $region11: #{conv_block_forward.3} parent=5 // pred_region
      %s133 = ssub.s32 %s9, 1
      // Predicated region
      $region13: #{conv_block_forward.3} parent=11 // pred_check
        %p134 = pneg %p70
      $region14: #{conv_block_forward.3} parent=11 // pred_check_branch
        %136 = sbr.rel (%p134) target = $region16
      $region15: #{conv_block_forward.3} parent=11 // pred_region
        _
      $region16: #{conv_block_forward.3} parent=11 // pred_fallthru
        _
      // Predicated region
      $region17: #{conv_block_forward.3} parent=11 // pred_check
        %p137 = pneg %p91
      $region18: #{conv_block_forward.3} parent=11 // pred_check_branch
        %139 = sbr.rel (%p137) target = $region20
      $region19: #{conv_block_forward.3} parent=11 // pred_region
        _
      $region20: #{conv_block_forward.3} parent=11 // pred_fallthru
        _
    $region12: #{conv_block_forward.3} parent=5 // pred_fallthru
      _
    %p140 = scmp.lt.s32.totalorder %s9, 2
    // Predicated region
    $region21: #{conv_block_forward.3} parent=5 // pred_check
      %p141 = pneg %p140
    $region22: #{conv_block_forward.3} parent=5 // pred_check_branch
      %143 = sbr.rel (%p141) target = $region24
    $region23: #{conv_block_forward.3} parent=5 // pred_region
      // Predicated region
      $region25: #{conv_block_forward.3} parent=23 // pred_check
        %p144 = pneg %p43
      $region26: #{conv_block_forward.3} parent=23 // pred_check_branch
        %146 = sbr.rel (%p144) target = $region28
      $region27: #{conv_block_forward.3} parent=23 // pred_region
        %s147 = smul.u32 32, %s17
        %p148 = scmp.lt.s32.totalorder %s16, 1
        %s149 = scalar_select %p148, %s16, 1
        %p150 = scmp.lt.s32.totalorder %s147, 31
        %s151 = scalar_select %p150, %s147, 31
        %s152 = smul.addr %s149, 32
        %s153 = sadd.s32 %s151, %s152
        %s154 = smul.addr %s153, 8
        %s155 = scalar_lea.vmem %s0, %s154
        %s156 = smul.u32 32, %s17
      $region28: #{conv_block_forward.3} parent=23 // pred_fallthru
        _
    $region24: #{conv_block_forward.3} parent=5 // pred_fallthru
      _
    %p157 = scmp.le.s32.totalorder 1, %s9
    %p158 = scmp.lt.s32.totalorder %s9, 3
    %p159 = pnand %p157, %p158
    %p160 = pneg %p159
    // Predicated region
    $region29: #{conv_block_forward.3} parent=5 // pred_check
      _
    $region30: #{conv_block_forward.3} parent=5 // pred_check_branch
      %162 = sbr.rel (%p159) target = $region32
    $region31: #{conv_block_forward.3} parent=5 // pred_region
      %s163 = ssub.s32 %s9, 1
      %s164 = smul.u32 32, %s19
      %p165 = scmp.lt.s32.totalorder %s18, 1
      %s166 = scalar_select %p165, %s18, 1
      %p167 = scmp.lt.s32.totalorder %s164, 31
      %s168 = scalar_select %p167, %s164, 31
      %s169 = smul.addr %s166, 32
      %s170 = sadd.s32 %s168, %s169
      %s171 = smul.addr %s170, 8
      %s172 = scalar_lea.vmem %s0, %s171
      %p173 = pneg %p49
      %p174 = pneg %p46
      %p175 = pneg %p70
      %p176 = pneg %p67
      %p177 = pneg %p91
      %p178 = pneg %p88
      %p179 = pneg %p119
      %p180 = pneg %p116
      %s181 = smul.u32 32, %s19
      %p182 = scmp.lt.s32.totalorder %s18, 1
      %s183 = scalar_select %p182, %s18, 1
      %p184 = scmp.lt.s32.totalorder %s181, 31
      %s185 = scalar_select %p184, %s181, 31
      %s186 = smul.addr %s183, 32
      %s187 = sadd.s32 %s185, %s186
      %s188 = smul.addr %s187, 8
      %s189 = scalar_lea.vmem %s3, %s188
      %s190 = smul.u32 32, %s19
      %p191 = scmp.lt.s32.totalorder %s18, 1
      %s192 = scalar_select %p191, %s18, 1
      %p193 = scmp.lt.s32.totalorder %s190, 31
      %s194 = scalar_select %p193, %s190, 31
      %s195 = smul.addr %s192, 32
      %s196 = sadd.s32 %s194, %s195
      %s197 = smul.addr %s196, 8
      %s198 = scalar_lea.vmem %s0, %s197
      %s199 = smul.u32 32, %s19
      %s200 = smul.u32 32, %s19
      %p201 = scmp.lt.s32.totalorder %s18, 1
      %s202 = scalar_select %p201, %s18, 1
      %p203 = scmp.lt.s32.totalorder %s200, 31
      %s204 = scalar_select %p203, %s200, 31
      %s205 = smul.addr %s202, 32
      %s206 = sadd.s32 %s204, %s205
      %s207 = smul.addr %s206, 8
      %s208 = scalar_lea.vmem %s3, %s207
      %s209 = smul.u32 32, %s19
      %v210 = vld [vmem:[%s198] sm:$0xff]
      %v211 = vld [vmem:[%s198 + $0x8] sm:$0xff]
      %v212 = vld [vmem:[%s198 + $0x10] sm:$0xff]
      %v213 = vld [vmem:[%s198 + $0x18] sm:$0xff]
      %v214 = vld [vmem:[%s198 + $0x20] sm:$0xff]
      %v215 = vld [vmem:[%s198 + $0x28] sm:$0xff]
      %v216 = vld [vmem:[%s198 + $0x30] sm:$0xff]
      %v217 = vld [vmem:[%s198 + $0x38] sm:$0xff]
      %v218 = vld [vmem:[%s198 + $0x40] sm:$0xff]
      %v219 = vld [vmem:[%s198 + $0x48] sm:$0xff]
      %v220 = vld [vmem:[%s198 + $0x50] sm:$0xff]
      %v221 = vld [vmem:[%s198 + $0x58] sm:$0xff]
      %v222 = vld [vmem:[%s198 + $0x60] sm:$0xff]
      %v223 = vld [vmem:[%s198 + $0x68] sm:$0xff]
      %v224 = vld [vmem:[%s198 + $0x70] sm:$0xff]
      %v225 = vld [vmem:[%s198 + $0x78] sm:$0xff]
      %v226 = vld [vmem:[%s198 + $0x80] sm:$0xff]
      %v227 = vld [vmem:[%s198 + $0x88] sm:$0xff]
      %v228 = vld [vmem:[%s198 + $0x90] sm:$0xff]
      %v229 = vld [vmem:[%s198 + $0x98] sm:$0xff]
      %v230 = vld [vmem:[%s198 + $0xa0] sm:$0xff]
      %v231 = vld [vmem:[%s198 + $0xa8] sm:$0xff]
      %v232 = vld [vmem:[%s198 + $0xb0] sm:$0xff]
      %v233 = vld [vmem:[%s198 + $0xb8] sm:$0xff]
      %v234 = vld [vmem:[%s198 + $0xc0] sm:$0xff]
      %v235 = vld [vmem:[%s198 + $0xc8] sm:$0xff]
      %v236 = vld [vmem:[%s198 + $0xd0] sm:$0xff]
      %v237 = vld [vmem:[%s198 + $0xd8] sm:$0xff]
      %v238 = vld [vmem:[%s198 + $0xe0] sm:$0xff]
      %v239 = vld [vmem:[%s198 + $0xe8] sm:$0xff]
      %v240 = vld [vmem:[%s198 + $0xf0] sm:$0xff]
      %v241 = vld [vmem:[%s198 + $0xf8] sm:$0xff]
      %v242 = vld [vmem:[%s1] sm:$0xff]
      %244 = vset.pattern.permute.xlu0 0
      %245 = vperm.xlu0 %244, %v242
      %v246 = vpop.permute.xlu0 %245
      %v248 = vmul.f32 %v210, %v246
      %v249 = vmul.f32 %v211, %v246
      %v250 = vmul.f32 %v212, %v246
      %v251 = vmul.f32 %v213, %v246
      %v252 = vmul.f32 %v214, %v246
      %v253 = vmul.f32 %v215, %v246
      %v254 = vmul.f32 %v216, %v246
      %v255 = vmul.f32 %v217, %v246
      %v256 = vmul.f32 %v218, %v246
      %v257 = vmul.f32 %v219, %v246
      %v258 = vmul.f32 %v220, %v246
      %v259 = vmul.f32 %v221, %v246
      %v260 = vmul.f32 %v222, %v246
      %v261 = vmul.f32 %v223, %v246
      %v262 = vmul.f32 %v224, %v246
      %v263 = vmul.f32 %v225, %v246
      %v264 = vmul.f32 %v226, %v246
      %v265 = vmul.f32 %v227, %v246
      %v266 = vmul.f32 %v228, %v246
      %v267 = vmul.f32 %v229, %v246
      %v268 = vmul.f32 %v230, %v246
      %v269 = vmul.f32 %v231, %v246
      %v270 = vmul.f32 %v232, %v246
      %v271 = vmul.f32 %v233, %v246
      %v272 = vmul.f32 %v234, %v246
      %v273 = vmul.f32 %v235, %v246
      %v274 = vmul.f32 %v236, %v246
      %v275 = vmul.f32 %v237, %v246
      %v276 = vmul.f32 %v238, %v246
      %v277 = vmul.f32 %v239, %v246
      %v278 = vmul.f32 %v240, %v246
      %v279 = vmul.f32 %v241, %v246
      %v280 = vld [vmem:[%s2] sm:$0xff]
      %282 = vset.pattern.permute.xlu0 0
      %283 = vperm.xlu0 %282, %v280
      %v284 = vpop.permute.xlu0 %283
      %v286 = vadd.f32 %v248, %v284
      %v287 = vadd.f32 %v249, %v284
      %v288 = vadd.f32 %v250, %v284
      %v289 = vadd.f32 %v251, %v284
      %v290 = vadd.f32 %v252, %v284
      %v291 = vadd.f32 %v253, %v284
      %v292 = vadd.f32 %v254, %v284
      %v293 = vadd.f32 %v255, %v284
      %v294 = vadd.f32 %v256, %v284
      %v295 = vadd.f32 %v257, %v284
      %v296 = vadd.f32 %v258, %v284
      %v297 = vadd.f32 %v259, %v284
      %v298 = vadd.f32 %v260, %v284
      %v299 = vadd.f32 %v261, %v284
      %v300 = vadd.f32 %v262, %v284
      %v301 = vadd.f32 %v263, %v284
      %v302 = vadd.f32 %v264, %v284
      %v303 = vadd.f32 %v265, %v284
      %v304 = vadd.f32 %v266, %v284
      %v305 = vadd.f32 %v267, %v284
      %v306 = vadd.f32 %v268, %v284
      %v307 = vadd.f32 %v269, %v284
      %v308 = vadd.f32 %v270, %v284
      %v309 = vadd.f32 %v271, %v284
      %v310 = vadd.f32 %v272, %v284
      %v311 = vadd.f32 %v273, %v284
      %v312 = vadd.f32 %v274, %v284
      %v313 = vadd.f32 %v275, %v284
      %v314 = vadd.f32 %v276, %v284
      %v315 = vadd.f32 %v277, %v284
      %v316 = vadd.f32 %v278, %v284
      %v317 = vadd.f32 %v279, %v284
      %vm318 = vcmp.ge.f32.partialorder %v286, 0.0
      %vm319 = vcmp.ge.f32.partialorder %v287, 0.0
      %vm320 = vcmp.ge.f32.partialorder %v288, 0.0
      %vm321 = vcmp.ge.f32.partialorder %v289, 0.0
      %vm322 = vcmp.ge.f32.partialorder %v290, 0.0
      %vm323 = vcmp.ge.f32.partialorder %v291, 0.0
      %vm324 = vcmp.ge.f32.partialorder %v292, 0.0
      %vm325 = vcmp.ge.f32.partialorder %v293, 0.0
      %vm326 = vcmp.ge.f32.partialorder %v294, 0.0
      %vm327 = vcmp.ge.f32.partialorder %v295, 0.0
      %vm328 = vcmp.ge.f32.partialorder %v296, 0.0
      %vm329 = vcmp.ge.f32.partialorder %v297, 0.0
      %vm330 = vcmp.ge.f32.partialorder %v298, 0.0
      %vm331 = vcmp.ge.f32.partialorder %v299, 0.0
      %vm332 = vcmp.ge.f32.partialorder %v300, 0.0
      %vm333 = vcmp.ge.f32.partialorder %v301, 0.0
      %vm334 = vcmp.ge.f32.partialorder %v302, 0.0
      %vm335 = vcmp.ge.f32.partialorder %v303, 0.0
      %vm336 = vcmp.ge.f32.partialorder %v304, 0.0
      %vm337 = vcmp.ge.f32.partialorder %v305, 0.0
      %vm338 = vcmp.ge.f32.partialorder %v306, 0.0
      %vm339 = vcmp.ge.f32.partialorder %v307, 0.0
      %vm340 = vcmp.ge.f32.partialorder %v308, 0.0
      %vm341 = vcmp.ge.f32.partialorder %v309, 0.0
      %vm342 = vcmp.ge.f32.partialorder %v310, 0.0
      %vm343 = vcmp.ge.f32.partialorder %v311, 0.0
      %vm344 = vcmp.ge.f32.partialorder %v312, 0.0
      %vm345 = vcmp.ge.f32.partialorder %v313, 0.0
      %vm346 = vcmp.ge.f32.partialorder %v314, 0.0
      %vm347 = vcmp.ge.f32.partialorder %v315, 0.0
      %vm348 = vcmp.ge.f32.partialorder %v316, 0.0
      %vm349 = vcmp.ge.f32.partialorder %v317, 0.0
      %v350 = vmul.f32 %v286, 0.2
      %v351 = vmul.f32 %v287, 0.2
      %v352 = vmul.f32 %v288, 0.2
      %v353 = vmul.f32 %v289, 0.2
      %v354 = vmul.f32 %v290, 0.2
      %v355 = vmul.f32 %v291, 0.2
      %v356 = vmul.f32 %v292, 0.2
      %v357 = vmul.f32 %v293, 0.2
      %v358 = vmul.f32 %v294, 0.2
      %v359 = vmul.f32 %v295, 0.2
      %v360 = vmul.f32 %v296, 0.2
      %v361 = vmul.f32 %v297, 0.2
      %v362 = vmul.f32 %v298, 0.2
      %v363 = vmul.f32 %v299, 0.2
      %v364 = vmul.f32 %v300, 0.2
      %v365 = vmul.f32 %v301, 0.2
      %v366 = vmul.f32 %v302, 0.2
      %v367 = vmul.f32 %v303, 0.2
      %v368 = vmul.f32 %v304, 0.2
      %v369 = vmul.f32 %v305, 0.2
      %v370 = vmul.f32 %v306, 0.2
      %v371 = vmul.f32 %v307, 0.2
      %v372 = vmul.f32 %v308, 0.2
      %v373 = vmul.f32 %v309, 0.2
      %v374 = vmul.f32 %v310, 0.2
      %v375 = vmul.f32 %v311, 0.2
      %v376 = vmul.f32 %v312, 0.2
      %v377 = vmul.f32 %v313, 0.2
      %v378 = vmul.f32 %v314, 0.2
      %v379 = vmul.f32 %v315, 0.2
      %v380 = vmul.f32 %v316, 0.2
      %v381 = vmul.f32 %v317, 0.2
      %v382 = vsel %vm318, %v286, %v350
      %v383 = vsel %vm319, %v287, %v351
      %v384 = vsel %vm320, %v288, %v352
      %v385 = vsel %vm321, %v289, %v353
      %v386 = vsel %vm322, %v290, %v354
      %v387 = vsel %vm323, %v291, %v355
      %v388 = vsel %vm324, %v292, %v356
      %v389 = vsel %vm325, %v293, %v357
      %v390 = vsel %vm326, %v294, %v358
      %v391 = vsel %vm327, %v295, %v359
      %v392 = vsel %vm328, %v296, %v360
      %v393 = vsel %vm329, %v297, %v361
      %v394 = vsel %vm330, %v298, %v362
      %v395 = vsel %vm331, %v299, %v363
      %v396 = vsel %vm332, %v300, %v364
      %v397 = vsel %vm333, %v301, %v365
      %v398 = vsel %vm334, %v302, %v366
      %v399 = vsel %vm335, %v303, %v367
      %v400 = vsel %vm336, %v304, %v368
      %v401 = vsel %vm337, %v305, %v369
      %v402 = vsel %vm338, %v306, %v370
      %v403 = vsel %vm339, %v307, %v371
      %v404 = vsel %vm340, %v308, %v372
      %v405 = vsel %vm341, %v309, %v373
      %v406 = vsel %vm342, %v310, %v374
      %v407 = vsel %vm343, %v311, %v375
      %v408 = vsel %vm344, %v312, %v376
      %v409 = vsel %vm345, %v313, %v377
      %v410 = vsel %vm346, %v314, %v378
      %v411 = vsel %vm347, %v315, %v379
      %v412 = vsel %vm348, %v316, %v380
      %v413 = vsel %vm349, %v317, %v381
      %414 = vst [vmem:[%s208] sm:$0xff] %v382
      %415 = vst [vmem:[%s208 + $0x8] sm:$0xff] %v383
      %416 = vst [vmem:[%s208 + $0x10] sm:$0xff] %v384
      %417 = vst [vmem:[%s208 + $0x18] sm:$0xff] %v385
      %418 = vst [vmem:[%s208 + $0x20] sm:$0xff] %v386
      %419 = vst [vmem:[%s208 + $0x28] sm:$0xff] %v387
      %420 = vst [vmem:[%s208 + $0x30] sm:$0xff] %v388
      %421 = vst [vmem:[%s208 + $0x38] sm:$0xff] %v389
      %422 = vst [vmem:[%s208 + $0x40] sm:$0xff] %v390
      %423 = vst [vmem:[%s208 + $0x48] sm:$0xff] %v391
      %424 = vst [vmem:[%s208 + $0x50] sm:$0xff] %v392
      %425 = vst [vmem:[%s208 + $0x58] sm:$0xff] %v393
      %426 = vst [vmem:[%s208 + $0x60] sm:$0xff] %v394
      %427 = vst [vmem:[%s208 + $0x68] sm:$0xff] %v395
      %428 = vst [vmem:[%s208 + $0x70] sm:$0xff] %v396
      %429 = vst [vmem:[%s208 + $0x78] sm:$0xff] %v397
      %430 = vst [vmem:[%s208 + $0x80] sm:$0xff] %v398
      %431 = vst [vmem:[%s208 + $0x88] sm:$0xff] %v399
      %432 = vst [vmem:[%s208 + $0x90] sm:$0xff] %v400
      %433 = vst [vmem:[%s208 + $0x98] sm:$0xff] %v401
      %434 = vst [vmem:[%s208 + $0xa0] sm:$0xff] %v402
      %435 = vst [vmem:[%s208 + $0xa8] sm:$0xff] %v403
      %436 = vst [vmem:[%s208 + $0xb0] sm:$0xff] %v404
      %437 = vst [vmem:[%s208 + $0xb8] sm:$0xff] %v405
      %438 = vst [vmem:[%s208 + $0xc0] sm:$0xff] %v406
      %439 = vst [vmem:[%s208 + $0xc8] sm:$0xff] %v407
      %440 = vst [vmem:[%s208 + $0xd0] sm:$0xff] %v408
      %441 = vst [vmem:[%s208 + $0xd8] sm:$0xff] %v409
      %442 = vst [vmem:[%s208 + $0xe0] sm:$0xff] %v410
      %443 = vst [vmem:[%s208 + $0xe8] sm:$0xff] %v411
      %444 = vst [vmem:[%s208 + $0xf0] sm:$0xff] %v412
      %445 = vst [vmem:[%s208 + $0xf8] sm:$0xff] %v413
      %s446 = smul.u32 32, %s19
      %p447 = scmp.lt.s32.totalorder %s18, 1
      %s448 = scalar_select %p447, %s18, 1
      %p449 = scmp.lt.s32.totalorder %s446, 31
      %s450 = scalar_select %p449, %s446, 31
      %s451 = smul.addr %s448, 32
      %s452 = sadd.s32 %s450, %s451
      %s453 = smul.addr %s452, 8
      %s454 = scalar_lea.vmem %s3, %s453
      // Predicated region
      $region33: #{conv_block_forward.3} parent=31 // pred_check
        %p455 = pneg %p116
      $region34: #{conv_block_forward.3} parent=31 // pred_check_branch
        %457 = sbr.rel (%p455) target = $region36
      $region35: #{conv_block_forward.3} parent=31 // pred_region
        %s458 = smul.u32 32, %s19
      $region36: #{conv_block_forward.3} parent=31 // pred_fallthru
        _
    $region32: #{conv_block_forward.3} parent=5 // pred_fallthru
      _
    %p459 = scmp.le.s32.totalorder 2, %s9
    // Predicated region
    $region37: #{conv_block_forward.3} parent=5 // pred_check
      %p460 = pneg %p459
    $region38: #{conv_block_forward.3} parent=5 // pred_check_branch
      %462 = sbr.rel (%p460) target = $region40
    $region39: #{conv_block_forward.3} parent=5 // pred_region
      %s463 = ssub.s32 %s9, 2
      // Predicated region
      $region41: #{conv_block_forward.3} parent=39 // pred_check
        %p464 = pneg %p122
      $region42: #{conv_block_forward.3} parent=39 // pred_check_branch
        %466 = sbr.rel (%p464) target = $region44
      $region43: #{conv_block_forward.3} parent=39 // pred_region
        %s467 = smul.u32 32, %s21
        %p468 = scmp.lt.s32.totalorder %s20, 1
        %s469 = scalar_select %p468, %s20, 1
        %p470 = scmp.lt.s32.totalorder %s467, 31
        %s471 = scalar_select %p470, %s467, 31
        %s472 = smul.addr %s469, 32
        %s473 = sadd.s32 %s471, %s472
        %s474 = smul.addr %s473, 8
        %s475 = scalar_lea.vmem %s3, %s474
      $region44: #{conv_block_forward.3} parent=39 // pred_fallthru
        _
    $region40: #{conv_block_forward.3} parent=5 // pred_fallthru
      _
  $region6: #{conv_block_forward.3} parent=0 // loop_footer
    %s13 = sadd.s32 1, %s9
  $region7: #{conv_block_forward.3} parent=0 // loop_footer_branch
    %8 = sbr.rel target = $region3
  $region8: #{conv_block_forward.3} parent=0 // loop_exit
    _

// kernel: conv_block_forward.2
$region0: #{conv_block_forward.2}
  #allocation0 [shape = 'u32[]', space=smem, size = 0x4, offset = 0x4, fixed_abs, tag = 'smem constant byte address 0x4 - core index']
  #allocation1 [shape = 'u32[144,128]{1,0:T(1,128)}', space=vmem, size = 0x12000, scoped, tag = 'internal scratch']
  #allocation2 [shape = 'f32[108,1024]{1,0:T(8,128)}', space=vmem, size = 0x70000, scoped, tag = 'scratch operand']
  %s0 = inlined_call_operand.vmem [shape: f32[2,18,4,290], index: 0, kind: input, shape index: {}]
  %s1 = inlined_call_operand.vmem [shape: f32[8,108], index: 1, kind: input, shape index: {}]
  %s2 = inlined_call_operand.vmem [shape: f32[2,8,4096], index: 2, kind: output, shape index: {0}]
  %s3 = inlined_call_operand.vmem [shape: f32[2,8,1], index: 3, kind: output, shape index: {1}]
  %s4 = inlined_call_operand.vmem [shape: f32[2,8,1], index: 4, kind: output, shape index: {2}]
  %5 = xla_tuple %s2, %s3, %s4
  %s6 = sld [smem:[#allocation0]]
  $region61: #{conv_block_forward.2} parent=0
    _
  %s8 = ssub.s32 1, %s6
  %s9 = scalar_select 0, %s8, %s6
  loop: start=0, step=1, limit=10
  $region2: #{conv_block_forward.2} parent=0 // loop_pre_header
    _
  $region3: #{conv_block_forward.2} parent=0 // loop_header
    %s11 = sphi 0, %s15
    %p12 = scmp.ge.s32.totalorder %s11, 10
    %s18 = sphi 0, %s30
    %s19 = sphi 0, %s26
    %s20 = sphi 0, %s18
    %s21 = sphi 0, %s19
    %s22 = sphi 0, %s20
    %s23 = sphi 0, %s21
    %s33 = sphi 0, %s35
    %s36 = sphi 0, %s33
    %s37 = sphi 0, %s36
    %s53 = sphi 0, %s37
    %s57 = sphi 0, %s57
    %s59 = sphi 0, %s57
    %s60 = sphi 0, %s59
    %s74 = sphi 0, %s60
    %s82 = sphi 0, %s84
    %s85 = sphi 0, %s82
    %s86 = sphi 0, %s85
    %s102 = sphi 0, %s86
    %s108 = sphi 0, %s110
    %s111 = sphi 0, %s108
    %s112 = sphi 0, %s111
    %s128 = sphi 0, %s112
    %s134 = sphi 0, %s136
    %s137 = sphi 0, %s134
    %s138 = sphi 0, %s137
    %s154 = sphi 0, %s138
  $region4: #{conv_block_forward.2} parent=0 // loop_header_branch
    %14 = sbr.rel (%p12) target = $region8
  $region5: #{conv_block_forward.2} parent=0 // loop_body
    %s16 = ssub.s32 %s11, 1
    %s17 = ssub.s32 %s11, 2
    %s24 = sadd.s32 1, %s19
    %p25 = scmp.ge.s32.totalorder %s24, 4
    %s26 = scalar_select %p25, 0, %s24
    %s27 = sadd.s32 1, %s18
    %s28 = scalar_select %p25, %s27, %s18
    %p29 = scmp.ge.s32.totalorder %s28, 2
    %s30 = scalar_select %p29, 0, %s28
    %s31 = ssub.s32 %s18, %s30
    %p32 = scmp.eq.s32.totalorder %s31, 0
    %s34 = sadd.s32 %s33, 1
    %s35 = scalar_select %p32, %s33, %s34
    %p38 = pneg %p32
    %p39 = scmp.eq.s32.totalorder %s11, 7
    %p40 = por %p38, %p39
    %p41 = scmp.ne.s32.totalorder %s33, %s36
    %p42 = scmp.eq.s32.totalorder %s11, 0
    %p43 = por %p41, %p42
    %p44 = scmp.ne.s32.totalorder %s33, %s36
    %p45 = scmp.eq.s32.totalorder %s16, 7
    %p46 = por %p44, %p45
    %p47 = scmp.ne.s32.totalorder %s36, %s37
    %p48 = scmp.eq.s32.totalorder %s16, 0
    %p49 = por %p47, %p48
    %p50 = scmp.ne.s32.totalorder %s36, %s37
    %p51 = scmp.eq.s32.totalorder %s17, 7
    %p52 = por %p50, %p51
    %p54 = scmp.ne.s32.totalorder %s37, %s53
    %p55 = scmp.eq.s32.totalorder %s17, 0
    %p56 = por %p54, %p55
    %s58 = sadd.s32 %s57, 1
    %p61 = scmp.eq.s32.totalorder %s11, 7
    %p62 = scmp.ne.s32.totalorder %s57, %s59
    %p63 = scmp.eq.s32.totalorder %s11, 0
    %p64 = por %p62, %p63
    %p65 = scmp.ne.s32.totalorder %s57, %s59
    %p66 = scmp.eq.s32.totalorder %s16, 7
    %p67 = por %p65, %p66
    %p68 = scmp.ne.s32.totalorder %s59, %s60
    %p69 = scmp.eq.s32.totalorder %s16, 0
    %p70 = por %p68, %p69
    %p71 = scmp.ne.s32.totalorder %s59, %s60
    %p72 = scmp.eq.s32.totalorder %s17, 7
    %p73 = por %p71, %p72
    %p75 = scmp.ne.s32.totalorder %s60, %s74
    %p76 = scmp.eq.s32.totalorder %s17, 0
    %p77 = por %p75, %p76
    %s78 = ssub.s32 %s18, %s30
    %s79 = ssub.s32 %s19, %s26
    %s80 = sor.u32 %s78, %s79
    %p81 = scmp.eq.s32.totalorder %s80, 0
    %s83 = sadd.s32 %s82, 1
    %s84 = scalar_select %p81, %s82, %s83
    %p87 = pneg %p81
    %p88 = scmp.eq.s32.totalorder %s11, 7
    %p89 = por %p87, %p88
    %p90 = scmp.ne.s32.totalorder %s82, %s85
    %p91 = scmp.eq.s32.totalorder %s11, 0
    %p92 = por %p90, %p91
    %p93 = scmp.ne.s32.totalorder %s82, %s85
    %p94 = scmp.eq.s32.totalorder %s16, 7
    %p95 = por %p93, %p94
    %p96 = scmp.ne.s32.totalorder %s85, %s86
    %p97 = scmp.eq.s32.totalorder %s16, 0
    %p98 = por %p96, %p97
    %p99 = scmp.ne.s32.totalorder %s85, %s86
    %p100 = scmp.eq.s32.totalorder %s17, 7
    %p101 = por %p99, %p100
    %p103 = scmp.ne.s32.totalorder %s86, %s102
    %p104 = scmp.eq.s32.totalorder %s17, 0
    %p105 = por %p103, %p104
    %s106 = ssub.s32 %s18, %s30
    %p107 = scmp.eq.s32.totalorder %s106, 0
    %s109 = sadd.s32 %s108, 1
    %s110 = scalar_select %p107, %s108, %s109
    %p113 = pneg %p107
    %p114 = scmp.eq.s32.totalorder %s11, 7
    %p115 = por %p113, %p114
    %p116 = scmp.ne.s32.totalorder %s108, %s111
    %p117 = scmp.eq.s32.totalorder %s11, 0
    %p118 = por %p116, %p117
    %p119 = scmp.ne.s32.totalorder %s108, %s111
    %p120 = scmp.eq.s32.totalorder %s16, 7
    %p121 = por %p119, %p120
    %p122 = scmp.ne.s32.totalorder %s111, %s112
    %p123 = scmp.eq.s32.totalorder %s16, 0
    %p124 = por %p122, %p123
    %p125 = scmp.ne.s32.totalorder %s111, %s112
    %p126 = scmp.eq.s32.totalorder %s17, 7
    %p127 = por %p125, %p126
    %p129 = scmp.ne.s32.totalorder %s112, %s128
    %p130 = scmp.eq.s32.totalorder %s17, 0
    %p131 = por %p129, %p130
    %s132 = ssub.s32 %s18, %s30
    %p133 = scmp.eq.s32.totalorder %s132, 0
    %s135 = sadd.s32 %s134, 1
    %s136 = scalar_select %p133, %s134, %s135
    %p139 = pneg %p133
    %p140 = scmp.eq.s32.totalorder %s11, 7
    %p141 = por %p139, %p140
    %p142 = scmp.ne.s32.totalorder %s134, %s137
    %p143 = scmp.eq.s32.totalorder %s11, 0
    %p144 = por %p142, %p143
    %p145 = scmp.ne.s32.totalorder %s134, %s137
    %p146 = scmp.eq.s32.totalorder %s16, 7
    %p147 = por %p145, %p146
    %p148 = scmp.ne.s32.totalorder %s137, %s138
    %p149 = scmp.eq.s32.totalorder %s16, 0
    %p150 = por %p148, %p149
    %p151 = scmp.ne.s32.totalorder %s137, %s138
    %p152 = scmp.eq.s32.totalorder %s17, 7
    %p153 = por %p151, %p152
    %p155 = scmp.ne.s32.totalorder %s138, %s154
    %p156 = scmp.eq.s32.totalorder %s17, 0
    %p157 = por %p155, %p156
    %p158 = scmp.le.s32.totalorder 1, %s11
    %p159 = scmp.lt.s32.totalorder %s11, 9
    %p160 = pnand %p158, %p159
    %p161 = pneg %p160
    // Predicated region
    $region9: #{conv_block_forward.2} parent=5 // pred_check
      _
    $region10: #{conv_block_forward.2} parent=5 // pred_check_branch
      %163 = sbr.rel (%p160) target = $region12
    $region11: #{conv_block_forward.2} parent=5 // pred_region
      %s164 = ssub.s32 %s11, 1
      // Predicated region
      $region13: #{conv_block_forward.2} parent=11 // pred_check
        %p165 = pneg %p70
      $region14: #{conv_block_forward.2} parent=11 // pred_check_branch
        %167 = sbr.rel (%p165) target = $region16
      $region15: #{conv_block_forward.2} parent=11 // pred_region
        _
      $region16: #{conv_block_forward.2} parent=11 // pred_fallthru
        _
    $region12: #{conv_block_forward.2} parent=5 // pred_fallthru
      _
    %p168 = scmp.lt.s32.totalorder %s11, 8
    // Predicated region
    $region17: #{conv_block_forward.2} parent=5 // pred_check
      %p169 = pneg %p168
    $region18: #{conv_block_forward.2} parent=5 // pred_check_branch
      %171 = sbr.rel (%p169) target = $region20
    $region19: #{conv_block_forward.2} parent=5 // pred_region
      // Predicated region
      $region21: #{conv_block_forward.2} parent=19 // pred_check
        %p172 = pneg %p43
      $region22: #{conv_block_forward.2} parent=19 // pred_check_branch
        %174 = sbr.rel (%p172) target = $region24
      $region23: #{conv_block_forward.2} parent=19 // pred_region
        %p175 = scmp.lt.s32.totalorder %s18, 1
        %s176 = scalar_select %p175, %s18, 1
        %s177 = smul.addr %s176, 54
        %s178 = smul.addr %s177, 4
        %s179 = scalar_lea.vmem %s0, %s178
      $region24: #{conv_block_forward.2} parent=19 // pred_fallthru
        _
    $region20: #{conv_block_forward.2} parent=5 // pred_fallthru
      _
    %p180 = scmp.le.s32.totalorder 1, %s11
    %p181 = scmp.lt.s32.totalorder %s11, 9
    %p182 = pnand %p180, %p181
    %p183 = pneg %p182
    // Predicated region
    $region25: #{conv_block_forward.2} parent=5 // pred_check
      _
    $region26: #{conv_block_forward.2} parent=5 // pred_check_branch
      %185 = sbr.rel (%p182) target = $region28
    $region27: #{conv_block_forward.2} parent=5 // pred_region
      %s186 = ssub.s32 %s11, 1
      %p187 = scmp.lt.s32.totalorder %s20, 1
      %s188 = scalar_select %p187, %s20, 1
      %s189 = smul.addr %s188, 54
      %s190 = smul.addr %s189, 4
      %s191 = scalar_lea.vmem %s0, %s190
      %p192 = pneg %p49
      %p193 = pneg %p46
      %p194 = pneg %p70
      %p195 = pneg %p67
      %p196 = pneg %p98
      %p197 = pneg %p95
      %s198 = smul.u32 8, %s21
      %p199 = scmp.lt.s32.totalorder %s20, 1
      %s200 = scalar_select %p199, %s20, 1
      %p201 = scmp.lt.s32.totalorder %s198, 31
      %s202 = scalar_select %p201, %s198, 31
      %s203 = smul.addr %s200, 32
      %s204 = sadd.s32 %s202, %s203
      %s205 = smul.addr %s204, 8
      %s206 = scalar_lea.vmem %s2, %s205
      %p207 = pneg %p124
      %p208 = pneg %p121
      %p209 = scmp.lt.s32.totalorder %s20, 1
      %s210 = scalar_select %p209, %s20, 1
      %s211 = smul.addr %s210, 8
      %s212 = scalar_lea.vmem %s3, %s211
      %p213 = pneg %p150
      %p214 = pneg %p147
      %p215 = scmp.lt.s32.totalorder %s20, 1
      %s216 = scalar_select %p215, %s20, 1
      %s217 = smul.addr %s216, 8
      %s218 = scalar_lea.vmem %s4, %s217
      %p219 = scmp.lt.s32.totalorder %s20, 1
      %s220 = scalar_select %p219, %s20, 1
      %s221 = smul.addr %s220, 54
      %s222 = smul.addr %s221, 4
      %s223 = scalar_lea.vmem %s0, %s222
      %s224 = smul.u32 8, %s21
      %p225 = scmp.lt.s32.totalorder %s20, 1
      %s226 = scalar_select %p225, %s20, 1
      %p227 = scmp.lt.s32.totalorder %s224, 31
      %s228 = scalar_select %p227, %s224, 31
      %s229 = smul.addr %s226, 32
      %s230 = sadd.s32 %s228, %s229
      %s231 = smul.addr %s230, 8
      %s232 = scalar_lea.vmem %s2, %s231
      %s233 = smul.u32 8, %s21
      %p234 = scmp.lt.s32.totalorder %s20, 1
      %s235 = scalar_select %p234, %s20, 1
      %s236 = smul.addr %s235, 8
      %s237 = scalar_lea.vmem %s3, %s236
      %p238 = scmp.lt.s32.totalorder %s20, 1
      %s239 = scalar_select %p238, %s20, 1
      %s240 = smul.addr %s239, 8
      %s241 = scalar_lea.vmem %s4, %s240
      %s242 = smul.u32 %s21, 4
      %v243 = vlaneseq
      %v244 = vand.u32 %v243, 127
      %v245 = vadd.s32 %v244, 128
      %vm246 = vcmp.lt.s32.totalorder %v244, 0
      %v247 = vsub.s32 0, %v244
      %v248 = vsel %vm246, %v247, %v244
      %v249 = vshrl.u32 %v248, 4
      %v250 = vand.u32 %v248, 15
      %v251 = vsub.s32 0, %v250
      %v252 = vsel %vm246, %v251, %v250
      %vm253 = vcmp.lt.s32.totalorder %v245, 0
      %v254 = vsub.s32 0, %v245
      %v255 = vsel %vm253, %v254, %v245
      %v256 = vshrl.u32 %v255, 4
      %v257 = vand.u32 %v255, 15
      %v258 = vsub.s32 0, %v257
      %v259 = vsel %vm253, %v258, %v257
      %vm260 = vcmp.ne.s32.totalorder %v252, 0
      %vm261 = vcmp.ne.s32.totalorder %v259, 0
      %vm262 = vcmp.lt.s32.totalorder %v252, 0
      %vm263 = vcmp.lt.s32.totalorder %v259, 0
      %vm264 = vmand %vm262, %vm260
      %vm265 = vmand %vm263, %vm261
      %v266 = vadd.s32 %v252, 16
      %v267 = vadd.s32 %v259, 16
      %v268 = vsel %vm264, %v266, %v252
      %v269 = vsel %vm265, %v267, %v259
      %vm270 = vcmp.eq.s32.totalorder %v268, 0
      %vm271 = vcmp.eq.s32.totalorder %v269, 0
      %vm272 = vcmp.eq.s32.totalorder %v268, 15
      %vm273 = vcmp.eq.s32.totalorder %v269, 15
      %s274 = smul.u32 %s242, 3
      %s275 = smul.addr %s274, 4
      %s276 = scalar_lea.vmem %s223, %s275
      %v277 = vld [vmem:[%s276] sm:$0xff]
      %v278 = vld [vmem:[%s276 + $0x8] sm:$0xf]
      %v280 = vcombine.high %v277, %v277
      %v282 = vsel %vm270, 0.0, %v277
      %v283 = vsel %vm271, 0.0, %v280
      %285 = vrot.lane.b32.xlu0 %v277, 126
      %v286 = vpop.permute.xlu0 %285
      %287 = vrot.lane.b32.xlu0 %v280, 126
      %v288 = vpop.permute.xlu0 %287
      %289 = vrot.lane.b32.xlu0 %v278, 126
      %v290 = vpop.permute.xlu0 %289
      %vm291 = vcmask 1031168
      %v292 = vsel %vm291, %v286, %v288
      %v293 = vsel %vm291, %v288, %v290
      %v296 = vsel %vm272, 0.0, %v292
      %v297 = vsel %vm273, 0.0, %v293
      %298 = vst [vmem:[#allocation2] sm:$0xf] %v282
      %299 = vst [vmem:[#allocation2 + $0x8] sm:$0xf] %v283
      %v300 = vcombine.low %v277, %v277
      %v301 = vcombine.low %v278, %v278
      %302 = vrot.lane.b32.xlu0 %v300, 127
      %v303 = vpop.permute.xlu0 %302
      %304 = vrot.lane.b32.xlu0 %v277, 127
      %v305 = vpop.permute.xlu0 %304
      %306 = vrot.lane.b32.xlu0 %v301, 127
      %v307 = vpop.permute.xlu0 %306
      %vm308 = vcmask 1039360
      %v309 = vsel %vm308, %v303, %v305
      %v310 = vsel %vm308, %v305, %v307
      %313 = vst [vmem:[#allocation2] sm:$0xf0] %v309
      %314 = vst [vmem:[#allocation2 + $0x8] sm:$0xf0] %v310
      %315 = vst [vmem:[#allocation2 + $0x40] sm:$0xf] %v296
      %316 = vst [vmem:[#allocation2 + $0x48] sm:$0xf] %v297
      %v317 = vld [vmem:[%s276] sm:$0xff]
      %v318 = vld [vmem:[%s276 + $0x8] sm:$0xf]
      %v321 = vcombine.high %v317, %v317
      %322 = vrot.lane.b32.xlu0 %v317, 112
      %v323 = vpop.permute.xlu0 %322
      %324 = vrot.lane.b32.xlu0 %v321, 112
      %v325 = vpop.permute.xlu0 %324
      %326 = vrot.lane.b32.xlu0 %v318, 112
      %v327 = vpop.permute.xlu0 %326
      %vm328 = vcmask 916480
      %v329 = vsel %vm328, %v323, %v325
      %v330 = vsel %vm328, %v325, %v327
      %v333 = vsel %vm270, 0.0, %v329
      %v334 = vsel %vm271, 0.0, %v330
      %335 = vrot.lane.b32.xlu0 %v317, 110
      %v336 = vpop.permute.xlu0 %335
      %337 = vrot.lane.b32.xlu0 %v321, 110
      %v338 = vpop.permute.xlu0 %337
      %339 = vrot.lane.b32.xlu0 %v318, 110
      %v340 = vpop.permute.xlu0 %339
      %vm341 = vcmask 900096
      %v342 = vsel %vm341, %v336, %v338
      %v343 = vsel %vm341, %v338, %v340
      %v346 = vsel %vm272, 0.0, %v342
      %v347 = vsel %vm273, 0.0, %v343
      %v350 = vrot.slane %v333, 4
      %v351 = vrot.slane %v334, 4
      %354 = vst [vmem:[#allocation2 + $0x40] sm:$0xf0] %v350
      %355 = vst [vmem:[#allocation2 + $0x48] sm:$0xf0] %v351
      %356 = vrot.lane.b32.xlu0 %v317, 111
      %v357 = vpop.permute.xlu0 %356
      %358 = vrot.lane.b32.xlu0 %v321, 111
      %v359 = vpop.permute.xlu0 %358
      %360 = vrot.lane.b32.xlu0 %v318, 111
      %v361 = vpop.permute.xlu0 %360
      %vm362 = vcmask 908288
      %v363 = vsel %vm362, %v357, %v359
      %v364 = vsel %vm362, %v359, %v361
      %367 = vst [vmem:[#allocation2 + $0x80] sm:$0xf] %v363
      %368 = vst [vmem:[#allocation2 + $0x88] sm:$0xf] %v364
      %v371 = vrot.slane %v346, 4
      %v372 = vrot.slane %v347, 4
      %375 = vst [vmem:[#allocation2 + $0x80] sm:$0xf0] %v371
      %376 = vst [vmem:[#allocation2 + $0x88] sm:$0xf0] %v372
      %v377 = vld [vmem:[%s276] sm:$0xff]
      %v378 = vld [vmem:[%s276 + $0x8] sm:$0xf]
      %v381 = vcombine.high %v377, %v377
      %382 = vrot.lane.b32.xlu0 %v377, 96
      %v383 = vpop.permute.xlu0 %382
      %384 = vrot.lane.b32.xlu0 %v381, 96
      %v385 = vpop.permute.xlu0 %384
      %386 = vrot.lane.b32.xlu0 %v378, 96
      %v387 = vpop.permute.xlu0 %386
      %vm388 = vcmask 785408
      %v389 = vsel %vm388, %v383, %v385
      %v390 = vsel %vm388, %v385, %v387
      %v393 = vsel %vm270, 0.0, %v389
      %v394 = vsel %vm271, 0.0, %v390
      %395 = vrot.lane.b32.xlu0 %v377, 94
      %v396 = vpop.permute.xlu0 %395
      %397 = vrot.lane.b32.xlu0 %v381, 94
      %v398 = vpop.permute.xlu0 %397
      %399 = vrot.lane.b32.xlu0 %v378, 94
      %v400 = vpop.permute.xlu0 %399
      %vm401 = vcmask 769024
      %v402 = vsel %vm401, %v396, %v398
      %v403 = vsel %vm401, %v398, %v400
      %v406 = vsel %vm272, 0.0, %v402
      %v407 = vsel %vm273, 0.0, %v403
      %408 = vst [vmem:[#allocation2 + $0xc0] sm:$0xf] %v393
      %409 = vst [vmem:[#allocation2 + $0xc8] sm:$0xf] %v394
      %v410 = vcombine.low %v377, %v377
      %v411 = vcombine.low %v378, %v378
      %412 = vrot.lane.b32.xlu0 %v410, 95
      %v413 = vpop.permute.xlu0 %412
      %414 = vrot.lane.b32.xlu0 %v377, 95
      %v415 = vpop.permute.xlu0 %414
      %416 = vrot.lane.b32.xlu0 %v411, 95
      %v417 = vpop.permute.xlu0 %416
      %vm418 = vcmask 777216
      %v419 = vsel %vm418, %v413, %v415
      %v420 = vsel %vm418, %v415, %v417
      %423 = vst [vmem:[#allocation2 + $0xc0] sm:$0xf0] %v419
      %424 = vst [vmem:[#allocation2 + $0xc8] sm:$0xf0] %v420
      %425 = vst [vmem:[#allocation2 + $0x100] sm:$0xf] %v406
      %426 = vst [vmem:[#allocation2 + $0x108] sm:$0xf] %v407
      %s427 = sadd.s32 %s242, 1
      %s428 = smul.u32 %s427, 3
      %s429 = smul.addr %s428, 4
      %s430 = scalar_lea.vmem %s223, %s429
      %v431 = vld [vmem:[%s430] sm:$0xff]
      %v432 = vld [vmem:[%s430 + $0x8] sm:$0xf]
      %v434 = vcombine.high %v431, %v431
      %v436 = vsel %vm270, 0.0, %v431
      %v437 = vsel %vm271, 0.0, %v434
      %439 = vrot.lane.b32.xlu0 %v431, 126
      %v440 = vpop.permute.xlu0 %439
      %441 = vrot.lane.b32.xlu0 %v434, 126
      %v442 = vpop.permute.xlu0 %441
      %443 = vrot.lane.b32.xlu0 %v432, 126
      %v444 = vpop.permute.xlu0 %443
      %v445 = vsel %vm291, %v440, %v442
      %v446 = vsel %vm291, %v442, %v444
      %v449 = vsel %vm272, 0.0, %v445
      %v450 = vsel %vm273, 0.0, %v446
      %v453 = vrot.slane %v436, 4
      %v454 = vrot.slane %v437, 4
      %457 = vst [vmem:[#allocation2 + $0x100] sm:$0xf0] %v453
      %458 = vst [vmem:[#allocation2 + $0x108] sm:$0xf0] %v454
      %459 = vrot.lane.b32.xlu0 %v431, 127
      %v460 = vpop.permute.xlu0 %459
      %461 = vrot.lane.b32.xlu0 %v434, 127
      %v462 = vpop.permute.xlu0 %461
      %463 = vrot.lane.b32.xlu0 %v432, 127
      %v464 = vpop.permute.xlu0 %463
      %v465 = vsel %vm308, %v460, %v462
      %v466 = vsel %vm308, %v462, %v464
      %469 = vst [vmem:[#allocation2 + $0x140] sm:$0xf] %v465
      %470 = vst [vmem:[#allocation2 + $0x148] sm:$0xf] %v466
      %v473 = vrot.slane %v449, 4
      %v474 = vrot.slane %v450, 4
      %477 = vst [vmem:[#allocation2 + $0x140] sm:$0xf0] %v473
      %478 = vst [vmem:[#allocation2 + $0x148] sm:$0xf0] %v474
      %v479 = vld [vmem:[%s430] sm:$0xff]
      %v480 = vld [vmem:[%s430 + $0x8] sm:$0xf]
      %v483 = vcombine.high %v479, %v479
      %484 = vrot.lane.b32.xlu0 %v479, 112
      %v485 = vpop.permute.xlu0 %484
      %486 = vrot.lane.b32.xlu0 %v483, 112
      %v487 = vpop.permute.xlu0 %486
      %488 = vrot.lane.b32.xlu0 %v480, 112
      %v489 = vpop.permute.xlu0 %488
      %v490 = vsel %vm328, %v485, %v487
      %v491 = vsel %vm328, %v487, %v489
      %v494 = vsel %vm270, 0.0, %v490
      %v495 = vsel %vm271, 0.0, %v491
      %496 = vrot.lane.b32.xlu0 %v479, 110
      %v497 = vpop.permute.xlu0 %496
      %498 = vrot.lane.b32.xlu0 %v483, 110
      %v499 = vpop.permute.xlu0 %498
      %500 = vrot.lane.b32.xlu0 %v480, 110
      %v501 = vpop.permute.xlu0 %500
      %v502 = vsel %vm341, %v497, %v499
      %v503 = vsel %vm341, %v499, %v501
      %v506 = vsel %vm272, 0.0, %v502
      %v507 = vsel %vm273, 0.0, %v503
      %508 = vst [vmem:[#allocation2 + $0x180] sm:$0xf] %v494
      %509 = vst [vmem:[#allocation2 + $0x188] sm:$0xf] %v495
      %v510 = vcombine.low %v479, %v479
      %v511 = vcombine.low %v480, %v480
      %512 = vrot.lane.b32.xlu0 %v510, 111
      %v513 = vpop.permute.xlu0 %512
      %514 = vrot.lane.b32.xlu0 %v479, 111
      %v515 = vpop.permute.xlu0 %514
      %516 = vrot.lane.b32.xlu0 %v511, 111
      %v517 = vpop.permute.xlu0 %516
      %v518 = vsel %vm362, %v513, %v515
      %v519 = vsel %vm362, %v515, %v517
      %522 = vst [vmem:[#allocation2 + $0x180] sm:$0xf0] %v518
      %523 = vst [vmem:[#allocation2 + $0x188] sm:$0xf0] %v519
      %524 = vst [vmem:[#allocation2 + $0x1c0] sm:$0xf] %v506
      %525 = vst [vmem:[#allocation2 + $0x1c8] sm:$0xf] %v507
      %v526 = vld [vmem:[%s430] sm:$0xff]
      %v527 = vld [vmem:[%s430 + $0x8] sm:$0xf]
      %v530 = vcombine.high %v526, %v526
      %531 = vrot.lane.b32.xlu0 %v526, 96
      %v532 = vpop.permute.xlu0 %531
      %533 = vrot.lane.b32.xlu0 %v530, 96
      %v534 = vpop.permute.xlu0 %533
      %535 = vrot.lane.b32.xlu0 %v527, 96
      %v536 = vpop.permute.xlu0 %535
      %v537 = vsel %vm388, %v532, %v534
      %v538 = vsel %vm388, %v534, %v536
      %v541 = vsel %vm270, 0.0, %v537
      %v542 = vsel %vm271, 0.0, %v538
      %543 = vrot.lane.b32.xlu0 %v526, 94
      %v544 = vpop.permute.xlu0 %543
      %545 = vrot.lane.b32.xlu0 %v530, 94
      %v546 = vpop.permute.xlu0 %545
      %547 = vrot.lane.b32.xlu0 %v527, 94
      %v548 = vpop.permute.xlu0 %547
      %v549 = vsel %vm401, %v544, %v546
      %v550 = vsel %vm401, %v546, %v548
      %v553 = vsel %vm272, 0.0, %v549
      %v554 = vsel %vm273, 0.0, %v550
      %v557 = vrot.slane %v541, 4
      %v558 = vrot.slane %v542, 4
      %561 = vst [vmem:[#allocation2 + $0x1c0] sm:$0xf0] %v557
      %562 = vst [vmem:[#allocation2 + $0x1c8] sm:$0xf0] %v558
      %563 = vrot.lane.b32.xlu0 %v526, 95
      %v564 = vpop.permute.xlu0 %563
      %565 = vrot.lane.b32.xlu0 %v530, 95
      %v566 = vpop.permute.xlu0 %565
      %567 = vrot.lane.b32.xlu0 %v527, 95
      %v568 = vpop.permute.xlu0 %567
      %v569 = vsel %vm418, %v564, %v566
      %v570 = vsel %vm418, %v566, %v568
      %573 = vst [vmem:[#allocation2 + $0x200] sm:$0xf] %v569
      %574 = vst [vmem:[#allocation2 + $0x208] sm:$0xf] %v570
      %v577 = vrot.slane %v553, 4
      %v578 = vrot.slane %v554, 4
      %581 = vst [vmem:[#allocation2 + $0x200] sm:$0xf0] %v577
      %582 = vst [vmem:[#allocation2 + $0x208] sm:$0xf0] %v578
      %s583 = sadd.s32 %s242, 2
      %s584 = smul.u32 %s583, 3
      %s585 = smul.addr %s584, 4
      %s586 = scalar_lea.vmem %s223, %s585
      %v587 = vld [vmem:[%s586] sm:$0xff]
      %v588 = vld [vmem:[%s586 + $0x8] sm:$0xf]
      %v590 = vcombine.high %v587, %v587
      %v592 = vsel %vm270, 0.0, %v587
      %v593 = vsel %vm271, 0.0, %v590
      %595 = vrot.lane.b32.xlu0 %v587, 126
      %v596 = vpop.permute.xlu0 %595
      %597 = vrot.lane.b32.xlu0 %v590, 126
      %v598 = vpop.permute.xlu0 %597
      %599 = vrot.lane.b32.xlu0 %v588, 126
      %v600 = vpop.permute.xlu0 %599
      %v601 = vsel %vm291, %v596, %v598
      %v602 = vsel %vm291, %v598, %v600
      %v605 = vsel %vm272, 0.0, %v601
      %v606 = vsel %vm273, 0.0, %v602
      %607 = vst [vmem:[#allocation2 + $0x240] sm:$0xf] %v592
      %608 = vst [vmem:[#allocation2 + $0x248] sm:$0xf] %v593
      %v609 = vcombine.low %v587, %v587
      %v610 = vcombine.low %v588, %v588
      %611 = vrot.lane.b32.xlu0 %v609, 127
      %v612 = vpop.permute.xlu0 %611
      %613 = vrot.lane.b32.xlu0 %v587, 127
      %v614 = vpop.permute.xlu0 %613
      %615 = vrot.lane.b32.xlu0 %v610, 127
      %v616 = vpop.permute.xlu0 %615
      %v617 = vsel %vm308, %v612, %v614
      %v618 = vsel %vm308, %v614, %v616
      %621 = vst [vmem:[#allocation2 + $0x240] sm:$0xf0] %v617
      %622 = vst [vmem:[#allocation2 + $0x248] sm:$0xf0] %v618
      %623 = vst [vmem:[#allocation2 + $0x280] sm:$0xf] %v605
      %624 = vst [vmem:[#allocation2 + $0x288] sm:$0xf] %v606
      %v625 = vld [vmem:[%s586] sm:$0xff]
      %v626 = vld [vmem:[%s586 + $0x8] sm:$0xf]
      %v629 = vcombine.high %v625, %v625
      %630 = vrot.lane.b32.xlu0 %v625, 112
      %v631 = vpop.permute.xlu0 %630
      %632 = vrot.lane.b32.xlu0 %v629, 112
      %v633 = vpop.permute.xlu0 %632
      %634 = vrot.lane.b32.xlu0 %v626, 112
      %v635 = vpop.permute.xlu0 %634
      %v636 = vsel %vm328, %v631, %v633
      %v637 = vsel %vm328, %v633, %v635
      %v640 = vsel %vm270, 0.0, %v636
      %v641 = vsel %vm271, 0.0, %v637
      %642 = vrot.lane.b32.xlu0 %v625, 110
      %v643 = vpop.permute.xlu0 %642
      %644 = vrot.lane.b32.xlu0 %v629, 110
      %v645 = vpop.permute.xlu0 %644
      %646 = vrot.lane.b32.xlu0 %v626, 110
      %v647 = vpop.permute.xlu0 %646
      %v648 = vsel %vm341, %v643, %v645
      %v649 = vsel %vm341, %v645, %v647
      %v652 = vsel %vm272, 0.0, %v648
      %v653 = vsel %vm273, 0.0, %v649
      %v656 = vrot.slane %v640, 4
      %v657 = vrot.slane %v641, 4
      %660 = vst [vmem:[#allocation2 + $0x280] sm:$0xf0] %v656
      %661 = vst [vmem:[#allocation2 + $0x288] sm:$0xf0] %v657
      %662 = vrot.lane.b32.xlu0 %v625, 111
      %v663 = vpop.permute.xlu0 %662
      %664 = vrot.lane.b32.xlu0 %v629, 111
      %v665 = vpop.permute.xlu0 %664
      %666 = vrot.lane.b32.xlu0 %v626, 111
      %v667 = vpop.permute.xlu0 %666
      %v668 = vsel %vm362, %v663, %v665
      %v669 = vsel %vm362, %v665, %v667
      %672 = vst [vmem:[#allocation2 + $0x2c0] sm:$0xf] %v668
      %673 = vst [vmem:[#allocation2 + $0x2c8] sm:$0xf] %v669
      %v676 = vrot.slane %v652, 4
      %v677 = vrot.slane %v653, 4
      %680 = vst [vmem:[#allocation2 + $0x2c0] sm:$0xf0] %v676
      %681 = vst [vmem:[#allocation2 + $0x2c8] sm:$0xf0] %v677
      %v682 = vld [vmem:[%s586] sm:$0xff]
      %v683 = vld [vmem:[%s586 + $0x8] sm:$0xf]
      %v686 = vcombine.high %v682, %v682
      %687 = vrot.lane.b32.xlu0 %v682, 96
      %v688 = vpop.permute.xlu0 %687
      %689 = vrot.lane.b32.xlu0 %v686, 96
      %v690 = vpop.permute.xlu0 %689
      %691 = vrot.lane.b32.xlu0 %v683, 96
      %v692 = vpop.permute.xlu0 %691
      %v693 = vsel %vm388, %v688, %v690
      %v694 = vsel %vm388, %v690, %v692
      %v697 = vsel %vm270, 0.0, %v693
      %v698 = vsel %vm271, 0.0, %v694
      %699 = vrot.lane.b32.xlu0 %v682, 94
      %v700 = vpop.permute.xlu0 %699
      %701 = vrot.lane.b32.xlu0 %v686, 94
      %v702 = vpop.permute.xlu0 %701
      %703 = vrot.lane.b32.xlu0 %v683, 94
      %v704 = vpop.permute.xlu0 %703
      %v705 = vsel %vm401, %v700, %v702
      %v706 = vsel %vm401, %v702, %v704
      %v709 = vsel %vm272, 0.0, %v705
      %v710 = vsel %vm273, 0.0, %v706
      %711 = vst [vmem:[#allocation2 + $0x300] sm:$0xf] %v697
      %712 = vst [vmem:[#allocation2 + $0x308] sm:$0xf] %v698
      %v713 = vcombine.low %v682, %v682
      %v714 = vcombine.low %v683, %v683
      %715 = vrot.lane.b32.xlu0 %v713, 95
      %v716 = vpop.permute.xlu0 %715
      %717 = vrot.lane.b32.xlu0 %v682, 95
      %v718 = vpop.permute.xlu0 %717
      %719 = vrot.lane.b32.xlu0 %v714, 95
      %v720 = vpop.permute.xlu0 %719
      %v721 = vsel %vm418, %v716, %v718
      %v722 = vsel %vm418, %v718, %v720
      %725 = vst [vmem:[#allocation2 + $0x300] sm:$0xf0] %v721
      %726 = vst [vmem:[#allocation2 + $0x308] sm:$0xf0] %v722
      %727 = vst [vmem:[#allocation2 + $0x340] sm:$0xf] %v709
      %728 = vst [vmem:[#allocation2 + $0x348] sm:$0xf] %v710
      %v729 = vld [vmem:[%s430] sm:$0xff]
      %v730 = vld [vmem:[%s430 + $0x8] sm:$0xf]
      %v732 = vcombine.high %v729, %v729
      %v734 = vsel %vm270, 0.0, %v729
      %v735 = vsel %vm271, 0.0, %v732
      %737 = vrot.lane.b32.xlu0 %v729, 126
      %v738 = vpop.permute.xlu0 %737
      %739 = vrot.lane.b32.xlu0 %v732, 126
      %v740 = vpop.permute.xlu0 %739
      %741 = vrot.lane.b32.xlu0 %v730, 126
      %v742 = vpop.permute.xlu0 %741
      %v743 = vsel %vm291, %v738, %v740
      %v744 = vsel %vm291, %v740, %v742
      %v747 = vsel %vm272, 0.0, %v743
      %v748 = vsel %vm273, 0.0, %v744
      %749 = vst [vmem:[#allocation2 + $0x10] sm:$0xf] %v734
      %750 = vst [vmem:[#allocation2 + $0x18] sm:$0xf] %v735
      %v751 = vcombine.low %v729, %v729
      %v752 = vcombine.low %v730, %v730
      %753 = vrot.lane.b32.xlu0 %v751, 127
      %v754 = vpop.permute.xlu0 %753
      %755 = vrot.lane.b32.xlu0 %v729, 127
      %v756 = vpop.permute.xlu0 %755
      %757 = vrot.lane.b32.xlu0 %v752, 127
      %v758 = vpop.permute.xlu0 %757
      %v759 = vsel %vm308, %v754, %v756
      %v760 = vsel %vm308, %v756, %v758
      %763 = vst [vmem:[#allocation2 + $0x10] sm:$0xf0] %v759
      %764 = vst [vmem:[#allocation2 + $0x18] sm:$0xf0] %v760
      %765 = vst [vmem:[#allocation2 + $0x50] sm:$0xf] %v747
      %766 = vst [vmem:[#allocation2 + $0x58] sm:$0xf] %v748
      %v767 = vld [vmem:[%s430] sm:$0xff]
      %v768 = vld [vmem:[%s430 + $0x8] sm:$0xf]
      %v771 = vcombine.high %v767, %v767
      %772 = vrot.lane.b32.xlu0 %v767, 112
      %v773 = vpop.permute.xlu0 %772
      %774 = vrot.lane.b32.xlu0 %v771, 112
      %v775 = vpop.permute.xlu0 %774
      %776 = vrot.lane.b32.xlu0 %v768, 112
      %v777 = vpop.permute.xlu0 %776
      %v778 = vsel %vm328, %v773, %v775
      %v779 = vsel %vm328, %v775, %v777
      %v782 = vsel %vm270, 0.0, %v778
      %v783 = vsel %vm271, 0.0, %v779
      %784 = vrot.lane.b32.xlu0 %v767, 110
      %v785 = vpop.permute.xlu0 %784
      %786 = vrot.lane.b32.xlu0 %v771, 110
      %v787 = vpop.permute.xlu0 %786
      %788 = vrot.lane.b32.xlu0 %v768, 110
      %v789 = vpop.permute.xlu0 %788
      %v790 = vsel %vm341, %v785, %v787
      %v791 = vsel %vm341, %v787, %v789
      %v794 = vsel %vm272, 0.0, %v790
      %v795 = vsel %vm273, 0.0, %v791
      %v798 = vrot.slane %v782, 4
      %v799 = vrot.slane %v783, 4
      %802 = vst [vmem:[#allocation2 + $0x50] sm:$0xf0] %v798
      %803 = vst [vmem:[#allocation2 + $0x58] sm:$0xf0] %v799
      %804 = vrot.lane.b32.xlu0 %v767, 111
      %v805 = vpop.permute.xlu0 %804
      %806 = vrot.lane.b32.xlu0 %v771, 111
      %v807 = vpop.permute.xlu0 %806
      %808 = vrot.lane.b32.xlu0 %v768, 111
      %v809 = vpop.permute.xlu0 %808
      %v810 = vsel %vm362, %v805, %v807
      %v811 = vsel %vm362, %v807, %v809
      %814 = vst [vmem:[#allocation2 + $0x90] sm:$0xf] %v810
      %815 = vst [vmem:[#allocation2 + $0x98] sm:$0xf] %v811
      %v818 = vrot.slane %v794, 4
      %v819 = vrot.slane %v795, 4
      %822 = vst [vmem:[#allocation2 + $0x90] sm:$0xf0] %v818
      %823 = vst [vmem:[#allocation2 + $0x98] sm:$0xf0] %v819
      %v824 = vld [vmem:[%s430] sm:$0xff]
      %v825 = vld [vmem:[%s430 + $0x8] sm:$0xf]
      %v828 = vcombine.high %v824, %v824
      %829 = vrot.lane.b32.xlu0 %v824, 96
      %v830 = vpop.permute.xlu0 %829
      %831 = vrot.lane.b32.xlu0 %v828, 96
      %v832 = vpop.permute.xlu0 %831
      %833 = vrot.lane.b32.xlu0 %v825, 96
      %v834 = vpop.permute.xlu0 %833
      %v835 = vsel %vm388, %v830, %v832
      %v836 = vsel %vm388, %v832, %v834
      %v839 = vsel %vm270, 0.0, %v835
      %v840 = vsel %vm271, 0.0, %v836
      %841 = vrot.lane.b32.xlu0 %v824, 94
      %v842 = vpop.permute.xlu0 %841
      %843 = vrot.lane.b32.xlu0 %v828, 94
      %v844 = vpop.permute.xlu0 %843
      %845 = vrot.lane.b32.xlu0 %v825, 94
      %v846 = vpop.permute.xlu0 %845
      %v847 = vsel %vm401, %v842, %v844
      %v848 = vsel %vm401, %v844, %v846
      %v851 = vsel %vm272, 0.0, %v847
      %v852 = vsel %vm273, 0.0, %v848
      %853 = vst [vmem:[#allocation2 + $0xd0] sm:$0xf] %v839
      %854 = vst [vmem:[#allocation2 + $0xd8] sm:$0xf] %v840
      %v855 = vcombine.low %v824, %v824
      %v856 = vcombine.low %v825, %v825
      %857 = vrot.lane.b32.xlu0 %v855, 95
      %v858 = vpop.permute.xlu0 %857
      %859 = vrot.lane.b32.xlu0 %v824, 95
      %v860 = vpop.permute.xlu0 %859
      %861 = vrot.lane.b32.xlu0 %v856, 95
      %v862 = vpop.permute.xlu0 %861
      %v863 = vsel %vm418, %v858, %v860
      %v864 = vsel %vm418, %v860, %v862
      %867 = vst [vmem:[#allocation2 + $0xd0] sm:$0xf0] %v863
      %868 = vst [vmem:[#allocation2 + $0xd8] sm:$0xf0] %v864
      %869 = vst [vmem:[#allocation2 + $0x110] sm:$0xf] %v851
      %870 = vst [vmem:[#allocation2 + $0x118] sm:$0xf] %v852
      %v871 = vld [vmem:[%s586] sm:$0xff]
      %v872 = vld [vmem:[%s586 + $0x8] sm:$0xf]
      %v874 = vcombine.high %v871, %v871
      %v876 = vsel %vm270, 0.0, %v871
      %v877 = vsel %vm271, 0.0, %v874
      %879 = vrot.lane.b32.xlu0 %v871, 126
      %v880 = vpop.permute.xlu0 %879
      %881 = vrot.lane.b32.xlu0 %v874, 126
      %v882 = vpop.permute.xlu0 %881
      %883 = vrot.lane.b32.xlu0 %v872, 126
      %v884 = vpop.permute.xlu0 %883
      %v885 = vsel %vm291, %v880, %v882
      %v886 = vsel %vm291, %v882, %v884
      %v889 = vsel %vm272, 0.0, %v885
      %v890 = vsel %vm273, 0.0, %v886
      %v893 = vrot.slane %v876, 4
      %v894 = vrot.slane %v877, 4
      %897 = vst [vmem:[#allocation2 + $0x110] sm:$0xf0] %v893
      %898 = vst [vmem:[#allocation2 + $0x118] sm:$0xf0] %v894
      %899 = vrot.lane.b32.xlu0 %v871, 127
      %v900 = vpop.permute.xlu0 %899
      %901 = vrot.lane.b32.xlu0 %v874, 127
      %v902 = vpop.permute.xlu0 %901
      %903 = vrot.lane.b32.xlu0 %v872, 127
      %v904 = vpop.permute.xlu0 %903
      %v905 = vsel %vm308, %v900, %v902
      %v906 = vsel %vm308, %v902, %v904
      %909 = vst [vmem:[#allocation2 + $0x150] sm:$0xf] %v905
      %910 = vst [vmem:[#allocation2 + $0x158] sm:$0xf] %v906
      %v913 = vrot.slane %v889, 4
      %v914 = vrot.slane %v890, 4
      %917 = vst [vmem:[#allocation2 + $0x150] sm:$0xf0] %v913
      %918 = vst [vmem:[#allocation2 + $0x158] sm:$0xf0] %v914
      %v919 = vld [vmem:[%s586] sm:$0xff]
      %v920 = vld [vmem:[%s586 + $0x8] sm:$0xf]
      %v923 = vcombine.high %v919, %v919
      %924 = vrot.lane.b32.xlu0 %v919, 112
      %v925 = vpop.permute.xlu0 %924
      %926 = vrot.lane.b32.xlu0 %v923, 112
      %v927 = vpop.permute.xlu0 %926
      %928 = vrot.lane.b32.xlu0 %v920, 112
      %v929 = vpop.permute.xlu0 %928
      %v930 = vsel %vm328, %v925, %v927
      %v931 = vsel %vm328, %v927, %v929
      %v934 = vsel %vm270, 0.0, %v930
      %v935 = vsel %vm271, 0.0, %v931
      %936 = vrot.lane.b32.xlu0 %v919, 110
      %v937 = vpop.permute.xlu0 %936
      %938 = vrot.lane.b32.xlu0 %v923, 110
      %v939 = vpop.permute.xlu0 %938
      %940 = vrot.lane.b32.xlu0 %v920, 110
      %v941 = vpop.permute.xlu0 %940
      %v942 = vsel %vm341, %v937, %v939
      %v943 = vsel %vm341, %v939, %v941
      %v946 = vsel %vm272, 0.0, %v942
      %v947 = vsel %vm273, 0.0, %v943
      %948 = vst [vmem:[#allocation2 + $0x190] sm:$0xf] %v934
      %949 = vst [vmem:[#allocation2 + $0x198] sm:$0xf] %v935
      %v950 = vcombine.low %v919, %v919
      %v951 = vcombine.low %v920, %v920
      %952 = vrot.lane.b32.xlu0 %v950, 111
      %v953 = vpop.permute.xlu0 %952
      %954 = vrot.lane.b32.xlu0 %v919, 111
      %v955 = vpop.permute.xlu0 %954
      %956 = vrot.lane.b32.xlu0 %v951, 111
      %v957 = vpop.permute.xlu0 %956
      %v958 = vsel %vm362, %v953, %v955
      %v959 = vsel %vm362, %v955, %v957
      %962 = vst [vmem:[#allocation2 + $0x190] sm:$0xf0] %v958
      %963 = vst [vmem:[#allocation2 + $0x198] sm:$0xf0] %v959
      %964 = vst [vmem:[#allocation2 + $0x1d0] sm:$0xf] %v946
      %965 = vst [vmem:[#allocation2 + $0x1d8] sm:$0xf] %v947
      %v966 = vld [vmem:[%s586] sm:$0xff]
      %v967 = vld [vmem:[%s586 + $0x8] sm:$0xf]
      %v970 = vcombine.high %v966, %v966
      %971 = vrot.lane.b32.xlu0 %v966, 96
      %v972 = vpop.permute.xlu0 %971
      %973 = vrot.lane.b32.xlu0 %v970, 96
      %v974 = vpop.permute.xlu0 %973
      %975 = vrot.lane.b32.xlu0 %v967, 96
      %v976 = vpop.permute.xlu0 %975
      %v977 = vsel %vm388, %v972, %v974
      %v978 = vsel %vm388, %v974, %v976
      %v981 = vsel %vm270, 0.0, %v977
      %v982 = vsel %vm271, 0.0, %v978
      %983 = vrot.lane.b32.xlu0 %v966, 94
      %v984 = vpop.permute.xlu0 %983
      %985 = vrot.lane.b32.xlu0 %v970, 94
      %v986 = vpop.permute.xlu0 %985
      %987 = vrot.lane.b32.xlu0 %v967, 94
      %v988 = vpop.permute.xlu0 %987
      %v989 = vsel %vm401, %v984, %v986
      %v990 = vsel %vm401, %v986, %v988
      %v993 = vsel %vm272, 0.0, %v989
      %v994 = vsel %vm273, 0.0, %v990
      %v997 = vrot.slane %v981, 4
      %v998 = vrot.slane %v982, 4
      %1001 = vst [vmem:[#allocation2 + $0x1d0] sm:$0xf0] %v997
      %1002 = vst [vmem:[#allocation2 + $0x1d8] sm:$0xf0] %v998
      %1003 = vrot.lane.b32.xlu0 %v966, 95
      %v1004 = vpop.permute.xlu0 %1003
      %1005 = vrot.lane.b32.xlu0 %v970, 95
      %v1006 = vpop.permute.xlu0 %1005
      %1007 = vrot.lane.b32.xlu0 %v967, 95
      %v1008 = vpop.permute.xlu0 %1007
      %v1009 = vsel %vm418, %v1004, %v1006
      %v1010 = vsel %vm418, %v1006, %v1008
      %1013 = vst [vmem:[#allocation2 + $0x210] sm:$0xf] %v1009
      %1014 = vst [vmem:[#allocation2 + $0x218] sm:$0xf] %v1010
      %v1017 = vrot.slane %v993, 4
      %v1018 = vrot.slane %v994, 4
      %1021 = vst [vmem:[#allocation2 + $0x210] sm:$0xf0] %v1017
      %1022 = vst [vmem:[#allocation2 + $0x218] sm:$0xf0] %v1018
      %s1023 = sadd.s32 %s242, 3
      %s1024 = smul.u32 %s1023, 3
      %s1025 = smul.addr %s1024, 4
      %s1026 = scalar_lea.vmem %s223, %s1025
      %v1027 = vld [vmem:[%s1026] sm:$0xff]
      %v1028 = vld [vmem:[%s1026 + $0x8] sm:$0xf]
      %v1030 = vcombine.high %v1027, %v1027
      %v1032 = vsel %vm270, 0.0, %v1027
      %v1033 = vsel %vm271, 0.0, %v1030
      %1035 = vrot.lane.b32.xlu0 %v1027, 126
      %v1036 = vpop.permute.xlu0 %1035
      %1037 = vrot.lane.b32.xlu0 %v1030, 126
      %v1038 = vpop.permute.xlu0 %1037
      %1039 = vrot.lane.b32.xlu0 %v1028, 126
      %v1040 = vpop.permute.xlu0 %1039
      %v1041 = vsel %vm291, %v1036, %v1038
      %v1042 = vsel %vm291, %v1038, %v1040
      %v1045 = vsel %vm272, 0.0, %v1041
      %v1046 = vsel %vm273, 0.0, %v1042
      %1047 = vst [vmem:[#allocation2 + $0x250] sm:$0xf] %v1032
      %1048 = vst [vmem:[#allocation2 + $0x258] sm:$0xf] %v1033
      %v1049 = vcombine.low %v1027, %v1027
      %v1050 = vcombine.low %v1028, %v1028
      %1051 = vrot.lane.b32.xlu0 %v1049, 127
      %v1052 = vpop.permute.xlu0 %1051
      %1053 = vrot.lane.b32.xlu0 %v1027, 127
      %v1054 = vpop.permute.xlu0 %1053
      %1055 = vrot.lane.b32.xlu0 %v1050, 127
      %v1056 = vpop.permute.xlu0 %1055
      %v1057 = vsel %vm308, %v1052, %v1054
      %v1058 = vsel %vm308, %v1054, %v1056
      %1061 = vst [vmem:[#allocation2 + $0x250] sm:$0xf0] %v1057
      %1062 = vst [vmem:[#allocation2 + $0x258] sm:$0xf0] %v1058
      %1063 = vst [vmem:[#allocation2 + $0x290] sm:$0xf] %v1045
      %1064 = vst [vmem:[#allocation2 + $0x298] sm:$0xf] %v1046
      %v1065 = vld [vmem:[%s1026] sm:$0xff]
      %v1066 = vld [vmem:[%s1026 + $0x8] sm:$0xf]
      %v1069 = vcombine.high %v1065, %v1065
      %1070 = vrot.lane.b32.xlu0 %v1065, 112
      %v1071 = vpop.permute.xlu0 %1070
      %1072 = vrot.lane.b32.xlu0 %v1069, 112
      %v1073 = vpop.permute.xlu0 %1072
      %1074 = vrot.lane.b32.xlu0 %v1066, 112
      %v1075 = vpop.permute.xlu0 %1074
      %v1076 = vsel %vm328, %v1071, %v1073
      %v1077 = vsel %vm328, %v1073, %v1075
      %v1080 = vsel %vm270, 0.0, %v1076
      %v1081 = vsel %vm271, 0.0, %v1077
      %1082 = vrot.lane.b32.xlu0 %v1065, 110
      %v1083 = vpop.permute.xlu0 %1082
      %1084 = vrot.lane.b32.xlu0 %v1069, 110
      %v1085 = vpop.permute.xlu0 %1084
      %1086 = vrot.lane.b32.xlu0 %v1066, 110
      %v1087 = vpop.permute.xlu0 %1086
      %v1088 = vsel %vm341, %v1083, %v1085
      %v1089 = vsel %vm341, %v1085, %v1087
      %v1092 = vsel %vm272, 0.0, %v1088
      %v1093 = vsel %vm273, 0.0, %v1089
      %v1096 = vrot.slane %v1080, 4
      %v1097 = vrot.slane %v1081, 4
      %1100 = vst [vmem:[#allocation2 + $0x290] sm:$0xf0] %v1096
      %1101 = vst [vmem:[#allocation2 + $0x298] sm:$0xf0] %v1097
      %1102 = vrot.lane.b32.xlu0 %v1065, 111
      %v1103 = vpop.permute.xlu0 %1102
      %1104 = vrot.lane.b32.xlu0 %v1069, 111
      %v1105 = vpop.permute.xlu0 %1104
      %1106 = vrot.lane.b32.xlu0 %v1066, 111
      %v1107 = vpop.permute.xlu0 %1106
      %v1108 = vsel %vm362, %v1103, %v1105
      %v1109 = vsel %vm362, %v1105, %v1107
      %1112 = vst [vmem:[#allocation2 + $0x2d0] sm:$0xf] %v1108
      %1113 = vst [vmem:[#allocation2 + $0x2d8] sm:$0xf] %v1109
      %v1116 = vrot.slane %v1092, 4
      %v1117 = vrot.slane %v1093, 4
      %1120 = vst [vmem:[#allocation2 + $0x2d0] sm:$0xf0] %v1116
      %1121 = vst [vmem:[#allocation2 + $0x2d8] sm:$0xf0] %v1117
      %v1122 = vld [vmem:[%s1026] sm:$0xff]
      %v1123 = vld [vmem:[%s1026 + $0x8] sm:$0xf]
      %v1126 = vcombine.high %v1122, %v1122
      %1127 = vrot.lane.b32.xlu0 %v1122, 96
      %v1128 = vpop.permute.xlu0 %1127
      %1129 = vrot.lane.b32.xlu0 %v1126, 96
      %v1130 = vpop.permute.xlu0 %1129
      %1131 = vrot.lane.b32.xlu0 %v1123, 96
      %v1132 = vpop.permute.xlu0 %1131
      %v1133 = vsel %vm388, %v1128, %v1130
      %v1134 = vsel %vm388, %v1130, %v1132
      %v1137 = vsel %vm270, 0.0, %v1133
      %v1138 = vsel %vm271, 0.0, %v1134
      %1139 = vrot.lane.b32.xlu0 %v1122, 94
      %v1140 = vpop.permute.xlu0 %1139
      %1141 = vrot.lane.b32.xlu0 %v1126, 94
      %v1142 = vpop.permute.xlu0 %1141
      %1143 = vrot.lane.b32.xlu0 %v1123, 94
      %v1144 = vpop.permute.xlu0 %1143
      %v1145 = vsel %vm401, %v1140, %v1142
      %v1146 = vsel %vm401, %v1142, %v1144
      %v1149 = vsel %vm272, 0.0, %v1145
      %v1150 = vsel %vm273, 0.0, %v1146
      %1151 = vst [vmem:[#allocation2 + $0x310] sm:$0xf] %v1137
      %1152 = vst [vmem:[#allocation2 + $0x318] sm:$0xf] %v1138
      %v1153 = vcombine.low %v1122, %v1122
      %v1154 = vcombine.low %v1123, %v1123
      %1155 = vrot.lane.b32.xlu0 %v1153, 95
      %v1156 = vpop.permute.xlu0 %1155
      %1157 = vrot.lane.b32.xlu0 %v1122, 95
      %v1158 = vpop.permute.xlu0 %1157
      %1159 = vrot.lane.b32.xlu0 %v1154, 95
      %v1160 = vpop.permute.xlu0 %1159
      %v1161 = vsel %vm418, %v1156, %v1158
      %v1162 = vsel %vm418, %v1158, %v1160
      %1165 = vst [vmem:[#allocation2 + $0x310] sm:$0xf0] %v1161
      %1166 = vst [vmem:[#allocation2 + $0x318] sm:$0xf0] %v1162
      %1167 = vst [vmem:[#allocation2 + $0x350] sm:$0xf] %v1149
      %1168 = vst [vmem:[#allocation2 + $0x358] sm:$0xf] %v1150
      %v1169 = vld [vmem:[%s586] sm:$0xff]
      %v1170 = vld [vmem:[%s586 + $0x8] sm:$0xf]
      %v1172 = vcombine.high %v1169, %v1169
      %v1174 = vsel %vm270, 0.0, %v1169
      %v1175 = vsel %vm271, 0.0, %v1172
      %1177 = vrot.lane.b32.xlu0 %v1169, 126
      %v1178 = vpop.permute.xlu0 %1177
      %1179 = vrot.lane.b32.xlu0 %v1172, 126
      %v1180 = vpop.permute.xlu0 %1179
      %1181 = vrot.lane.b32.xlu0 %v1170, 126
      %v1182 = vpop.permute.xlu0 %1181
      %v1183 = vsel %vm291, %v1178, %v1180
      %v1184 = vsel %vm291, %v1180, %v1182
      %v1187 = vsel %vm272, 0.0, %v1183
      %v1188 = vsel %vm273, 0.0, %v1184
      %1189 = vst [vmem:[#allocation2 + $0x20] sm:$0xf] %v1174
      %1190 = vst [vmem:[#allocation2 + $0x28] sm:$0xf] %v1175
      %v1191 = vcombine.low %v1169, %v1169
      %v1192 = vcombine.low %v1170, %v1170
      %1193 = vrot.lane.b32.xlu0 %v1191, 127
      %v1194 = vpop.permute.xlu0 %1193
      %1195 = vrot.lane.b32.xlu0 %v1169, 127
      %v1196 = vpop.permute.xlu0 %1195
      %1197 = vrot.lane.b32.xlu0 %v1192, 127
      %v1198 = vpop.permute.xlu0 %1197
      %v1199 = vsel %vm308, %v1194, %v1196
      %v1200 = vsel %vm308, %v1196, %v1198
      %1203 = vst [vmem:[#allocation2 + $0x20] sm:$0xf0] %v1199
      %1204 = vst [vmem:[#allocation2 + $0x28] sm:$0xf0] %v1200
      %1205 = vst [vmem:[#allocation2 + $0x60] sm:$0xf] %v1187
      %1206 = vst [vmem:[#allocation2 + $0x68] sm:$0xf] %v1188
      %v1207 = vld [vmem:[%s586] sm:$0xff]
      %v1208 = vld [vmem:[%s586 + $0x8] sm:$0xf]
      %v1211 = vcombine.high %v1207, %v1207
      %1212 = vrot.lane.b32.xlu0 %v1207, 112
      %v1213 = vpop.permute.xlu0 %1212
      %1214 = vrot.lane.b32.xlu0 %v1211, 112
      %v1215 = vpop.permute.xlu0 %1214
      %1216 = vrot.lane.b32.xlu0 %v1208, 112
      %v1217 = vpop.permute.xlu0 %1216
      %v1218 = vsel %vm328, %v1213, %v1215
      %v1219 = vsel %vm328, %v1215, %v1217
      %v1222 = vsel %vm270, 0.0, %v1218
      %v1223 = vsel %vm271, 0.0, %v1219
      %1224 = vrot.lane.b32.xlu0 %v1207, 110
      %v1225 = vpop.permute.xlu0 %1224
      %1226 = vrot.lane.b32.xlu0 %v1211, 110
      %v1227 = vpop.permute.xlu0 %1226
      %1228 = vrot.lane.b32.xlu0 %v1208, 110
      %v1229 = vpop.permute.xlu0 %1228
      %v1230 = vsel %vm341, %v1225, %v1227
      %v1231 = vsel %vm341, %v1227, %v1229
      %v1234 = vsel %vm272, 0.0, %v1230
      %v1235 = vsel %vm273, 0.0, %v1231
      %v1238 = vrot.slane %v1222, 4
      %v1239 = vrot.slane %v1223, 4
      %1242 = vst [vmem:[#allocation2 + $0x60] sm:$0xf0] %v1238
      %1243 = vst [vmem:[#allocation2 + $0x68] sm:$0xf0] %v1239
      %1244 = vrot.lane.b32.xlu0 %v1207, 111
      %v1245 = vpop.permute.xlu0 %1244
      %1246 = vrot.lane.b32.xlu0 %v1211, 111
      %v1247 = vpop.permute.xlu0 %1246
      %1248 = vrot.lane.b32.xlu0 %v1208, 111
      %v1249 = vpop.permute.xlu0 %1248
      %v1250 = vsel %vm362, %v1245, %v1247
      %v1251 = vsel %vm362, %v1247, %v1249
      %1254 = vst [vmem:[#allocation2 + $0xa0] sm:$0xf] %v1250
      %1255 = vst [vmem:[#allocation2 + $0xa8] sm:$0xf] %v1251
      %v1258 = vrot.slane %v1234, 4
      %v1259 = vrot.slane %v1235, 4
      %1262 = vst [vmem:[#allocation2 + $0xa0] sm:$0xf0] %v1258
      %1263 = vst [vmem:[#allocation2 + $0xa8] sm:$0xf0] %v1259
      %v1264 = vld [vmem:[%s586] sm:$0xff]
      %v1265 = vld [vmem:[%s586 + $0x8] sm:$0xf]
      %v1268 = vcombine.high %v1264, %v1264
      %1269 = vrot.lane.b32.xlu0 %v1264, 96
      %v1270 = vpop.permute.xlu0 %1269
      %1271 = vrot.lane.b32.xlu0 %v1268, 96
      %v1272 = vpop.permute.xlu0 %1271
      %1273 = vrot.lane.b32.xlu0 %v1265, 96
      %v1274 = vpop.permute.xlu0 %1273
      %v1275 = vsel %vm388, %v1270, %v1272
      %v1276 = vsel %vm388, %v1272, %v1274
      %v1279 = vsel %vm270, 0.0, %v1275
      %v1280 = vsel %vm271, 0.0, %v1276
      %1281 = vrot.lane.b32.xlu0 %v1264, 94
      %v1282 = vpop.permute.xlu0 %1281
      %1283 = vrot.lane.b32.xlu0 %v1268, 94
      %v1284 = vpop.permute.xlu0 %1283
      %1285 = vrot.lane.b32.xlu0 %v1265, 94
      %v1286 = vpop.permute.xlu0 %1285
      %v1287 = vsel %vm401, %v1282, %v1284
      %v1288 = vsel %vm401, %v1284, %v1286
      %v1291 = vsel %vm272, 0.0, %v1287
      %v1292 = vsel %vm273, 0.0, %v1288
      %1293 = vst [vmem:[#allocation2 + $0xe0] sm:$0xf] %v1279
      %1294 = vst [vmem:[#allocation2 + $0xe8] sm:$0xf] %v1280
      %v1295 = vcombine.low %v1264, %v1264
      %v1296 = vcombine.low %v1265, %v1265
      %1297 = vrot.lane.b32.xlu0 %v1295, 95
      %v1298 = vpop.permute.xlu0 %1297
      %1299 = vrot.lane.b32.xlu0 %v1264, 95
      %v1300 = vpop.permute.xlu0 %1299
      %1301 = vrot.lane.b32.xlu0 %v1296, 95
      %v1302 = vpop.permute.xlu0 %1301
      %v1303 = vsel %vm418, %v1298, %v1300
      %v1304 = vsel %vm418, %v1300, %v1302
      %1307 = vst [vmem:[#allocation2 + $0xe0] sm:$0xf0] %v1303
      %1308 = vst [vmem:[#allocation2 + $0xe8] sm:$0xf0] %v1304
      %1309 = vst [vmem:[#allocation2 + $0x120] sm:$0xf] %v1291
      %1310 = vst [vmem:[#allocation2 + $0x128] sm:$0xf] %v1292
      %v1311 = vld [vmem:[%s1026] sm:$0xff]
      %v1312 = vld [vmem:[%s1026 + $0x8] sm:$0xf]
      %v1314 = vcombine.high %v1311, %v1311
      %v1316 = vsel %vm270, 0.0, %v1311
      %v1317 = vsel %vm271, 0.0, %v1314
      %1319 = vrot.lane.b32.xlu0 %v1311, 126
      %v1320 = vpop.permute.xlu0 %1319
      %1321 = vrot.lane.b32.xlu0 %v1314, 126
      %v1322 = vpop.permute.xlu0 %1321
      %1323 = vrot.lane.b32.xlu0 %v1312, 126
      %v1324 = vpop.permute.xlu0 %1323
      %v1325 = vsel %vm291, %v1320, %v1322
      %v1326 = vsel %vm291, %v1322, %v1324
      %v1329 = vsel %vm272, 0.0, %v1325
      %v1330 = vsel %vm273, 0.0, %v1326
      %v1333 = vrot.slane %v1316, 4
      %v1334 = vrot.slane %v1317, 4
      %1337 = vst [vmem:[#allocation2 + $0x120] sm:$0xf0] %v1333
      %1338 = vst [vmem:[#allocation2 + $0x128] sm:$0xf0] %v1334
      %1339 = vrot.lane.b32.xlu0 %v1311, 127
      %v1340 = vpop.permute.xlu0 %1339
      %1341 = vrot.lane.b32.xlu0 %v1314, 127
      %v1342 = vpop.permute.xlu0 %1341
      %1343 = vrot.lane.b32.xlu0 %v1312, 127
      %v1344 = vpop.permute.xlu0 %1343
      %v1345 = vsel %vm308, %v1340, %v1342
      %v1346 = vsel %vm308, %v1342, %v1344
      %1349 = vst [vmem:[#allocation2 + $0x160] sm:$0xf] %v1345
      %1350 = vst [vmem:[#allocation2 + $0x168] sm:$0xf] %v1346
      %v1353 = vrot.slane %v1329, 4
      %v1354 = vrot.slane %v1330, 4
      %1357 = vst [vmem:[#allocation2 + $0x160] sm:$0xf0] %v1353
      %1358 = vst [vmem:[#allocation2 + $0x168] sm:$0xf0] %v1354
      %v1359 = vld [vmem:[%s1026] sm:$0xff]
      %v1360 = vld [vmem:[%s1026 + $0x8] sm:$0xf]
      %v1363 = vcombine.high %v1359, %v1359
      %1364 = vrot.lane.b32.xlu0 %v1359, 112
      %v1365 = vpop.permute.xlu0 %1364
      %1366 = vrot.lane.b32.xlu0 %v1363, 112
      %v1367 = vpop.permute.xlu0 %1366
      %1368 = vrot.lane.b32.xlu0 %v1360, 112
      %v1369 = vpop.permute.xlu0 %1368
      %v1370 = vsel %vm328, %v1365, %v1367
      %v1371 = vsel %vm328, %v1367, %v1369
      %v1374 = vsel %vm270, 0.0, %v1370
      %v1375 = vsel %vm271, 0.0, %v1371
      %1376 = vrot.lane.b32.xlu0 %v1359, 110
      %v1377 = vpop.permute.xlu0 %1376
      %1378 = vrot.lane.b32.xlu0 %v1363, 110
      %v1379 = vpop.permute.xlu0 %1378
      %1380 = vrot.lane.b32.xlu0 %v1360, 110
      %v1381 = vpop.permute.xlu0 %1380
      %v1382 = vsel %vm341, %v1377, %v1379
      %v1383 = vsel %vm341, %v1379, %v1381
      %v1386 = vsel %vm272, 0.0, %v1382
      %v1387 = vsel %vm273, 0.0, %v1383
      %1388 = vst [vmem:[#allocation2 + $0x1a0] sm:$0xf] %v1374
      %1389 = vst [vmem:[#allocation2 + $0x1a8] sm:$0xf] %v1375
      %v1390 = vcombine.low %v1359, %v1359
      %v1391 = vcombine.low %v1360, %v1360
      %1392 = vrot.lane.b32.xlu0 %v1390, 111
      %v1393 = vpop.permute.xlu0 %1392
      %1394 = vrot.lane.b32.xlu0 %v1359, 111
      %v1395 = vpop.permute.xlu0 %1394
      %1396 = vrot.lane.b32.xlu0 %v1391, 111
      %v1397 = vpop.permute.xlu0 %1396
      %v1398 = vsel %vm362, %v1393, %v1395
      %v1399 = vsel %vm362, %v1395, %v1397
      %1402 = vst [vmem:[#allocation2 + $0x1a0] sm:$0xf0] %v1398
      %1403 = vst [vmem:[#allocation2 + $0x1a8] sm:$0xf0] %v1399
      %1404 = vst [vmem:[#allocation2 + $0x1e0] sm:$0xf] %v1386
      %1405 = vst [vmem:[#allocation2 + $0x1e8] sm:$0xf] %v1387
      %v1406 = vld [vmem:[%s1026] sm:$0xff]
      %v1407 = vld [vmem:[%s1026 + $0x8] sm:$0xf]
      %v1410 = vcombine.high %v1406, %v1406
      %1411 = vrot.lane.b32.xlu0 %v1406, 96
      %v1412 = vpop.permute.xlu0 %1411
      %1413 = vrot.lane.b32.xlu0 %v1410, 96
      %v1414 = vpop.permute.xlu0 %1413
      %1415 = vrot.lane.b32.xlu0 %v1407, 96
      %v1416 = vpop.permute.xlu0 %1415
      %v1417 = vsel %vm388, %v1412, %v1414
      %v1418 = vsel %vm388, %v1414, %v1416
      %v1421 = vsel %vm270, 0.0, %v1417
      %v1422 = vsel %vm271, 0.0, %v1418
      %1423 = vrot.lane.b32.xlu0 %v1406, 94
      %v1424 = vpop.permute.xlu0 %1423
      %1425 = vrot.lane.b32.xlu0 %v1410, 94
      %v1426 = vpop.permute.xlu0 %1425
      %1427 = vrot.lane.b32.xlu0 %v1407, 94
      %v1428 = vpop.permute.xlu0 %1427
      %v1429 = vsel %vm401, %v1424, %v1426
      %v1430 = vsel %vm401, %v1426, %v1428
      %v1433 = vsel %vm272, 0.0, %v1429
      %v1434 = vsel %vm273, 0.0, %v1430
      %v1437 = vrot.slane %v1421, 4
      %v1438 = vrot.slane %v1422, 4
      %1441 = vst [vmem:[#allocation2 + $0x1e0] sm:$0xf0] %v1437
      %1442 = vst [vmem:[#allocation2 + $0x1e8] sm:$0xf0] %v1438
      %1443 = vrot.lane.b32.xlu0 %v1406, 95
      %v1444 = vpop.permute.xlu0 %1443
      %1445 = vrot.lane.b32.xlu0 %v1410, 95
      %v1446 = vpop.permute.xlu0 %1445
      %1447 = vrot.lane.b32.xlu0 %v1407, 95
      %v1448 = vpop.permute.xlu0 %1447
      %v1449 = vsel %vm418, %v1444, %v1446
      %v1450 = vsel %vm418, %v1446, %v1448
      %1453 = vst [vmem:[#allocation2 + $0x220] sm:$0xf] %v1449
      %1454 = vst [vmem:[#allocation2 + $0x228] sm:$0xf] %v1450
      %v1457 = vrot.slane %v1433, 4
      %v1458 = vrot.slane %v1434, 4
      %1461 = vst [vmem:[#allocation2 + $0x220] sm:$0xf0] %v1457
      %1462 = vst [vmem:[#allocation2 + $0x228] sm:$0xf0] %v1458
      %s1463 = sadd.s32 %s242, 4
      %s1464 = smul.u32 %s1463, 3
      %s1465 = smul.addr %s1464, 4
      %s1466 = scalar_lea.vmem %s223, %s1465
      %v1467 = vld [vmem:[%s1466] sm:$0xff]
      %v1468 = vld [vmem:[%s1466 + $0x8] sm:$0xf]
      %v1470 = vcombine.high %v1467, %v1467
      %v1472 = vsel %vm270, 0.0, %v1467
      %v1473 = vsel %vm271, 0.0, %v1470
      %1475 = vrot.lane.b32.xlu0 %v1467, 126
      %v1476 = vpop.permute.xlu0 %1475
      %1477 = vrot.lane.b32.xlu0 %v1470, 126
      %v1478 = vpop.permute.xlu0 %1477
      %1479 = vrot.lane.b32.xlu0 %v1468, 126
      %v1480 = vpop.permute.xlu0 %1479
      %v1481 = vsel %vm291, %v1476, %v1478
      %v1482 = vsel %vm291, %v1478, %v1480
      %v1485 = vsel %vm272, 0.0, %v1481
      %v1486 = vsel %vm273, 0.0, %v1482
      %1487 = vst [vmem:[#allocation2 + $0x260] sm:$0xf] %v1472
      %1488 = vst [vmem:[#allocation2 + $0x268] sm:$0xf] %v1473
      %v1489 = vcombine.low %v1467, %v1467
      %v1490 = vcombine.low %v1468, %v1468
      %1491 = vrot.lane.b32.xlu0 %v1489, 127
      %v1492 = vpop.permute.xlu0 %1491
      %1493 = vrot.lane.b32.xlu0 %v1467, 127
      %v1494 = vpop.permute.xlu0 %1493
      %1495 = vrot.lane.b32.xlu0 %v1490, 127
      %v1496 = vpop.permute.xlu0 %1495
      %v1497 = vsel %vm308, %v1492, %v1494
      %v1498 = vsel %vm308, %v1494, %v1496
      %1501 = vst [vmem:[#allocation2 + $0x260] sm:$0xf0] %v1497
      %1502 = vst [vmem:[#allocation2 + $0x268] sm:$0xf0] %v1498
      %1503 = vst [vmem:[#allocation2 + $0x2a0] sm:$0xf] %v1485
      %1504 = vst [vmem:[#allocation2 + $0x2a8] sm:$0xf] %v1486
      %v1505 = vld [vmem:[%s1466] sm:$0xff]
      %v1506 = vld [vmem:[%s1466 + $0x8] sm:$0xf]
      %v1509 = vcombine.high %v1505, %v1505
      %1510 = vrot.lane.b32.xlu0 %v1505, 112
      %v1511 = vpop.permute.xlu0 %1510
      %1512 = vrot.lane.b32.xlu0 %v1509, 112
      %v1513 = vpop.permute.xlu0 %1512
      %1514 = vrot.lane.b32.xlu0 %v1506, 112
      %v1515 = vpop.permute.xlu0 %1514
      %v1516 = vsel %vm328, %v1511, %v1513
      %v1517 = vsel %vm328, %v1513, %v1515
      %v1520 = vsel %vm270, 0.0, %v1516
      %v1521 = vsel %vm271, 0.0, %v1517
      %1522 = vrot.lane.b32.xlu0 %v1505, 110
      %v1523 = vpop.permute.xlu0 %1522
      %1524 = vrot.lane.b32.xlu0 %v1509, 110
      %v1525 = vpop.permute.xlu0 %1524
      %1526 = vrot.lane.b32.xlu0 %v1506, 110
      %v1527 = vpop.permute.xlu0 %1526
      %v1528 = vsel %vm341, %v1523, %v1525
      %v1529 = vsel %vm341, %v1525, %v1527
      %v1532 = vsel %vm272, 0.0, %v1528
      %v1533 = vsel %vm273, 0.0, %v1529
      %v1536 = vrot.slane %v1520, 4
      %v1537 = vrot.slane %v1521, 4
      %1540 = vst [vmem:[#allocation2 + $0x2a0] sm:$0xf0] %v1536
      %1541 = vst [vmem:[#allocation2 + $0x2a8] sm:$0xf0] %v1537
      %1542 = vrot.lane.b32.xlu0 %v1505, 111
      %v1543 = vpop.permute.xlu0 %1542
      %1544 = vrot.lane.b32.xlu0 %v1509, 111
      %v1545 = vpop.permute.xlu0 %1544
      %1546 = vrot.lane.b32.xlu0 %v1506, 111
      %v1547 = vpop.permute.xlu0 %1546
      %v1548 = vsel %vm362, %v1543, %v1545
      %v1549 = vsel %vm362, %v1545, %v1547
      %1552 = vst [vmem:[#allocation2 + $0x2e0] sm:$0xf] %v1548
      %1553 = vst [vmem:[#allocation2 + $0x2e8] sm:$0xf] %v1549
      %v1556 = vrot.slane %v1532, 4
      %v1557 = vrot.slane %v1533, 4
      %1560 = vst [vmem:[#allocation2 + $0x2e0] sm:$0xf0] %v1556
      %1561 = vst [vmem:[#allocation2 + $0x2e8] sm:$0xf0] %v1557
      %v1562 = vld [vmem:[%s1466] sm:$0xff]
      %v1563 = vld [vmem:[%s1466 + $0x8] sm:$0xf]
      %v1566 = vcombine.high %v1562, %v1562
      %1567 = vrot.lane.b32.xlu0 %v1562, 96
      %v1568 = vpop.permute.xlu0 %1567
      %1569 = vrot.lane.b32.xlu0 %v1566, 96
      %v1570 = vpop.permute.xlu0 %1569
      %1571 = vrot.lane.b32.xlu0 %v1563, 96
      %v1572 = vpop.permute.xlu0 %1571
      %v1573 = vsel %vm388, %v1568, %v1570
      %v1574 = vsel %vm388, %v1570, %v1572
      %v1577 = vsel %vm270, 0.0, %v1573
      %v1578 = vsel %vm271, 0.0, %v1574
      %1579 = vrot.lane.b32.xlu0 %v1562, 94
      %v1580 = vpop.permute.xlu0 %1579
      %1581 = vrot.lane.b32.xlu0 %v1566, 94
      %v1582 = vpop.permute.xlu0 %1581
      %1583 = vrot.lane.b32.xlu0 %v1563, 94
      %v1584 = vpop.permute.xlu0 %1583
      %v1585 = vsel %vm401, %v1580, %v1582
      %v1586 = vsel %vm401, %v1582, %v1584
      %v1589 = vsel %vm272, 0.0, %v1585
      %v1590 = vsel %vm273, 0.0, %v1586
      %1591 = vst [vmem:[#allocation2 + $0x320] sm:$0xf] %v1577
      %1592 = vst [vmem:[#allocation2 + $0x328] sm:$0xf] %v1578
      %v1593 = vcombine.low %v1562, %v1562
      %v1594 = vcombine.low %v1563, %v1563
      %1595 = vrot.lane.b32.xlu0 %v1593, 95
      %v1596 = vpop.permute.xlu0 %1595
      %1597 = vrot.lane.b32.xlu0 %v1562, 95
      %v1598 = vpop.permute.xlu0 %1597
      %1599 = vrot.lane.b32.xlu0 %v1594, 95
      %v1600 = vpop.permute.xlu0 %1599
      %v1601 = vsel %vm418, %v1596, %v1598
      %v1602 = vsel %vm418, %v1598, %v1600
      %1605 = vst [vmem:[#allocation2 + $0x320] sm:$0xf0] %v1601
      %1606 = vst [vmem:[#allocation2 + $0x328] sm:$0xf0] %v1602
      %1607 = vst [vmem:[#allocation2 + $0x360] sm:$0xf] %v1589
      %1608 = vst [vmem:[#allocation2 + $0x368] sm:$0xf] %v1590
      %v1609 = vld [vmem:[%s1026] sm:$0xff]
      %v1610 = vld [vmem:[%s1026 + $0x8] sm:$0xf]
      %v1612 = vcombine.high %v1609, %v1609
      %v1614 = vsel %vm270, 0.0, %v1609
      %v1615 = vsel %vm271, 0.0, %v1612
      %1617 = vrot.lane.b32.xlu0 %v1609, 126
      %v1618 = vpop.permute.xlu0 %1617
      %1619 = vrot.lane.b32.xlu0 %v1612, 126
      %v1620 = vpop.permute.xlu0 %1619
      %1621 = vrot.lane.b32.xlu0 %v1610, 126
      %v1622 = vpop.permute.xlu0 %1621
      %v1623 = vsel %vm291, %v1618, %v1620
      %v1624 = vsel %vm291, %v1620, %v1622
      %v1627 = vsel %vm272, 0.0, %v1623
      %v1628 = vsel %vm273, 0.0, %v1624
      %1629 = vst [vmem:[#allocation2 + $0x30] sm:$0xf] %v1614
      %1630 = vst [vmem:[#allocation2 + $0x38] sm:$0xf] %v1615
      %v1631 = vcombine.low %v1609, %v1609
      %v1632 = vcombine.low %v1610, %v1610
      %1633 = vrot.lane.b32.xlu0 %v1631, 127
      %v1634 = vpop.permute.xlu0 %1633
      %1635 = vrot.lane.b32.xlu0 %v1609, 127
      %v1636 = vpop.permute.xlu0 %1635
      %1637 = vrot.lane.b32.xlu0 %v1632, 127
      %v1638 = vpop.permute.xlu0 %1637
      %v1639 = vsel %vm308, %v1634, %v1636
      %v1640 = vsel %vm308, %v1636, %v1638
      %1643 = vst [vmem:[#allocation2 + $0x30] sm:$0xf0] %v1639
      %1644 = vst [vmem:[#allocation2 + $0x38] sm:$0xf0] %v1640
      %1645 = vst [vmem:[#allocation2 + $0x70] sm:$0xf] %v1627
      %1646 = vst [vmem:[#allocation2 + $0x78] sm:$0xf] %v1628
      %v1647 = vld [vmem:[%s1026] sm:$0xff]
      %v1648 = vld [vmem:[%s1026 + $0x8] sm:$0xf]
      %v1651 = vcombine.high %v1647, %v1647
      %1652 = vrot.lane.b32.xlu0 %v1647, 112
      %v1653 = vpop.permute.xlu0 %1652
      %1654 = vrot.lane.b32.xlu0 %v1651, 112
      %v1655 = vpop.permute.xlu0 %1654
      %1656 = vrot.lane.b32.xlu0 %v1648, 112
      %v1657 = vpop.permute.xlu0 %1656
      %v1658 = vsel %vm328, %v1653, %v1655
      %v1659 = vsel %vm328, %v1655, %v1657
      %v1662 = vsel %vm270, 0.0, %v1658
      %v1663 = vsel %vm271, 0.0, %v1659
      %1664 = vrot.lane.b32.xlu0 %v1647, 110
      %v1665 = vpop.permute.xlu0 %1664
      %1666 = vrot.lane.b32.xlu0 %v1651, 110
      %v1667 = vpop.permute.xlu0 %1666
      %1668 = vrot.lane.b32.xlu0 %v1648, 110
      %v1669 = vpop.permute.xlu0 %1668
      %v1670 = vsel %vm341, %v1665, %v1667
      %v1671 = vsel %vm341, %v1667, %v1669
      %v1674 = vsel %vm272, 0.0, %v1670
      %v1675 = vsel %vm273, 0.0, %v1671
      %v1678 = vrot.slane %v1662, 4
      %v1679 = vrot.slane %v1663, 4
      %1682 = vst [vmem:[#allocation2 + $0x70] sm:$0xf0] %v1678
      %1683 = vst [vmem:[#allocation2 + $0x78] sm:$0xf0] %v1679
      %1684 = vrot.lane.b32.xlu0 %v1647, 111
      %v1685 = vpop.permute.xlu0 %1684
      %1686 = vrot.lane.b32.xlu0 %v1651, 111
      %v1687 = vpop.permute.xlu0 %1686
      %1688 = vrot.lane.b32.xlu0 %v1648, 111
      %v1689 = vpop.permute.xlu0 %1688
      %v1690 = vsel %vm362, %v1685, %v1687
      %v1691 = vsel %vm362, %v1687, %v1689
      %1694 = vst [vmem:[#allocation2 + $0xb0] sm:$0xf] %v1690
      %1695 = vst [vmem:[#allocation2 + $0xb8] sm:$0xf] %v1691
      %v1698 = vrot.slane %v1674, 4
      %v1699 = vrot.slane %v1675, 4
      %1702 = vst [vmem:[#allocation2 + $0xb0] sm:$0xf0] %v1698
      %1703 = vst [vmem:[#allocation2 + $0xb8] sm:$0xf0] %v1699
      %v1704 = vld [vmem:[%s1026] sm:$0xff]
      %v1705 = vld [vmem:[%s1026 + $0x8] sm:$0xf]
      %v1708 = vcombine.high %v1704, %v1704
      %1709 = vrot.lane.b32.xlu0 %v1704, 96
      %v1710 = vpop.permute.xlu0 %1709
      %1711 = vrot.lane.b32.xlu0 %v1708, 96
      %v1712 = vpop.permute.xlu0 %1711
      %1713 = vrot.lane.b32.xlu0 %v1705, 96
      %v1714 = vpop.permute.xlu0 %1713
      %v1715 = vsel %vm388, %v1710, %v1712
      %v1716 = vsel %vm388, %v1712, %v1714
      %v1719 = vsel %vm270, 0.0, %v1715
      %v1720 = vsel %vm271, 0.0, %v1716
      %1721 = vrot.lane.b32.xlu0 %v1704, 94
      %v1722 = vpop.permute.xlu0 %1721
      %1723 = vrot.lane.b32.xlu0 %v1708, 94
      %v1724 = vpop.permute.xlu0 %1723
      %1725 = vrot.lane.b32.xlu0 %v1705, 94
      %v1726 = vpop.permute.xlu0 %1725
      %v1727 = vsel %vm401, %v1722, %v1724
      %v1728 = vsel %vm401, %v1724, %v1726
      %v1731 = vsel %vm272, 0.0, %v1727
      %v1732 = vsel %vm273, 0.0, %v1728
      %1733 = vst [vmem:[#allocation2 + $0xf0] sm:$0xf] %v1719
      %1734 = vst [vmem:[#allocation2 + $0xf8] sm:$0xf] %v1720
      %v1735 = vcombine.low %v1704, %v1704
      %v1736 = vcombine.low %v1705, %v1705
      %1737 = vrot.lane.b32.xlu0 %v1735, 95
      %v1738 = vpop.permute.xlu0 %1737
      %1739 = vrot.lane.b32.xlu0 %v1704, 95
      %v1740 = vpop.permute.xlu0 %1739
      %1741 = vrot.lane.b32.xlu0 %v1736, 95
      %v1742 = vpop.permute.xlu0 %1741
      %v1743 = vsel %vm418, %v1738, %v1740
      %v1744 = vsel %vm418, %v1740, %v1742
      %1747 = vst [vmem:[#allocation2 + $0xf0] sm:$0xf0] %v1743
      %1748 = vst [vmem:[#allocation2 + $0xf8] sm:$0xf0] %v1744
      %1749 = vst [vmem:[#allocation2 + $0x130] sm:$0xf] %v1731
      %1750 = vst [vmem:[#allocation2 + $0x138] sm:$0xf] %v1732
      %v1751 = vld [vmem:[%s1466] sm:$0xff]
      %v1752 = vld [vmem:[%s1466 + $0x8] sm:$0xf]
      %v1754 = vcombine.high %v1751, %v1751
      %v1756 = vsel %vm270, 0.0, %v1751
      %v1757 = vsel %vm271, 0.0, %v1754
      %1759 = vrot.lane.b32.xlu0 %v1751, 126
      %v1760 = vpop.permute.xlu0 %1759
      %1761 = vrot.lane.b32.xlu0 %v1754, 126
      %v1762 = vpop.permute.xlu0 %1761
      %1763 = vrot.lane.b32.xlu0 %v1752, 126
      %v1764 = vpop.permute.xlu0 %1763
      %v1765 = vsel %vm291, %v1760, %v1762
      %v1766 = vsel %vm291, %v1762, %v1764
      %v1769 = vsel %vm272, 0.0, %v1765
      %v1770 = vsel %vm273, 0.0, %v1766
      %v1773 = vrot.slane %v1756, 4
      %v1774 = vrot.slane %v1757, 4
      %1777 = vst [vmem:[#allocation2 + $0x130] sm:$0xf0] %v1773
      %1778 = vst [vmem:[#allocation2 + $0x138] sm:$0xf0] %v1774
      %1779 = vrot.lane.b32.xlu0 %v1751, 127
      %v1780 = vpop.permute.xlu0 %1779
      %1781 = vrot.lane.b32.xlu0 %v1754, 127
      %v1782 = vpop.permute.xlu0 %1781
      %1783 = vrot.lane.b32.xlu0 %v1752, 127
      %v1784 = vpop.permute.xlu0 %1783
      %v1785 = vsel %vm308, %v1780, %v1782
      %v1786 = vsel %vm308, %v1782, %v1784
      %1789 = vst [vmem:[#allocation2 + $0x170] sm:$0xf] %v1785
      %1790 = vst [vmem:[#allocation2 + $0x178] sm:$0xf] %v1786
      %v1793 = vrot.slane %v1769, 4
      %v1794 = vrot.slane %v1770, 4
      %1797 = vst [vmem:[#allocation2 + $0x170] sm:$0xf0] %v1793
      %1798 = vst [vmem:[#allocation2 + $0x178] sm:$0xf0] %v1794
      %v1799 = vld [vmem:[%s1466] sm:$0xff]
      %v1800 = vld [vmem:[%s1466 + $0x8] sm:$0xf]
      %v1803 = vcombine.high %v1799, %v1799
      %1804 = vrot.lane.b32.xlu0 %v1799, 112
      %v1805 = vpop.permute.xlu0 %1804
      %1806 = vrot.lane.b32.xlu0 %v1803, 112
      %v1807 = vpop.permute.xlu0 %1806
      %1808 = vrot.lane.b32.xlu0 %v1800, 112
      %v1809 = vpop.permute.xlu0 %1808
      %v1810 = vsel %vm328, %v1805, %v1807
      %v1811 = vsel %vm328, %v1807, %v1809
      %v1814 = vsel %vm270, 0.0, %v1810
      %v1815 = vsel %vm271, 0.0, %v1811
      %1816 = vrot.lane.b32.xlu0 %v1799, 110
      %v1817 = vpop.permute.xlu0 %1816
      %1818 = vrot.lane.b32.xlu0 %v1803, 110
      %v1819 = vpop.permute.xlu0 %1818
      %1820 = vrot.lane.b32.xlu0 %v1800, 110
      %v1821 = vpop.permute.xlu0 %1820
      %v1822 = vsel %vm341, %v1817, %v1819
      %v1823 = vsel %vm341, %v1819, %v1821
      %v1826 = vsel %vm272, 0.0, %v1822
      %v1827 = vsel %vm273, 0.0, %v1823
      %1828 = vst [vmem:[#allocation2 + $0x1b0] sm:$0xf] %v1814
      %1829 = vst [vmem:[#allocation2 + $0x1b8] sm:$0xf] %v1815
      %v1830 = vcombine.low %v1799, %v1799
      %v1831 = vcombine.low %v1800, %v1800
      %1832 = vrot.lane.b32.xlu0 %v1830, 111
      %v1833 = vpop.permute.xlu0 %1832
      %1834 = vrot.lane.b32.xlu0 %v1799, 111
      %v1835 = vpop.permute.xlu0 %1834
      %1836 = vrot.lane.b32.xlu0 %v1831, 111
      %v1837 = vpop.permute.xlu0 %1836
      %v1838 = vsel %vm362, %v1833, %v1835
      %v1839 = vsel %vm362, %v1835, %v1837
      %1842 = vst [vmem:[#allocation2 + $0x1b0] sm:$0xf0] %v1838
      %1843 = vst [vmem:[#allocation2 + $0x1b8] sm:$0xf0] %v1839
      %1844 = vst [vmem:[#allocation2 + $0x1f0] sm:$0xf] %v1826
      %1845 = vst [vmem:[#allocation2 + $0x1f8] sm:$0xf] %v1827
      %v1846 = vld [vmem:[%s1466] sm:$0xff]
      %v1847 = vld [vmem:[%s1466 + $0x8] sm:$0xf]
      %v1850 = vcombine.high %v1846, %v1846
      %1851 = vrot.lane.b32.xlu0 %v1846, 96
      %v1852 = vpop.permute.xlu0 %1851
      %1853 = vrot.lane.b32.xlu0 %v1850, 96
      %v1854 = vpop.permute.xlu0 %1853
      %1855 = vrot.lane.b32.xlu0 %v1847, 96
      %v1856 = vpop.permute.xlu0 %1855
      %v1857 = vsel %vm388, %v1852, %v1854
      %v1858 = vsel %vm388, %v1854, %v1856
      %v1861 = vsel %vm270, 0.0, %v1857
      %v1862 = vsel %vm271, 0.0, %v1858
      %1863 = vrot.lane.b32.xlu0 %v1846, 94
      %v1864 = vpop.permute.xlu0 %1863
      %1865 = vrot.lane.b32.xlu0 %v1850, 94
      %v1866 = vpop.permute.xlu0 %1865
      %1867 = vrot.lane.b32.xlu0 %v1847, 94
      %v1868 = vpop.permute.xlu0 %1867
      %v1869 = vsel %vm401, %v1864, %v1866
      %v1870 = vsel %vm401, %v1866, %v1868
      %v1873 = vsel %vm272, 0.0, %v1869
      %v1874 = vsel %vm273, 0.0, %v1870
      %v1877 = vrot.slane %v1861, 4
      %v1878 = vrot.slane %v1862, 4
      %1881 = vst [vmem:[#allocation2 + $0x1f0] sm:$0xf0] %v1877
      %1882 = vst [vmem:[#allocation2 + $0x1f8] sm:$0xf0] %v1878
      %1883 = vrot.lane.b32.xlu0 %v1846, 95
      %v1884 = vpop.permute.xlu0 %1883
      %1885 = vrot.lane.b32.xlu0 %v1850, 95
      %v1886 = vpop.permute.xlu0 %1885
      %1887 = vrot.lane.b32.xlu0 %v1847, 95
      %v1888 = vpop.permute.xlu0 %1887
      %v1889 = vsel %vm418, %v1884, %v1886
      %v1890 = vsel %vm418, %v1886, %v1888
      %1893 = vst [vmem:[#allocation2 + $0x230] sm:$0xf] %v1889
      %1894 = vst [vmem:[#allocation2 + $0x238] sm:$0xf] %v1890
      %v1897 = vrot.slane %v1873, 4
      %v1898 = vrot.slane %v1874, 4
      %1901 = vst [vmem:[#allocation2 + $0x230] sm:$0xf0] %v1897
      %1902 = vst [vmem:[#allocation2 + $0x238] sm:$0xf0] %v1898
      %s1903 = sadd.s32 %s242, 5
      %s1904 = smul.u32 %s1903, 3
      %s1905 = smul.addr %s1904, 4
      %s1906 = scalar_lea.vmem %s223, %s1905
      %v1907 = vld [vmem:[%s1906] sm:$0xff]
      %v1908 = vld [vmem:[%s1906 + $0x8] sm:$0xf]
      %v1910 = vcombine.high %v1907, %v1907
      %v1912 = vsel %vm270, 0.0, %v1907
      %v1913 = vsel %vm271, 0.0, %v1910
      %1915 = vrot.lane.b32.xlu0 %v1907, 126
      %v1916 = vpop.permute.xlu0 %1915
      %1917 = vrot.lane.b32.xlu0 %v1910, 126
      %v1918 = vpop.permute.xlu0 %1917
      %1919 = vrot.lane.b32.xlu0 %v1908, 126
      %v1920 = vpop.permute.xlu0 %1919
      %v1921 = vsel %vm291, %v1916, %v1918
      %v1922 = vsel %vm291, %v1918, %v1920
      %v1925 = vsel %vm272, 0.0, %v1921
      %v1926 = vsel %vm273, 0.0, %v1922
      %1927 = vst [vmem:[#allocation2 + $0x270] sm:$0xf] %v1912
      %1928 = vst [vmem:[#allocation2 + $0x278] sm:$0xf] %v1913
      %v1929 = vcombine.low %v1907, %v1907
      %v1930 = vcombine.low %v1908, %v1908
      %1931 = vrot.lane.b32.xlu0 %v1929, 127
      %v1932 = vpop.permute.xlu0 %1931
      %1933 = vrot.lane.b32.xlu0 %v1907, 127
      %v1934 = vpop.permute.xlu0 %1933
      %1935 = vrot.lane.b32.xlu0 %v1930, 127
      %v1936 = vpop.permute.xlu0 %1935
      %v1937 = vsel %vm308, %v1932, %v1934
      %v1938 = vsel %vm308, %v1934, %v1936
      %1941 = vst [vmem:[#allocation2 + $0x270] sm:$0xf0] %v1937
      %1942 = vst [vmem:[#allocation2 + $0x278] sm:$0xf0] %v1938
      %1943 = vst [vmem:[#allocation2 + $0x2b0] sm:$0xf] %v1925
      %1944 = vst [vmem:[#allocation2 + $0x2b8] sm:$0xf] %v1926
      %v1945 = vld [vmem:[%s1906] sm:$0xff]
      %v1946 = vld [vmem:[%s1906 + $0x8] sm:$0xf]
      %v1949 = vcombine.high %v1945, %v1945
      %1950 = vrot.lane.b32.xlu0 %v1945, 112
      %v1951 = vpop.permute.xlu0 %1950
      %1952 = vrot.lane.b32.xlu0 %v1949, 112
      %v1953 = vpop.permute.xlu0 %1952
      %1954 = vrot.lane.b32.xlu0 %v1946, 112
      %v1955 = vpop.permute.xlu0 %1954
      %v1956 = vsel %vm328, %v1951, %v1953
      %v1957 = vsel %vm328, %v1953, %v1955
      %v1960 = vsel %vm270, 0.0, %v1956
      %v1961 = vsel %vm271, 0.0, %v1957
      %1962 = vrot.lane.b32.xlu0 %v1945, 110
      %v1963 = vpop.permute.xlu0 %1962
      %1964 = vrot.lane.b32.xlu0 %v1949, 110
      %v1965 = vpop.permute.xlu0 %1964
      %1966 = vrot.lane.b32.xlu0 %v1946, 110
      %v1967 = vpop.permute.xlu0 %1966
      %v1968 = vsel %vm341, %v1963, %v1965
      %v1969 = vsel %vm341, %v1965, %v1967
      %v1972 = vsel %vm272, 0.0, %v1968
      %v1973 = vsel %vm273, 0.0, %v1969
      %v1976 = vrot.slane %v1960, 4
      %v1977 = vrot.slane %v1961, 4
      %1980 = vst [vmem:[#allocation2 + $0x2b0] sm:$0xf0] %v1976
      %1981 = vst [vmem:[#allocation2 + $0x2b8] sm:$0xf0] %v1977
      %1982 = vrot.lane.b32.xlu0 %v1945, 111
      %v1983 = vpop.permute.xlu0 %1982
      %1984 = vrot.lane.b32.xlu0 %v1949, 111
      %v1985 = vpop.permute.xlu0 %1984
      %1986 = vrot.lane.b32.xlu0 %v1946, 111
      %v1987 = vpop.permute.xlu0 %1986
      %v1988 = vsel %vm362, %v1983, %v1985
      %v1989 = vsel %vm362, %v1985, %v1987
      %1992 = vst [vmem:[#allocation2 + $0x2f0] sm:$0xf] %v1988
      %1993 = vst [vmem:[#allocation2 + $0x2f8] sm:$0xf] %v1989
      %v1996 = vrot.slane %v1972, 4
      %v1997 = vrot.slane %v1973, 4
      %2000 = vst [vmem:[#allocation2 + $0x2f0] sm:$0xf0] %v1996
      %2001 = vst [vmem:[#allocation2 + $0x2f8] sm:$0xf0] %v1997
      %v2002 = vld [vmem:[%s1906] sm:$0xff]
      %v2003 = vld [vmem:[%s1906 + $0x8] sm:$0xf]
      %v2006 = vcombine.high %v2002, %v2002
      %2007 = vrot.lane.b32.xlu0 %v2002, 96
      %v2008 = vpop.permute.xlu0 %2007
      %2009 = vrot.lane.b32.xlu0 %v2006, 96
      %v2010 = vpop.permute.xlu0 %2009
      %2011 = vrot.lane.b32.xlu0 %v2003, 96
      %v2012 = vpop.permute.xlu0 %2011
      %v2013 = vsel %vm388, %v2008, %v2010
      %v2014 = vsel %vm388, %v2010, %v2012
      %v2017 = vsel %vm270, 0.0, %v2013
      %v2018 = vsel %vm271, 0.0, %v2014
      %2019 = vrot.lane.b32.xlu0 %v2002, 94
      %v2020 = vpop.permute.xlu0 %2019
      %2021 = vrot.lane.b32.xlu0 %v2006, 94
      %v2022 = vpop.permute.xlu0 %2021
      %2023 = vrot.lane.b32.xlu0 %v2003, 94
      %v2024 = vpop.permute.xlu0 %2023
      %v2025 = vsel %vm401, %v2020, %v2022
      %v2026 = vsel %vm401, %v2022, %v2024
      %v2029 = vsel %vm272, 0.0, %v2025
      %v2030 = vsel %vm273, 0.0, %v2026
      %2031 = vst [vmem:[#allocation2 + $0x330] sm:$0xf] %v2017
      %2032 = vst [vmem:[#allocation2 + $0x338] sm:$0xf] %v2018
      %v2033 = vcombine.low %v2002, %v2002
      %v2034 = vcombine.low %v2003, %v2003
      %2035 = vrot.lane.b32.xlu0 %v2033, 95
      %v2036 = vpop.permute.xlu0 %2035
      %2037 = vrot.lane.b32.xlu0 %v2002, 95
      %v2038 = vpop.permute.xlu0 %2037
      %2039 = vrot.lane.b32.xlu0 %v2034, 95
      %v2040 = vpop.permute.xlu0 %2039
      %v2041 = vsel %vm418, %v2036, %v2038
      %v2042 = vsel %vm418, %v2038, %v2040
      %2045 = vst [vmem:[#allocation2 + $0x330] sm:$0xf0] %v2041
      %2046 = vst [vmem:[#allocation2 + $0x338] sm:$0xf0] %v2042
      %2047 = vst [vmem:[#allocation2 + $0x370] sm:$0xf] %v2029
      %2048 = vst [vmem:[#allocation2 + $0x378] sm:$0xf] %v2030
      %v2049 = vld [vmem:[%s1] sm:$0xff]
      %v2050 = vld [vmem:[#allocation2] sm:$0xff]
      %v2051 = vld [vmem:[#allocation2 + $0x8] sm:$0xff]
      %v2052 = vld [vmem:[#allocation2 + $0x10] sm:$0xff]
      %v2053 = vld [vmem:[#allocation2 + $0x18] sm:$0xff]
      %v2054 = vld [vmem:[#allocation2 + $0x20] sm:$0xff]
      %v2055 = vld [vmem:[#allocation2 + $0x28] sm:$0xff]
      %v2056 = vld [vmem:[#allocation2 + $0x30] sm:$0xff]
      %v2057 = vld [vmem:[#allocation2 + $0x38] sm:$0xff]
      %v2058 = vld [vmem:[#allocation2 + $0x40] sm:$0xff]
      %v2059 = vld [vmem:[#allocation2 + $0x48] sm:$0xff]
      %v2060 = vld [vmem:[#allocation2 + $0x50] sm:$0xff]
      %v2061 = vld [vmem:[#allocation2 + $0x58] sm:$0xff]
      %v2062 = vld [vmem:[#allocation2 + $0x60] sm:$0xff]
      %v2063 = vld [vmem:[#allocation2 + $0x68] sm:$0xff]
      %v2064 = vld [vmem:[#allocation2 + $0x70] sm:$0xff]
      %v2065 = vld [vmem:[#allocation2 + $0x78] sm:$0xff]
      %v2066 = vld [vmem:[#allocation2 + $0x80] sm:$0xff]
      %v2067 = vld [vmem:[#allocation2 + $0x88] sm:$0xff]
      %v2068 = vld [vmem:[#allocation2 + $0x90] sm:$0xff]
      %v2069 = vld [vmem:[#allocation2 + $0x98] sm:$0xff]
      %v2070 = vld [vmem:[#allocation2 + $0xa0] sm:$0xff]
      %v2071 = vld [vmem:[#allocation2 + $0xa8] sm:$0xff]
      %v2072 = vld [vmem:[#allocation2 + $0xb0] sm:$0xff]
      %v2073 = vld [vmem:[#allocation2 + $0xb8] sm:$0xff]
      %v2074 = vld [vmem:[#allocation2 + $0xc0] sm:$0xff]
      %v2075 = vld [vmem:[#allocation2 + $0xc8] sm:$0xff]
      %v2076 = vld [vmem:[#allocation2 + $0xd0] sm:$0xff]
      %v2077 = vld [vmem:[#allocation2 + $0xd8] sm:$0xff]
      %v2078 = vld [vmem:[#allocation2 + $0xe0] sm:$0xff]
      %v2079 = vld [vmem:[#allocation2 + $0xe8] sm:$0xff]
      %v2080 = vld [vmem:[#allocation2 + $0xf0] sm:$0xff]
      %v2081 = vld [vmem:[#allocation2 + $0xf8] sm:$0xff]
      %v2082 = vld [vmem:[#allocation2 + $0x100] sm:$0xff]
      %v2083 = vld [vmem:[#allocation2 + $0x108] sm:$0xff]
      %v2084 = vld [vmem:[#allocation2 + $0x110] sm:$0xff]
      %v2085 = vld [vmem:[#allocation2 + $0x118] sm:$0xff]
      %v2086 = vld [vmem:[#allocation2 + $0x120] sm:$0xff]
      %v2087 = vld [vmem:[#allocation2 + $0x128] sm:$0xff]
      %v2088 = vld [vmem:[#allocation2 + $0x130] sm:$0xff]
      %v2089 = vld [vmem:[#allocation2 + $0x138] sm:$0xff]
      %v2090 = vld [vmem:[#allocation2 + $0x140] sm:$0xff]
      %v2091 = vld [vmem:[#allocation2 + $0x148] sm:$0xff]
      %v2092 = vld [vmem:[#allocation2 + $0x150] sm:$0xff]
      %v2093 = vld [vmem:[#allocation2 + $0x158] sm:$0xff]
      %v2094 = vld [vmem:[#allocation2 + $0x160] sm:$0xff]
      %v2095 = vld [vmem:[#allocation2 + $0x168] sm:$0xff]
      %v2096 = vld [vmem:[#allocation2 + $0x170] sm:$0xff]
      %v2097 = vld [vmem:[#allocation2 + $0x178] sm:$0xff]
      %v2098 = vld [vmem:[#allocation2 + $0x180] sm:$0xff]
      %v2099 = vld [vmem:[#allocation2 + $0x188] sm:$0xff]
      %v2100 = vld [vmem:[#allocation2 + $0x190] sm:$0xff]
      %v2101 = vld [vmem:[#allocation2 + $0x198] sm:$0xff]
      %v2102 = vld [vmem:[#allocation2 + $0x1a0] sm:$0xff]
      %v2103 = vld [vmem:[#allocation2 + $0x1a8] sm:$0xff]
      %v2104 = vld [vmem:[#allocation2 + $0x1b0] sm:$0xff]
      %v2105 = vld [vmem:[#allocation2 + $0x1b8] sm:$0xff]
      %v2106 = vld [vmem:[#allocation2 + $0x1c0] sm:$0xff]
      %v2107 = vld [vmem:[#allocation2 + $0x1c8] sm:$0xff]
      %v2108 = vld [vmem:[#allocation2 + $0x1d0] sm:$0xff]
      %v2109 = vld [vmem:[#allocation2 + $0x1d8] sm:$0xff]
      %v2110 = vld [vmem:[#allocation2 + $0x1e0] sm:$0xff]
      %v2111 = vld [vmem:[#allocation2 + $0x1e8] sm:$0xff]
      %v2112 = vld [vmem:[#allocation2 + $0x1f0] sm:$0xff]
      %v2113 = vld [vmem:[#allocation2 + $0x1f8] sm:$0xff]
      %v2114 = vld [vmem:[#allocation2 + $0x200] sm:$0xff]
      %v2115 = vld [vmem:[#allocation2 + $0x208] sm:$0xff]
      %v2116 = vld [vmem:[#allocation2 + $0x210] sm:$0xff]
      %v2117 = vld [vmem:[#allocation2 + $0x218] sm:$0xff]
      %v2118 = vld [vmem:[#allocation2 + $0x220] sm:$0xff]
      %v2119 = vld [vmem:[#allocation2 + $0x228] sm:$0xff]
      %v2120 = vld [vmem:[#allocation2 + $0x230] sm:$0xff]
      %v2121 = vld [vmem:[#allocation2 + $0x238] sm:$0xff]
      %v2122 = vld [vmem:[#allocation2 + $0x240] sm:$0xff]
      %v2123 = vld [vmem:[#allocation2 + $0x248] sm:$0xff]
      %v2124 = vld [vmem:[#allocation2 + $0x250] sm:$0xff]
      %v2125 = vld [vmem:[#allocation2 + $0x258] sm:$0xff]
      %v2126 = vld [vmem:[#allocation2 + $0x260] sm:$0xff]
      %v2127 = vld [vmem:[#allocation2 + $0x268] sm:$0xff]
      %v2128 = vld [vmem:[#allocation2 + $0x270] sm:$0xff]
      %v2129 = vld [vmem:[#allocation2 + $0x278] sm:$0xff]
      %v2130 = vld [vmem:[#allocation2 + $0x280] sm:$0xff]
      %v2131 = vld [vmem:[#allocation2 + $0x288] sm:$0xff]
      %v2132 = vld [vmem:[#allocation2 + $0x290] sm:$0xff]
      %v2133 = vld [vmem:[#allocation2 + $0x298] sm:$0xff]
      %v2134 = vld [vmem:[#allocation2 + $0x2a0] sm:$0xff]
      %v2135 = vld [vmem:[#allocation2 + $0x2a8] sm:$0xff]
      %v2136 = vld [vmem:[#allocation2 + $0x2b0] sm:$0xff]
      %v2137 = vld [vmem:[#allocation2 + $0x2b8] sm:$0xff]
      %v2138 = vld [vmem:[#allocation2 + $0x2c0] sm:$0xff]
      %v2139 = vld [vmem:[#allocation2 + $0x2c8] sm:$0xff]
      %v2140 = vld [vmem:[#allocation2 + $0x2d0] sm:$0xff]
      %v2141 = vld [vmem:[#allocation2 + $0x2d8] sm:$0xff]
      %v2142 = vld [vmem:[#allocation2 + $0x2e0] sm:$0xff]
      %v2143 = vld [vmem:[#allocation2 + $0x2e8] sm:$0xff]
      %v2144 = vld [vmem:[#allocation2 + $0x2f0] sm:$0xff]
      %v2145 = vld [vmem:[#allocation2 + $0x2f8] sm:$0xff]
      %v2146 = vld [vmem:[#allocation2 + $0x300] sm:$0xff]
      %v2147 = vld [vmem:[#allocation2 + $0x308] sm:$0xff]
      %v2148 = vld [vmem:[#allocation2 + $0x310] sm:$0xff]
      %v2149 = vld [vmem:[#allocation2 + $0x318] sm:$0xff]
      %v2150 = vld [vmem:[#allocation2 + $0x320] sm:$0xff]
      %v2151 = vld [vmem:[#allocation2 + $0x328] sm:$0xff]
      %v2152 = vld [vmem:[#allocation2 + $0x330] sm:$0xff]
      %v2153 = vld [vmem:[#allocation2 + $0x338] sm:$0xff]
      %v2154 = vld [vmem:[#allocation2 + $0x340] sm:$0xf]
      %v2155 = vld [vmem:[#allocation2 + $0x348] sm:$0xf]
      %v2156 = vld [vmem:[#allocation2 + $0x350] sm:$0xf]
      %v2157 = vld [vmem:[#allocation2 + $0x358] sm:$0xf]
      %v2158 = vld [vmem:[#allocation2 + $0x360] sm:$0xf]
      %v2159 = vld [vmem:[#allocation2 + $0x368] sm:$0xf]
      %v2160 = vld [vmem:[#allocation2 + $0x370] sm:$0xf]
      %v2161 = vld [vmem:[#allocation2 + $0x378] sm:$0xf]
      %vm2162 = vcmask 883712
      %v2164 = vsel %vm2162, %v2049, 0
      %vm2166 = vcmask 1043456
      %v2168 = vsel %vm2166, %v2154, 0
      %v2171 = vsel %vm2166, %v2155, 0
      %v2174 = vsel %vm2166, %v2156, 0
      %v2177 = vsel %vm2166, %v2157, 0
      %v2180 = vsel %vm2166, %v2158, 0
      %v2183 = vsel %vm2166, %v2159, 0
      %v2186 = vsel %vm2166, %v2160, 0
      %v2189 = vsel %vm2166, %v2161, 0
      %2191 = vmatprep.subr.mxu0 %v2051
      %2192 = vmatpush1.msra.mxu0 %v2050
      %2193 = vmatprep.subr.mxu0 %v2059
      %2194 = vmatpush1.msra.mxu0 %v2058
      %2195 = vmatprep.subr.mxu0 %v2067
      %2196 = vmatpush1.msra.mxu0 %v2066
      %2197 = vmatprep.subr.mxu0 %v2075
      %2198 = vmatpush1.msra.mxu0 %v2074
      %2199 = vmatprep.subr.mxu0 %v2083
      %2200 = vmatpush1.msra.mxu0 %v2082
      %2201 = vmatprep.subr.mxu0 %v2091
      %2202 = vmatpush1.msra.mxu0 %v2090
      %2203 = vmatprep.subr.mxu0 %v2099
      %2204 = vmatpush1.msra.mxu0 %v2098
      %2205 = vmatprep.subr.mxu0 %v2107
      %2206 = vmatpush1.msra.mxu0 %v2106
      %2207 = vmatprep.subr.mxu0 %v2115
      %2208 = vmatpush1.msra.mxu0 %v2114
      %2209 = vmatprep.subr.mxu0 %v2123
      %2210 = vmatpush1.msra.mxu0 %v2122
      %2211 = vmatprep.subr.mxu0 %v2131
      %2212 = vmatpush1.msra.mxu0 %v2130
      %2213 = vmatprep.subr.mxu0 %v2139
      %2214 = vmatpush1.msra.mxu0 %v2138
      %2215 = vmatprep.subr.mxu0 %v2147
      %2216 = vmatpush1.msra.mxu0 %v2146
      %2217 = vmatprep.subr.mxu0 %v2171
      %2218 = vmatpush1.msra.mxu0 %v2168
      %2219 = vmatprep.subr.mxu0 0.0
      %2220 = vmatpush1.msra.mxu0 0.0
      %2221 = vmatprep.subr.mxu0 0.0
      %2222 = vmatpush1.msra.mxu0 0.0
      %2223 = vmatprep.subr.mxu0 0.0
      %2224 = vmatpush1.msra.mxu0 0.0
      %2225 = vmatprep.subr.mxu0 0.0
      %2226 = vmatpush1.msra.mxu0 0.0
      %2227 = vmatprep.subr.mxu0 0.0
      %2228 = vmatpush1.msra.mxu0 0.0
      %2229 = vmatprep.subr.mxu0 0.0
      %2230 = vmatpush1.msra.mxu0 0.0
      %2231 = vmatprep.subr.mxu0 0.0
      %2232 = vmatpush1.msra.mxu0 0.0
      %2233 = vmatprep.subr.mxu0 0.0
      %2234 = vmatpush1.msra.mxu0 0.0
      %2235 = vmatprep.subr.mxu0 0.0
      %2236 = vmatpush1.msra.mxu0 0.0
      %2237 = vmatprep.subr.mxu0 0.0
      %2238 = vmatpush1.msra.mxu0 0.0
      %2239 = vmatprep.subr.mxu0 0.0
      %2240 = vmatpush1.msra.mxu0 0.0
      %2241 = vmatprep.subr.mxu0 0.0
      %2242 = vmatpush1.msra.mxu0 0.0
      %2243 = vmatprep.subr.mxu0 0.0
      %2244 = vmatpush1.msra.mxu0 0.0
      %2245 = vmatprep.subr.mxu0 0.0
      %2246 = vmatpush1.msra.mxu0 0.0
      %2247 = vmatprep.subr.mxu0 0.0
      %2248 = vmatpush1.msra.mxu0 0.0
      %2249 = vmatprep.subr.mxu0 0.0
      %2250 = vmatpush1.msra.mxu0 0.0
      %2251 = vmatprep.subr.mxu0 0.0
      %2252 = vmatpush1.msra.mxu0 0.0
      %2253 = vmatprep.subr.mxu0 0.0
      %2254 = vmatpush1.msra.mxu0 0.0
      %2255 = vmatprep.mubr.f32.mxu0 0.0
      %2256 = vmatmul.mubr.f32.gmra.mrb[0].mxu0 %v2164
      %v2257 = vpop.f32.mrb[0].mxu0
      %v2258 = vadd.f32 0.0, %v2257
      %v2259 = vpop.f32.mrb[0].mxu0
      %v2260 = vadd.f32 0.0, %v2259
      %2261 = vdwg.mxu0
      %2262 = vmatprep.subr.mxu0 %v2053
      %2263 = vmatpush1.msra.mxu0 %v2052
      %2264 = vmatprep.subr.mxu0 %v2061
      %2265 = vmatpush1.msra.mxu0 %v2060
      %2266 = vmatprep.subr.mxu0 %v2069
      %2267 = vmatpush1.msra.mxu0 %v2068
      %2268 = vmatprep.subr.mxu0 %v2077
      %2269 = vmatpush1.msra.mxu0 %v2076
      %2270 = vmatprep.subr.mxu0 %v2085
      %2271 = vmatpush1.msra.mxu0 %v2084
      %2272 = vmatprep.subr.mxu0 %v2093
      %2273 = vmatpush1.msra.mxu0 %v2092
      %2274 = vmatprep.subr.mxu0 %v2101
      %2275 = vmatpush1.msra.mxu0 %v2100
      %2276 = vmatprep.subr.mxu0 %v2109
      %2277 = vmatpush1.msra.mxu0 %v2108
      %2278 = vmatprep.subr.mxu0 %v2117
      %2279 = vmatpush1.msra.mxu0 %v2116
      %2280 = vmatprep.subr.mxu0 %v2125
      %2281 = vmatpush1.msra.mxu0 %v2124
      %2282 = vmatprep.subr.mxu0 %v2133
      %2283 = vmatpush1.msra.mxu0 %v2132
      %2284 = vmatprep.subr.mxu0 %v2141
      %2285 = vmatpush1.msra.mxu0 %v2140
      %2286 = vmatprep.subr.mxu0 %v2149
      %2287 = vmatpush1.msra.mxu0 %v2148
      %2288 = vmatprep.subr.mxu0 %v2177
      %2289 = vmatpush1.msra.mxu0 %v2174
      %2290 = vmatprep.subr.mxu0 0.0
      %2291 = vmatpush1.msra.mxu0 0.0
      %2292 = vmatprep.subr.mxu0 0.0
      %2293 = vmatpush1.msra.mxu0 0.0
      %2294 = vmatprep.subr.mxu0 0.0
      %2295 = vmatpush1.msra.mxu0 0.0
      %2296 = vmatprep.subr.mxu0 0.0
      %2297 = vmatpush1.msra.mxu0 0.0
      %2298 = vmatprep.subr.mxu0 0.0
      %2299 = vmatpush1.msra.mxu0 0.0
      %2300 = vmatprep.subr.mxu0 0.0
      %2301 = vmatpush1.msra.mxu0 0.0
      %2302 = vmatprep.subr.mxu0 0.0
      %2303 = vmatpush1.msra.mxu0 0.0
      %2304 = vmatprep.subr.mxu0 0.0
      %2305 = vmatpush1.msra.mxu0 0.0
      %2306 = vmatprep.subr.mxu0 0.0
      %2307 = vmatpush1.msra.mxu0 0.0
      %2308 = vmatprep.subr.mxu0 0.0
      %2309 = vmatpush1.msra.mxu0 0.0
      %2310 = vmatprep.subr.mxu0 0.0
      %2311 = vmatpush1.msra.mxu0 0.0
      %2312 = vmatprep.subr.mxu0 0.0
      %2313 = vmatpush1.msra.mxu0 0.0
      %2314 = vmatprep.subr.mxu0 0.0
      %2315 = vmatpush1.msra.mxu0 0.0
      %2316 = vmatprep.subr.mxu0 0.0
      %2317 = vmatpush1.msra.mxu0 0.0
      %2318 = vmatprep.subr.mxu0 0.0
      %2319 = vmatpush1.msra.mxu0 0.0
      %2320 = vmatprep.subr.mxu0 0.0
      %2321 = vmatpush1.msra.mxu0 0.0
      %2322 = vmatprep.subr.mxu0 0.0
      %2323 = vmatpush1.msra.mxu0 0.0
      %2324 = vmatprep.subr.mxu0 0.0
      %2325 = vmatpush1.msra.mxu0 0.0
      %2326 = vmatprep.mubr.f32.mxu0 0.0
      %2327 = vmatmul.mubr.f32.gmra.mrb[0].mxu0 %v2164
      %v2328 = vpop.f32.mrb[0].mxu0
      %v2329 = vadd.f32 0.0, %v2328
      %v2330 = vpop.f32.mrb[0].mxu0
      %v2331 = vadd.f32 0.0, %v2330
      %2332 = vdwg.mxu0
      %2333 = vmatprep.subr.mxu0 %v2055
      %2334 = vmatpush1.msra.mxu0 %v2054
      %2335 = vmatprep.subr.mxu0 %v2063
      %2336 = vmatpush1.msra.mxu0 %v2062
      %2337 = vmatprep.subr.mxu0 %v2071
      %2338 = vmatpush1.msra.mxu0 %v2070
      %2339 = vmatprep.subr.mxu0 %v2079
      %2340 = vmatpush1.msra.mxu0 %v2078
      %2341 = vmatprep.subr.mxu0 %v2087
      %2342 = vmatpush1.msra.mxu0 %v2086
      %2343 = vmatprep.subr.mxu0 %v2095
      %2344 = vmatpush1.msra.mxu0 %v2094
      %2345 = vmatprep.subr.mxu0 %v2103
      %2346 = vmatpush1.msra.mxu0 %v2102
      %2347 = vmatprep.subr.mxu0 %v2111
      %2348 = vmatpush1.msra.mxu0 %v2110
      %2349 = vmatprep.subr.mxu0 %v2119
      %2350 = vmatpush1.msra.mxu0 %v2118
      %2351 = vmatprep.subr.mxu0 %v2127
      %2352 = vmatpush1.msra.mxu0 %v2126
      %2353 = vmatprep.subr.mxu0 %v2135
      %2354 = vmatpush1.msra.mxu0 %v2134
      %2355 = vmatprep.subr.mxu0 %v2143
      %2356 = vmatpush1.msra.mxu0 %v2142
      %2357 = vmatprep.subr.mxu0 %v2151
      %2358 = vmatpush1.msra.mxu0 %v2150
      %2359 = vmatprep.subr.mxu0 %v2183
      %2360 = vmatpush1.msra.mxu0 %v2180
      %2361 = vmatprep.subr.mxu0 0.0
      %2362 = vmatpush1.msra.mxu0 0.0
      %2363 = vmatprep.subr.mxu0 0.0
      %2364 = vmatpush1.msra.mxu0 0.0
      %2365 = vmatprep.subr.mxu0 0.0
      %2366 = vmatpush1.msra.mxu0 0.0
      %2367 = vmatprep.subr.mxu0 0.0
      %2368 = vmatpush1.msra.mxu0 0.0
      %2369 = vmatprep.subr.mxu0 0.0
      %2370 = vmatpush1.msra.mxu0 0.0
      %2371 = vmatprep.subr.mxu0 0.0
      %2372 = vmatpush1.msra.mxu0 0.0
      %2373 = vmatprep.subr.mxu0 0.0
      %2374 = vmatpush1.msra.mxu0 0.0
      %2375 = vmatprep.subr.mxu0 0.0
      %2376 = vmatpush1.msra.mxu0 0.0
      %2377 = vmatprep.subr.mxu0 0.0
      %2378 = vmatpush1.msra.mxu0 0.0
      %2379 = vmatprep.subr.mxu0 0.0
      %2380 = vmatpush1.msra.mxu0 0.0
      %2381 = vmatprep.subr.mxu0 0.0
      %2382 = vmatpush1.msra.mxu0 0.0
      %2383 = vmatprep.subr.mxu0 0.0
      %2384 = vmatpush1.msra.mxu0 0.0
      %2385 = vmatprep.subr.mxu0 0.0
      %2386 = vmatpush1.msra.mxu0 0.0
      %2387 = vmatprep.subr.mxu0 0.0
      %2388 = vmatpush1.msra.mxu0 0.0
      %2389 = vmatprep.subr.mxu0 0.0
      %2390 = vmatpush1.msra.mxu0 0.0
      %2391 = vmatprep.subr.mxu0 0.0
      %2392 = vmatpush1.msra.mxu0 0.0
      %2393 = vmatprep.subr.mxu0 0.0
      %2394 = vmatpush1.msra.mxu0 0.0
      %2395 = vmatprep.subr.mxu0 0.0
      %2396 = vmatpush1.msra.mxu0 0.0
      %2397 = vmatprep.mubr.f32.mxu0 0.0
      %2398 = vmatmul.mubr.f32.gmra.mrb[0].mxu0 %v2164
      %v2399 = vpop.f32.mrb[0].mxu0
      %v2400 = vadd.f32 0.0, %v2399
      %v2401 = vpop.f32.mrb[0].mxu0
      %v2402 = vadd.f32 0.0, %v2401
      %2403 = vdwg.mxu0
      %2404 = vmatprep.subr.mxu0 %v2057
      %2405 = vmatpush1.msra.mxu0 %v2056
      %2406 = vmatprep.subr.mxu0 %v2065
      %2407 = vmatpush1.msra.mxu0 %v2064
      %2408 = vmatprep.subr.mxu0 %v2073
      %2409 = vmatpush1.msra.mxu0 %v2072
      %2410 = vmatprep.subr.mxu0 %v2081
      %2411 = vmatpush1.msra.mxu0 %v2080
      %2412 = vmatprep.subr.mxu0 %v2089
      %2413 = vmatpush1.msra.mxu0 %v2088
      %2414 = vmatprep.subr.mxu0 %v2097
      %2415 = vmatpush1.msra.mxu0 %v2096
      %2416 = vmatprep.subr.mxu0 %v2105
      %2417 = vmatpush1.msra.mxu0 %v2104
      %2418 = vmatprep.subr.mxu0 %v2113
      %2419 = vmatpush1.msra.mxu0 %v2112
      %2420 = vmatprep.subr.mxu0 %v2121
      %2421 = vmatpush1.msra.mxu0 %v2120
      %2422 = vmatprep.subr.mxu0 %v2129
      %2423 = vmatpush1.msra.mxu0 %v2128
      %2424 = vmatprep.subr.mxu0 %v2137
      %2425 = vmatpush1.msra.mxu0 %v2136
      %2426 = vmatprep.subr.mxu0 %v2145
      %2427 = vmatpush1.msra.mxu0 %v2144
      %2428 = vmatprep.subr.mxu0 %v2153
      %2429 = vmatpush1.msra.mxu0 %v2152
      %2430 = vmatprep.subr.mxu0 %v2189
      %2431 = vmatpush1.msra.mxu0 %v2186
      %2432 = vmatprep.subr.mxu0 0.0
      %2433 = vmatpush1.msra.mxu0 0.0
      %2434 = vmatprep.subr.mxu0 0.0
      %2435 = vmatpush1.msra.mxu0 0.0
      %2436 = vmatprep.subr.mxu0 0.0
      %2437 = vmatpush1.msra.mxu0 0.0
      %2438 = vmatprep.subr.mxu0 0.0
      %2439 = vmatpush1.msra.mxu0 0.0
      %2440 = vmatprep.subr.mxu0 0.0
      %2441 = vmatpush1.msra.mxu0 0.0
      %2442 = vmatprep.subr.mxu0 0.0
      %2443 = vmatpush1.msra.mxu0 0.0
      %2444 = vmatprep.subr.mxu0 0.0
      %2445 = vmatpush1.msra.mxu0 0.0
      %2446 = vmatprep.subr.mxu0 0.0
      %2447 = vmatpush1.msra.mxu0 0.0
      %2448 = vmatprep.subr.mxu0 0.0
      %2449 = vmatpush1.msra.mxu0 0.0
      %2450 = vmatprep.subr.mxu0 0.0
      %2451 = vmatpush1.msra.mxu0 0.0
      %2452 = vmatprep.subr.mxu0 0.0
      %2453 = vmatpush1.msra.mxu0 0.0
      %2454 = vmatprep.subr.mxu0 0.0
      %2455 = vmatpush1.msra.mxu0 0.0
      %2456 = vmatprep.subr.mxu0 0.0
      %2457 = vmatpush1.msra.mxu0 0.0
      %2458 = vmatprep.subr.mxu0 0.0
      %2459 = vmatpush1.msra.mxu0 0.0
      %2460 = vmatprep.subr.mxu0 0.0
      %2461 = vmatpush1.msra.mxu0 0.0
      %2462 = vmatprep.subr.mxu0 0.0
      %2463 = vmatpush1.msra.mxu0 0.0
      %2464 = vmatprep.subr.mxu0 0.0
      %2465 = vmatpush1.msra.mxu0 0.0
      %2466 = vmatprep.subr.mxu0 0.0
      %2467 = vmatpush1.msra.mxu0 0.0
      %2468 = vmatprep.mubr.f32.mxu0 0.0
      %2469 = vmatmul.mubr.f32.gmra.mrb[0].mxu0 %v2164
      %v2470 = vpop.f32.mrb[0].mxu0
      %v2471 = vadd.f32 0.0, %v2470
      %v2472 = vpop.f32.mrb[0].mxu0
      %v2473 = vadd.f32 0.0, %v2472
      %2474 = vdwg.mxu0
      %p2475 = scmp.eq.s32.totalorder %s21, 0
      // Predicated region
      $region29: #{conv_block_forward.2} parent=27 // pred_check
        %p2476 = pneg %p2475
      $region30: #{conv_block_forward.2} parent=27 // pred_check_branch
        %2478 = sbr.rel (%p2476) target = $region32
      $region31: #{conv_block_forward.2} parent=27 // pred_region
        %vm2479 = vcmask 7168
        %2480 = vst.msk [vmem:[%s237] sm:$0xff] %vm2479, 0.0
        %2481 = vst.msk [vmem:[%s241] sm:$0xff] %vm2479, 0.0
      $region32: #{conv_block_forward.2} parent=27 // pred_fallthru
        _
      %v2482 = vld [vmem:[%s237] sm:$0xff]
      %v2483 = vadd.f32 %v2258, %v2260
      %v2484 = vadd.f32 %v2483, %v2329
      %v2485 = vadd.f32 %v2484, %v2331
      %v2486 = vadd.f32 %v2485, %v2400
      %v2487 = vadd.f32 %v2486, %v2402
      %v2488 = vadd.f32 %v2487, %v2471
      %v2489 = vadd.f32 %v2488, %v2473
      %2490 = vadd.xlane.f32.xlu0 %v2489
      %v2491 = vpop.xlane.xlu0 %2490
      %v2492 = vadd.f32 %v2482, %v2491
      %vm2493 = vcmask 7168
      %2494 = vst.msk [vmem:[%s237] sm:$0xff] %vm2493, %v2492
      %v2495 = vld [vmem:[%s241] sm:$0xff]
      %v2496 = vmul.f32 %v2258, %v2258
      %v2497 = vmul.f32 %v2260, %v2260
      %v2498 = vmul.f32 %v2329, %v2329
      %v2499 = vmul.f32 %v2331, %v2331
      %v2500 = vmul.f32 %v2400, %v2400
      %v2501 = vmul.f32 %v2402, %v2402
      %v2502 = vmul.f32 %v2471, %v2471
      %v2503 = vmul.f32 %v2473, %v2473
      %v2504 = vadd.f32 %v2496, %v2497
      %v2505 = vadd.f32 %v2504, %v2498
      %v2506 = vadd.f32 %v2505, %v2499
      %v2507 = vadd.f32 %v2506, %v2500
      %v2508 = vadd.f32 %v2507, %v2501
      %v2509 = vadd.f32 %v2508, %v2502
      %v2510 = vadd.f32 %v2509, %v2503
      %2511 = vadd.xlane.f32.xlu0 %v2510
      %v2512 = vpop.xlane.xlu0 %2511
      %v2513 = vadd.f32 %v2495, %v2512
      %2514 = vst.msk [vmem:[%s241] sm:$0xff] %vm2493, %v2513
      %2515 = vst [vmem:[%s232] sm:$0xff] %v2258
      %2516 = vst [vmem:[%s232 + $0x8] sm:$0xff] %v2260
      %2517 = vst [vmem:[%s232 + $0x10] sm:$0xff] %v2329
      %2518 = vst [vmem:[%s232 + $0x18] sm:$0xff] %v2331
      %2519 = vst [vmem:[%s232 + $0x20] sm:$0xff] %v2400
      %2520 = vst [vmem:[%s232 + $0x28] sm:$0xff] %v2402
      %2521 = vst [vmem:[%s232 + $0x30] sm:$0xff] %v2471
      %2522 = vst [vmem:[%s232 + $0x38] sm:$0xff] %v2473
      %s2523 = smul.u32 8, %s21
      %p2524 = scmp.lt.s32.totalorder %s20, 1
      %s2525 = scalar_select %p2524, %s20, 1
      %p2526 = scmp.lt.s32.totalorder %s2523, 31
      %s2527 = scalar_select %p2526, %s2523, 31
      %s2528 = smul.addr %s2525, 32
      %s2529 = sadd.s32 %s2527, %s2528
      %s2530 = smul.addr %s2529, 8
      %s2531 = scalar_lea.vmem %s2, %s2530
      %p2532 = scmp.lt.s32.totalorder %s20, 1
      %s2533 = scalar_select %p2532, %s20, 1
      %s2534 = smul.addr %s2533, 8
      %s2535 = scalar_lea.vmem %s3, %s2534
      %p2536 = scmp.lt.s32.totalorder %s20, 1
      %s2537 = scalar_select %p2536, %s20, 1
      %s2538 = smul.addr %s2537, 8
      %s2539 = scalar_lea.vmem %s4, %s2538
      // Predicated region
      $region33: #{conv_block_forward.2} parent=27 // pred_check
        %p2540 = pneg %p95
      $region34: #{conv_block_forward.2} parent=27 // pred_check_branch
        %2542 = sbr.rel (%p2540) target = $region36
      $region35: #{conv_block_forward.2} parent=27 // pred_region
        %s2543 = smul.u32 8, %s21
      $region36: #{conv_block_forward.2} parent=27 // pred_fallthru
        _
      // Predicated region
      $region37: #{conv_block_forward.2} parent=27 // pred_check
        %p2544 = pneg %p121
      $region38: #{conv_block_forward.2} parent=27 // pred_check_branch
        %2546 = sbr.rel (%p2544) target = $region40
      $region39: #{conv_block_forward.2} parent=27 // pred_region
        _
      $region40: #{conv_block_forward.2} parent=27 // pred_fallthru
        _
      // Predicated region
      $region41: #{conv_block_forward.2} parent=27 // pred_check
        %p2547 = pneg %p147
      $region42: #{conv_block_forward.2} parent=27 // pred_check_branch
        %2549 = sbr.rel (%p2547) target = $region44
      $region43: #{conv_block_forward.2} parent=27 // pred_region
        _
      $region44: #{conv_block_forward.2} parent=27 // pred_fallthru
        _
    $region28: #{conv_block_forward.2} parent=5 // pred_fallthru
      _
    %p2550 = scmp.le.s32.totalorder 2, %s11
    // Predicated region
    $region45: #{conv_block_forward.2} parent=5 // pred_check
      %p2551 = pneg %p2550
    $region46: #{conv_block_forward.2} parent=5 // pred_check_branch
      %2553 = sbr.rel (%p2551) target = $region48
    $region47: #{conv_block_forward.2} parent=5 // pred_region
      %s2554 = ssub.s32 %s11, 2
      // Predicated region
      $region49: #{conv_block_forward.2} parent=47 // pred_check
        %p2555 = pneg %p101
      $region50: #{conv_block_forward.2} parent=47 // pred_check_branch
        %2557 = sbr.rel (%p2555) target = $region52
      $region51: #{conv_block_forward.2} parent=47 // pred_region
        %s2558 = smul.u32 8, %s23
        %p2559 = scmp.lt.s32.totalorder %s22, 1
        %s2560 = scalar_select %p2559, %s22, 1
        %p2561 = scmp.lt.s32.totalorder %s2558, 31
        %s2562 = scalar_select %p2561, %s2558, 31
        %s2563 = smul.addr %s2560, 32
        %s2564 = sadd.s32 %s2562, %s2563
        %s2565 = smul.addr %s2564, 8
        %s2566 = scalar_lea.vmem %s2, %s2565
      $region52: #{conv_block_forward.2} parent=47 // pred_fallthru
        _
      // Predicated region
      $region53: #{conv_block_forward.2} parent=47 // pred_check
        %p2567 = pneg %p127
      $region54: #{conv_block_forward.2} parent=47 // pred_check_branch
        %2569 = sbr.rel (%p2567) target = $region56
      $region55: #{conv_block_forward.2} parent=47 // pred_region
        %p2570 = scmp.lt.s32.totalorder %s22, 1
        %s2571 = scalar_select %p2570, %s22, 1
        %s2572 = smul.addr %s2571, 8
        %s2573 = scalar_lea.vmem %s3, %s2572
      $region56: #{conv_block_forward.2} parent=47 // pred_fallthru
        _
      // Predicated region
      $region57: #{conv_block_forward.2} parent=47 // pred_check
        %p2574 = pneg %p153
      $region58: #{conv_block_forward.2} parent=47 // pred_check_branch
        %2576 = sbr.rel (%p2574) target = $region60
      $region59: #{conv_block_forward.2} parent=47 // pred_region
        %p2577 = scmp.lt.s32.totalorder %s22, 1
        %s2578 = scalar_select %p2577, %s22, 1
        %s2579 = smul.addr %s2578, 8
        %s2580 = scalar_lea.vmem %s4, %s2579
      $region60: #{conv_block_forward.2} parent=47 // pred_fallthru
        _
    $region48: #{conv_block_forward.2} parent=5 // pred_fallthru
      _
  $region6: #{conv_block_forward.2} parent=0 // loop_footer
    %s15 = sadd.s32 1, %s11
  $region7: #{conv_block_forward.2} parent=0 // loop_footer_branch
    %10 = sbr.rel target = $region3
  $region8: #{conv_block_forward.2} parent=0 // loop_exit
    _

</llo_original>
